<compile_context>
chip_gen: v7x
topology: tpu7x:2x2x1
jax: 0.10.0
libtpu: 0.0.40
codegen_flags: <defaults>
</compile_context>

<pallas_src>
import jax
import jax.numpy as jnp
import numpy as np
from jax.experimental import pallas as pl
from jax.experimental.pallas import tpu as pltpu

F_OBS = 55            # observation features (architecture constant: 55*55 + 55 inputs)
F_PAD = 64            # padded inner (j) contraction dim -> sublane/lane friendly
NI = 4                # feature indices (i) per deep-K chunk -> K_chunk = NI*F_PAD = 256
F_GRP = 56            # feature (i) count padded to a multiple of NI
NCHUNK = F_GRP // NI  # 14 deep-K chunks
K_CHUNK = NI * F_PAD  # 256: full MXU depth on v6e/v7x
HIDDEN = 64           # hidden_dimension default
NEG_SLOPE = 0.01      # F.leaky_relu default
MAX_BATCH_TILE = 512  # lane-dense batch tile; ~3 MB VMEM footprint fits every chip


def _round_up(x, m):
    return ((x + m - 1) // m) * m


def critic_kernel(obsT_ref, w1i_ref, w1o_ref, b1_ref, w2_ref, b2_ref, w3_ref,
                  b3_ref, out_ref):
    obsT = obsT_ref[...]                                          # (F_PAD, TB) f32

    # Layer 1, raw-observation part + bias: small (H, 64) @ (64, TB) matmul.
    acc = jnp.dot(w1o_ref[...], obsT,
                  preferred_element_type=jnp.float32) + b1_ref[...]   # (H, TB)

    # Layer 1, interaction part: deep-K chunked MXU accumulation.
    # slab[il*F_PAD + j, b] = obs_{c*NI+il}(b) * obs_j(b); products are formed in f32
    # on the VPU and stored bf16 (the MXU truncates operands to bf16 at default
    # precision anyway), halving slab vst/vld traffic.  Padded rows (j >= 55) and the
    # padded feature (i == 55) are zero in obsT, so they contribute nothing.
    for c in range(NCHUNK):
        pieces = []
        for il in range(NI):
            fi = c * NI + il
            row = obsT[fi:fi + 1, :]                              # (1, TB) broadcast row
            pieces.append((obsT * row).astype(jnp.bfloat16))      # (F_PAD, TB)
        slab = jnp.concatenate(pieces, axis=0)                    # (K_CHUNK, TB) bf16
        acc = acc + jnp.dot(w1i_ref[c], slab,
                            preferred_element_type=jnp.float32)   # (H, TB)

    # Hidden layer + leaky_relu.
    h = jnp.dot(w2_ref[...], acc, preferred_element_type=jnp.float32) + b2_ref[...]
    h = jnp.where(h > 0, h, NEG_SLOPE * h)

    # Final layer.
    out = jnp.dot(w3_ref[...], h, preferred_element_type=jnp.float32) + b3_ref[...]
    out_ref[...] = out.astype(out_ref.dtype)                      # (1, TB)


def prepare_params(params):
    """One-time weight rearrangement (call once at parameter-load time)."""
    w1, b1, w2, b2, w3, b3 = [jnp.asarray(p, jnp.float32) for p in params]
    H = w1.shape[0]
    F = F_OBS
    # Interaction weights W1[:, :F*F] -> [h, i, j], padded, regrouped into NCHUNK
    # deep-K chunks:  w1i[c, h, il*F_PAD + j] = W1[h, (c*NI + il)*F + j].
    w1a = w1[:, :F * F].reshape(H, F, F)
    w1a = jnp.pad(w1a, ((0, 0), (0, F_GRP - F), (0, F_PAD - F)))
    w1i = (w1a.reshape(H, NCHUNK, NI, F_PAD)
               .transpose(1, 0, 2, 3)
               .reshape(NCHUNK, H, K_CHUNK)
               .astype(jnp.bfloat16))
    # Raw-observation weights W1[:, F*F:], contraction dim padded 55 -> 64.
    w1o = jnp.pad(w1[:, F * F:], ((0, 0), (0, F_PAD - F)))        # (H, F_PAD) f32
    return (w1i, w1o,
            b1.reshape(H, 1),
            w2,
            b2.reshape(H, 1),
            w3.reshape(1, H),
            b3.reshape(1, 1))


@jax.jit
def critic_forward(obs, prepared):
    """Pallas forward pass. obs: (B, 55) float32 -> (B, 1) float32."""
    w1i, w1o, b1, w2, b2, w3, b3 = prepared
    B = obs.shape[0]
    H = w2.shape[0]

    # Batch tiling: lane-dense tiles of up to MAX_BATCH_TILE.  When the batch fits in
    # <= 2 tiles, split it so grid >= 2 and the "parallel" axis spans both v7x TCs.
    B_eff = max(B, 1)
    B_pad = _round_up(B_eff, 128)
    if B_pad > 128:
        TB = min(MAX_BATCH_TILE, _round_up((B_pad + 1) // 2, 128))
        B_pad = _round_up(B_eff, TB)
    else:
        TB = B_pad

    # Feature-major, zero-padded observations: (F_PAD, B_pad).
    # TODO(synk): for very large B, feed obs as (B, 55) and transpose/pad the tile
    # in-kernel to avoid this extra HBM pass over the padded observation array.
    obsT = jnp.zeros((F_PAD, B_pad), jnp.float32)
    obsT = obsT.at[:F_OBS, :B].set(obs.T.astype(jnp.float32))

    flops = (2 * B_pad * (NCHUNK * H * K_CHUNK + H * F_PAD + H * H + H)
             + B_pad * F_GRP * F_PAD)                              # + VPU slab products
    weight_bytes = (2 * w1i.size
                    + 4 * (w1o.size + b1.size + w2.size + b2.size + w3.size + b3.size))
    cost = pl.CostEstimate(
        flops=int(flops),
        transcendentals=0,
        bytes_accessed=int(weight_bytes + 4 * (obsT.size + B_pad)),
    )

    out = pl.pallas_call(
        critic_kernel,
        out_shape=jax.ShapeDtypeStruct((1, B_pad), jnp.float32),
        grid=(B_pad // TB,),
        in_specs=[
            pl.BlockSpec((F_PAD, TB), lambda i: (0, i)),           # obs^T: batch-tiled
            pl.BlockSpec(w1i.shape, lambda i: (0, 0, 0)),          # weights: VMEM-resident
            pl.BlockSpec(w1o.shape, lambda i: (0, 0)),
            pl.BlockSpec(b1.shape, lambda i: (0, 0)),
            pl.BlockSpec(w2.shape, lambda i: (0, 0)),
            pl.BlockSpec(b2.shape, lambda i: (0, 0)),
            pl.BlockSpec(w3.shape, lambda i: (0, 0)),
            pl.BlockSpec(b3.shape, lambda i: (0, 0)),
        ],
        out_specs=pl.BlockSpec((1, TB), lambda i: (0, i)),
        compiler_params=pltpu.CompilerParams(
            dimension_semantics=("parallel",),        # shard batch tiles over v7x TCs
            vmem_limit_bytes=32 * 1024 * 1024,
        ),
        cost_estimate=cost,
    )(obsT, w1i, w1o, b1, w2, b2, w3, b3)

    return out[:, :B].T                                            # (B, 1)


# ----------------------------- reference / setup --------------------------------

def critic_reference(obs, params):
    """Pure-JAX reference matching the PyTorch forward exactly (full f32)."""
    w1, b1, w2, b2, w3, b3 = params
    B = obs.shape[0]
    inter = obs[:, :, None] * obs[:, None, :]                      # bmm outer product
    x = jnp.concatenate([inter.reshape(B, -1), obs], axis=1)       # (B, 3080)
    x = jnp.dot(x, w1.T, precision=jax.lax.Precision.HIGHEST) + b1
    h = jnp.dot(x, w2.T, precision=jax.lax.Precision.HIGHEST) + b2
    h = jnp.where(h > 0, h, NEG_SLOPE * h)
    return jnp.dot(h, w3.T, precision=jax.lax.Precision.HIGHEST) + b3


def init_params(key, hidden=HIDDEN):
    """Deterministic init mimicking nn.Linear's U(-1/sqrt(fan_in), 1/sqrt(fan_in))."""
    in1 = F_OBS * F_OBS + F_OBS
    ks = jax.random.split(key, 6)

    def lin(kw, kb, fan_in, fan_out):
        bound = 1.0 / np.sqrt(fan_in)
        w = jax.random.uniform(kw, (fan_out, fan_in), jnp.float32, -bound, bound)
        b = jax.random.uniform(kb, (fan_out,), jnp.float32, -bound, bound)
        return w, b

    w1, b1 = lin(ks[0], ks[1], in1, hidden)
    w2, b2 = lin(ks[2], ks[3], hidden, hidden)
    w3, b3 = lin(ks[4], ks[5], hidden, 1)
    return (w1, b1, w2, b2, w3, b3)


if __name__ == "__main__":
    key = jax.random.PRNGKey(0)
    k_obs, k_par = jax.random.split(key)

    batch = 2
    obs = jax.random.normal(k_obs, (batch, F_OBS), dtype=jnp.float32)
    params = init_params(k_par, HIDDEN)

    prepared = prepare_params(params)          # hoisted: done once, not per forward
    out = critic_forward(obs, prepared)
    out = jax.block_until_ready(out)

    ref = critic_reference(obs, params)
    np.testing.assert_allclose(np.asarray(out), np.asarray(ref), rtol=1e-2, atol=1e-2)
    assert out.shape == (batch, 1)

    print("KERNEL_OK")
</pallas_src>

<mosaic_0001>
module attributes {stable_mosaic.version = 11 : i64} {
  func.func @critic_kernel(%arg0: i32, %arg1: memref<64x128xf32, #tpu.memory_space<vmem>>, %arg2: memref<14x64x256xbf16, #tpu.memory_space<vmem>>, %arg3: memref<64x64xf32, #tpu.memory_space<vmem>>, %arg4: memref<64x1xf32, #tpu.memory_space<vmem>>, %arg5: memref<64x64xf32, #tpu.memory_space<vmem>>, %arg6: memref<64x1xf32, #tpu.memory_space<vmem>>, %arg7: memref<1x64xf32, #tpu.memory_space<vmem>>, %arg8: memref<1x1xf32, #tpu.memory_space<vmem>>, %arg9: memref<1x128xf32, #tpu.memory_space<vmem>>) attributes {dimension_semantics = [#tpu.dimension_semantics<parallel>], iteration_bounds = array<i64: 1>, scalar_prefetch = 0 : i64, scratch_operands = 0 : i64, tpu.core_type = #tpu.core_type<tc>, window_params = [{transform_indices = @transform_0, window_bounds = array<i64: 64, 128>}, {pipeline_mode = #tpu.pipeline_mode<synchronous>, transform_indices = @transform_1, window_bounds = array<i64: 14, 64, 256>}, {pipeline_mode = #tpu.pipeline_mode<synchronous>, transform_indices = @transform_2, window_bounds = array<i64: 64, 64>}, {pipeline_mode = #tpu.pipeline_mode<synchronous>, transform_indices = @transform_3, window_bounds = array<i64: 64, 1>}, {pipeline_mode = #tpu.pipeline_mode<synchronous>, transform_indices = @transform_4, window_bounds = array<i64: 64, 64>}, {pipeline_mode = #tpu.pipeline_mode<synchronous>, transform_indices = @transform_5, window_bounds = array<i64: 64, 1>}, {pipeline_mode = #tpu.pipeline_mode<synchronous>, transform_indices = @transform_6, window_bounds = array<i64: 1, 64>}, {pipeline_mode = #tpu.pipeline_mode<synchronous>, transform_indices = @transform_7, window_bounds = array<i64: 1, 1>}, {transform_indices = @transform_8, window_bounds = array<i64: 1, 128>}]} {
    %c0 = arith.constant 0 : index
    %c0_0 = arith.constant 0 : index
    %0 = vector.load %arg1[%c0, %c0_0] : memref<64x128xf32, #tpu.memory_space<vmem>>, vector<64x128xf32>
    %c0_1 = arith.constant 0 : index
    %c0_2 = arith.constant 0 : index
    %1 = vector.load %arg3[%c0_1, %c0_2] : memref<64x64xf32, #tpu.memory_space<vmem>>, vector<64x64xf32>
    %cst = arith.constant dense<0.000000e+00> : vector<64x128xf32>
    %2 = tpu.matmul %1, %0, %cst {dimension_numbers = #tpu.dot_dimension_numbers<[1], [0], [0], [1], [0, 0, 1, 1], [], []>} : vector<64x64xf32>, vector<64x128xf32>, vector<64x128xf32> -> vector<64x128xf32>
    %c0_3 = arith.constant 0 : index
    %c0_4 = arith.constant 0 : index
    %3 = vector.load %arg4[%c0_3, %c0_4] : memref<64x1xf32, #tpu.memory_space<vmem>>, vector<64x1xf32>
    %4 = vector.broadcast %3 : vector<64x1xf32> to vector<64x128xf32>
    %5 = arith.addf %2, %4 : vector<64x128xf32>
    %6 = vector.extract_strided_slice %0 {offsets = [0, 0], sizes = [1, 128], strides = [1, 1]} : vector<64x128xf32> to vector<1x128xf32>
    %7 = vector.broadcast %6 : vector<1x128xf32> to vector<64x128xf32>
    %8 = arith.mulf %0, %7 : vector<64x128xf32>
    %9 = arith.truncf %8 : vector<64x128xf32> to vector<64x128xbf16>
    %10 = vector.extract_strided_slice %0 {offsets = [1, 0], sizes = [1, 128], strides = [1, 1]} : vector<64x128xf32> to vector<1x128xf32>
    %11 = vector.broadcast %10 : vector<1x128xf32> to vector<64x128xf32>
    %12 = arith.mulf %0, %11 : vector<64x128xf32>
    %13 = arith.truncf %12 : vector<64x128xf32> to vector<64x128xbf16>
    %14 = vector.extract_strided_slice %0 {offsets = [2, 0], sizes = [1, 128], strides = [1, 1]} : vector<64x128xf32> to vector<1x128xf32>
    %15 = vector.broadcast %14 : vector<1x128xf32> to vector<64x128xf32>
    %16 = arith.mulf %0, %15 : vector<64x128xf32>
    %17 = arith.truncf %16 : vector<64x128xf32> to vector<64x128xbf16>
    %18 = vector.extract_strided_slice %0 {offsets = [3, 0], sizes = [1, 128], strides = [1, 1]} : vector<64x128xf32> to vector<1x128xf32>
    %19 = vector.broadcast %18 : vector<1x128xf32> to vector<64x128xf32>
    %20 = arith.mulf %0, %19 : vector<64x128xf32>
    %21 = arith.truncf %20 : vector<64x128xf32> to vector<64x128xbf16>
    %22 = tpu.concatenate %9, %13, %17, %21 in 0 : vector<64x128xbf16>, vector<64x128xbf16>, vector<64x128xbf16>, vector<64x128xbf16> -> vector<256x128xbf16>
    %c0_5 = arith.constant 0 : index
    %c0_6 = arith.constant 0 : index
    %c0_7 = arith.constant 0 : index
    %23 = vector.load %arg2[%c0_5, %c0_6, %c0_7] : memref<14x64x256xbf16, #tpu.memory_space<vmem>>, vector<1x64x256xbf16>
    %24 = vector.shape_cast %23 : vector<1x64x256xbf16> to vector<64x256xbf16>
    %cst_8 = arith.constant dense<0.000000e+00> : vector<64x128xf32>
    %25 = tpu.matmul %24, %22, %cst_8 {dimension_numbers = #tpu.dot_dimension_numbers<[1], [0], [0], [1], [0, 0, 1, 1], [], []>} : vector<64x256xbf16>, vector<256x128xbf16>, vector<64x128xf32> -> vector<64x128xf32>
    %26 = arith.addf %5, %25 : vector<64x128xf32>
    %27 = vector.extract_strided_slice %0 {offsets = [4, 0], sizes = [1, 128], strides = [1, 1]} : vector<64x128xf32> to vector<1x128xf32>
    %28 = vector.broadcast %27 : vector<1x128xf32> to vector<64x128xf32>
    %29 = arith.mulf %0, %28 : vector<64x128xf32>
    %30 = arith.truncf %29 : vector<64x128xf32> to vector<64x128xbf16>
    %31 = vector.extract_strided_slice %0 {offsets = [5, 0], sizes = [1, 128], strides = [1, 1]} : vector<64x128xf32> to vector<1x128xf32>
    %32 = vector.broadcast %31 : vector<1x128xf32> to vector<64x128xf32>
    %33 = arith.mulf %0, %32 : vector<64x128xf32>
    %34 = arith.truncf %33 : vector<64x128xf32> to vector<64x128xbf16>
    %35 = vector.extract_strided_slice %0 {offsets = [6, 0], sizes = [1, 128], strides = [1, 1]} : vector<64x128xf32> to vector<1x128xf32>
    %36 = vector.broadcast %35 : vector<1x128xf32> to vector<64x128xf32>
    %37 = arith.mulf %0, %36 : vector<64x128xf32>
    %38 = arith.truncf %37 : vector<64x128xf32> to vector<64x128xbf16>
    %39 = vector.extract_strided_slice %0 {offsets = [7, 0], sizes = [1, 128], strides = [1, 1]} : vector<64x128xf32> to vector<1x128xf32>
    %40 = vector.broadcast %39 : vector<1x128xf32> to vector<64x128xf32>
    %41 = arith.mulf %0, %40 : vector<64x128xf32>
    %42 = arith.truncf %41 : vector<64x128xf32> to vector<64x128xbf16>
    %43 = tpu.concatenate %30, %34, %38, %42 in 0 : vector<64x128xbf16>, vector<64x128xbf16>, vector<64x128xbf16>, vector<64x128xbf16> -> vector<256x128xbf16>
    %c1 = arith.constant 1 : index
    %c0_9 = arith.constant 0 : index
    %c0_10 = arith.constant 0 : index
    %44 = vector.load %arg2[%c1, %c0_9, %c0_10] : memref<14x64x256xbf16, #tpu.memory_space<vmem>>, vector<1x64x256xbf16>
    %45 = vector.shape_cast %44 : vector<1x64x256xbf16> to vector<64x256xbf16>
    %cst_11 = arith.constant dense<0.000000e+00> : vector<64x128xf32>
    %46 = tpu.matmul %45, %43, %cst_11 {dimension_numbers = #tpu.dot_dimension_numbers<[1], [0], [0], [1], [0, 0, 1, 1], [], []>} : vector<64x256xbf16>, vector<256x128xbf16>, vector<64x128xf32> -> vector<64x128xf32>
    %47 = arith.addf %26, %46 : vector<64x128xf32>
    %48 = vector.extract_strided_slice %0 {offsets = [8, 0], sizes = [1, 128], strides = [1, 1]} : vector<64x128xf32> to vector<1x128xf32>
    %49 = vector.broadcast %48 : vector<1x128xf32> to vector<64x128xf32>
    %50 = arith.mulf %0, %49 : vector<64x128xf32>
    %51 = arith.truncf %50 : vector<64x128xf32> to vector<64x128xbf16>
    %52 = vector.extract_strided_slice %0 {offsets = [9, 0], sizes = [1, 128], strides = [1, 1]} : vector<64x128xf32> to vector<1x128xf32>
    %53 = vector.broadcast %52 : vector<1x128xf32> to vector<64x128xf32>
    %54 = arith.mulf %0, %53 : vector<64x128xf32>
    %55 = arith.truncf %54 : vector<64x128xf32> to vector<64x128xbf16>
    %56 = vector.extract_strided_slice %0 {offsets = [10, 0], sizes = [1, 128], strides = [1, 1]} : vector<64x128xf32> to vector<1x128xf32>
    %57 = vector.broadcast %56 : vector<1x128xf32> to vector<64x128xf32>
    %58 = arith.mulf %0, %57 : vector<64x128xf32>
    %59 = arith.truncf %58 : vector<64x128xf32> to vector<64x128xbf16>
    %60 = vector.extract_strided_slice %0 {offsets = [11, 0], sizes = [1, 128], strides = [1, 1]} : vector<64x128xf32> to vector<1x128xf32>
    %61 = vector.broadcast %60 : vector<1x128xf32> to vector<64x128xf32>
    %62 = arith.mulf %0, %61 : vector<64x128xf32>
    %63 = arith.truncf %62 : vector<64x128xf32> to vector<64x128xbf16>
    %64 = tpu.concatenate %51, %55, %59, %63 in 0 : vector<64x128xbf16>, vector<64x128xbf16>, vector<64x128xbf16>, vector<64x128xbf16> -> vector<256x128xbf16>
    %c2 = arith.constant 2 : index
    %c0_12 = arith.constant 0 : index
    %c0_13 = arith.constant 0 : index
    %65 = vector.load %arg2[%c2, %c0_12, %c0_13] : memref<14x64x256xbf16, #tpu.memory_space<vmem>>, vector<1x64x256xbf16>
    %66 = vector.shape_cast %65 : vector<1x64x256xbf16> to vector<64x256xbf16>
    %cst_14 = arith.constant dense<0.000000e+00> : vector<64x128xf32>
    %67 = tpu.matmul %66, %64, %cst_14 {dimension_numbers = #tpu.dot_dimension_numbers<[1], [0], [0], [1], [0, 0, 1, 1], [], []>} : vector<64x256xbf16>, vector<256x128xbf16>, vector<64x128xf32> -> vector<64x128xf32>
    %68 = arith.addf %47, %67 : vector<64x128xf32>
    %69 = vector.extract_strided_slice %0 {offsets = [12, 0], sizes = [1, 128], strides = [1, 1]} : vector<64x128xf32> to vector<1x128xf32>
    %70 = vector.broadcast %69 : vector<1x128xf32> to vector<64x128xf32>
    %71 = arith.mulf %0, %70 : vector<64x128xf32>
    %72 = arith.truncf %71 : vector<64x128xf32> to vector<64x128xbf16>
    %73 = vector.extract_strided_slice %0 {offsets = [13, 0], sizes = [1, 128], strides = [1, 1]} : vector<64x128xf32> to vector<1x128xf32>
    %74 = vector.broadcast %73 : vector<1x128xf32> to vector<64x128xf32>
    %75 = arith.mulf %0, %74 : vector<64x128xf32>
    %76 = arith.truncf %75 : vector<64x128xf32> to vector<64x128xbf16>
    %77 = vector.extract_strided_slice %0 {offsets = [14, 0], sizes = [1, 128], strides = [1, 1]} : vector<64x128xf32> to vector<1x128xf32>
    %78 = vector.broadcast %77 : vector<1x128xf32> to vector<64x128xf32>
    %79 = arith.mulf %0, %78 : vector<64x128xf32>
    %80 = arith.truncf %79 : vector<64x128xf32> to vector<64x128xbf16>
    %81 = vector.extract_strided_slice %0 {offsets = [15, 0], sizes = [1, 128], strides = [1, 1]} : vector<64x128xf32> to vector<1x128xf32>
    %82 = vector.broadcast %81 : vector<1x128xf32> to vector<64x128xf32>
    %83 = arith.mulf %0, %82 : vector<64x128xf32>
    %84 = arith.truncf %83 : vector<64x128xf32> to vector<64x128xbf16>
    %85 = tpu.concatenate %72, %76, %80, %84 in 0 : vector<64x128xbf16>, vector<64x128xbf16>, vector<64x128xbf16>, vector<64x128xbf16> -> vector<256x128xbf16>
    %c3 = arith.constant 3 : index
    %c0_15 = arith.constant 0 : index
    %c0_16 = arith.constant 0 : index
    %86 = vector.load %arg2[%c3, %c0_15, %c0_16] : memref<14x64x256xbf16, #tpu.memory_space<vmem>>, vector<1x64x256xbf16>
    %87 = vector.shape_cast %86 : vector<1x64x256xbf16> to vector<64x256xbf16>
    %cst_17 = arith.constant dense<0.000000e+00> : vector<64x128xf32>
    %88 = tpu.matmul %87, %85, %cst_17 {dimension_numbers = #tpu.dot_dimension_numbers<[1], [0], [0], [1], [0, 0, 1, 1], [], []>} : vector<64x256xbf16>, vector<256x128xbf16>, vector<64x128xf32> -> vector<64x128xf32>
    %89 = arith.addf %68, %88 : vector<64x128xf32>
    %90 = vector.extract_strided_slice %0 {offsets = [16, 0], sizes = [1, 128], strides = [1, 1]} : vector<64x128xf32> to vector<1x128xf32>
    %91 = vector.broadcast %90 : vector<1x128xf32> to vector<64x128xf32>
    %92 = arith.mulf %0, %91 : vector<64x128xf32>
    %93 = arith.truncf %92 : vector<64x128xf32> to vector<64x128xbf16>
    %94 = vector.extract_strided_slice %0 {offsets = [17, 0], sizes = [1, 128], strides = [1, 1]} : vector<64x128xf32> to vector<1x128xf32>
    %95 = vector.broadcast %94 : vector<1x128xf32> to vector<64x128xf32>
    %96 = arith.mulf %0, %95 : vector<64x128xf32>
    %97 = arith.truncf %96 : vector<64x128xf32> to vector<64x128xbf16>
    %98 = vector.extract_strided_slice %0 {offsets = [18, 0], sizes = [1, 128], strides = [1, 1]} : vector<64x128xf32> to vector<1x128xf32>
    %99 = vector.broadcast %98 : vector<1x128xf32> to vector<64x128xf32>
    %100 = arith.mulf %0, %99 : vector<64x128xf32>
    %101 = arith.truncf %100 : vector<64x128xf32> to vector<64x128xbf16>
    %102 = vector.extract_strided_slice %0 {offsets = [19, 0], sizes = [1, 128], strides = [1, 1]} : vector<64x128xf32> to vector<1x128xf32>
    %103 = vector.broadcast %102 : vector<1x128xf32> to vector<64x128xf32>
    %104 = arith.mulf %0, %103 : vector<64x128xf32>
    %105 = arith.truncf %104 : vector<64x128xf32> to vector<64x128xbf16>
    %106 = tpu.concatenate %93, %97, %101, %105 in 0 : vector<64x128xbf16>, vector<64x128xbf16>, vector<64x128xbf16>, vector<64x128xbf16> -> vector<256x128xbf16>
    %c4 = arith.constant 4 : index
    %c0_18 = arith.constant 0 : index
    %c0_19 = arith.constant 0 : index
    %107 = vector.load %arg2[%c4, %c0_18, %c0_19] : memref<14x64x256xbf16, #tpu.memory_space<vmem>>, vector<1x64x256xbf16>
    %108 = vector.shape_cast %107 : vector<1x64x256xbf16> to vector<64x256xbf16>
    %cst_20 = arith.constant dense<0.000000e+00> : vector<64x128xf32>
    %109 = tpu.matmul %108, %106, %cst_20 {dimension_numbers = #tpu.dot_dimension_numbers<[1], [0], [0], [1], [0, 0, 1, 1], [], []>} : vector<64x256xbf16>, vector<256x128xbf16>, vector<64x128xf32> -> vector<64x128xf32>
    %110 = arith.addf %89, %109 : vector<64x128xf32>
    %111 = vector.extract_strided_slice %0 {offsets = [20, 0], sizes = [1, 128], strides = [1, 1]} : vector<64x128xf32> to vector<1x128xf32>
    %112 = vector.broadcast %111 : vector<1x128xf32> to vector<64x128xf32>
    %113 = arith.mulf %0, %112 : vector<64x128xf32>
    %114 = arith.truncf %113 : vector<64x128xf32> to vector<64x128xbf16>
    %115 = vector.extract_strided_slice %0 {offsets = [21, 0], sizes = [1, 128], strides = [1, 1]} : vector<64x128xf32> to vector<1x128xf32>
    %116 = vector.broadcast %115 : vector<1x128xf32> to vector<64x128xf32>
    %117 = arith.mulf %0, %116 : vector<64x128xf32>
    %118 = arith.truncf %117 : vector<64x128xf32> to vector<64x128xbf16>
    %119 = vector.extract_strided_slice %0 {offsets = [22, 0], sizes = [1, 128], strides = [1, 1]} : vector<64x128xf32> to vector<1x128xf32>
    %120 = vector.broadcast %119 : vector<1x128xf32> to vector<64x128xf32>
    %121 = arith.mulf %0, %120 : vector<64x128xf32>
    %122 = arith.truncf %121 : vector<64x128xf32> to vector<64x128xbf16>
    %123 = vector.extract_strided_slice %0 {offsets = [23, 0], sizes = [1, 128], strides = [1, 1]} : vector<64x128xf32> to vector<1x128xf32>
    %124 = vector.broadcast %123 : vector<1x128xf32> to vector<64x128xf32>
    %125 = arith.mulf %0, %124 : vector<64x128xf32>
    %126 = arith.truncf %125 : vector<64x128xf32> to vector<64x128xbf16>
    %127 = tpu.concatenate %114, %118, %122, %126 in 0 : vector<64x128xbf16>, vector<64x128xbf16>, vector<64x128xbf16>, vector<64x128xbf16> -> vector<256x128xbf16>
    %c5 = arith.constant 5 : index
    %c0_21 = arith.constant 0 : index
    %c0_22 = arith.constant 0 : index
    %128 = vector.load %arg2[%c5, %c0_21, %c0_22] : memref<14x64x256xbf16, #tpu.memory_space<vmem>>, vector<1x64x256xbf16>
    %129 = vector.shape_cast %128 : vector<1x64x256xbf16> to vector<64x256xbf16>
    %cst_23 = arith.constant dense<0.000000e+00> : vector<64x128xf32>
    %130 = tpu.matmul %129, %127, %cst_23 {dimension_numbers = #tpu.dot_dimension_numbers<[1], [0], [0], [1], [0, 0, 1, 1], [], []>} : vector<64x256xbf16>, vector<256x128xbf16>, vector<64x128xf32> -> vector<64x128xf32>
    %131 = arith.addf %110, %130 : vector<64x128xf32>
    %132 = vector.extract_strided_slice %0 {offsets = [24, 0], sizes = [1, 128], strides = [1, 1]} : vector<64x128xf32> to vector<1x128xf32>
    %133 = vector.broadcast %132 : vector<1x128xf32> to vector<64x128xf32>
    %134 = arith.mulf %0, %133 : vector<64x128xf32>
    %135 = arith.truncf %134 : vector<64x128xf32> to vector<64x128xbf16>
    %136 = vector.extract_strided_slice %0 {offsets = [25, 0], sizes = [1, 128], strides = [1, 1]} : vector<64x128xf32> to vector<1x128xf32>
    %137 = vector.broadcast %136 : vector<1x128xf32> to vector<64x128xf32>
    %138 = arith.mulf %0, %137 : vector<64x128xf32>
    %139 = arith.truncf %138 : vector<64x128xf32> to vector<64x128xbf16>
    %140 = vector.extract_strided_slice %0 {offsets = [26, 0], sizes = [1, 128], strides = [1, 1]} : vector<64x128xf32> to vector<1x128xf32>
    %141 = vector.broadcast %140 : vector<1x128xf32> to vector<64x128xf32>
    %142 = arith.mulf %0, %141 : vector<64x128xf32>
    %143 = arith.truncf %142 : vector<64x128xf32> to vector<64x128xbf16>
    %144 = vector.extract_strided_slice %0 {offsets = [27, 0], sizes = [1, 128], strides = [1, 1]} : vector<64x128xf32> to vector<1x128xf32>
    %145 = vector.broadcast %144 : vector<1x128xf32> to vector<64x128xf32>
    %146 = arith.mulf %0, %145 : vector<64x128xf32>
    %147 = arith.truncf %146 : vector<64x128xf32> to vector<64x128xbf16>
    %148 = tpu.concatenate %135, %139, %143, %147 in 0 : vector<64x128xbf16>, vector<64x128xbf16>, vector<64x128xbf16>, vector<64x128xbf16> -> vector<256x128xbf16>
    %c6 = arith.constant 6 : index
    %c0_24 = arith.constant 0 : index
    %c0_25 = arith.constant 0 : index
    %149 = vector.load %arg2[%c6, %c0_24, %c0_25] : memref<14x64x256xbf16, #tpu.memory_space<vmem>>, vector<1x64x256xbf16>
    %150 = vector.shape_cast %149 : vector<1x64x256xbf16> to vector<64x256xbf16>
    %cst_26 = arith.constant dense<0.000000e+00> : vector<64x128xf32>
    %151 = tpu.matmul %150, %148, %cst_26 {dimension_numbers = #tpu.dot_dimension_numbers<[1], [0], [0], [1], [0, 0, 1, 1], [], []>} : vector<64x256xbf16>, vector<256x128xbf16>, vector<64x128xf32> -> vector<64x128xf32>
    %152 = arith.addf %131, %151 : vector<64x128xf32>
    %153 = vector.extract_strided_slice %0 {offsets = [28, 0], sizes = [1, 128], strides = [1, 1]} : vector<64x128xf32> to vector<1x128xf32>
    %154 = vector.broadcast %153 : vector<1x128xf32> to vector<64x128xf32>
    %155 = arith.mulf %0, %154 : vector<64x128xf32>
    %156 = arith.truncf %155 : vector<64x128xf32> to vector<64x128xbf16>
    %157 = vector.extract_strided_slice %0 {offsets = [29, 0], sizes = [1, 128], strides = [1, 1]} : vector<64x128xf32> to vector<1x128xf32>
    %158 = vector.broadcast %157 : vector<1x128xf32> to vector<64x128xf32>
    %159 = arith.mulf %0, %158 : vector<64x128xf32>
    %160 = arith.truncf %159 : vector<64x128xf32> to vector<64x128xbf16>
    %161 = vector.extract_strided_slice %0 {offsets = [30, 0], sizes = [1, 128], strides = [1, 1]} : vector<64x128xf32> to vector<1x128xf32>
    %162 = vector.broadcast %161 : vector<1x128xf32> to vector<64x128xf32>
    %163 = arith.mulf %0, %162 : vector<64x128xf32>
    %164 = arith.truncf %163 : vector<64x128xf32> to vector<64x128xbf16>
    %165 = vector.extract_strided_slice %0 {offsets = [31, 0], sizes = [1, 128], strides = [1, 1]} : vector<64x128xf32> to vector<1x128xf32>
    %166 = vector.broadcast %165 : vector<1x128xf32> to vector<64x128xf32>
    %167 = arith.mulf %0, %166 : vector<64x128xf32>
    %168 = arith.truncf %167 : vector<64x128xf32> to vector<64x128xbf16>
    %169 = tpu.concatenate %156, %160, %164, %168 in 0 : vector<64x128xbf16>, vector<64x128xbf16>, vector<64x128xbf16>, vector<64x128xbf16> -> vector<256x128xbf16>
    %c7 = arith.constant 7 : index
    %c0_27 = arith.constant 0 : index
    %c0_28 = arith.constant 0 : index
    %170 = vector.load %arg2[%c7, %c0_27, %c0_28] : memref<14x64x256xbf16, #tpu.memory_space<vmem>>, vector<1x64x256xbf16>
    %171 = vector.shape_cast %170 : vector<1x64x256xbf16> to vector<64x256xbf16>
    %cst_29 = arith.constant dense<0.000000e+00> : vector<64x128xf32>
    %172 = tpu.matmul %171, %169, %cst_29 {dimension_numbers = #tpu.dot_dimension_numbers<[1], [0], [0], [1], [0, 0, 1, 1], [], []>} : vector<64x256xbf16>, vector<256x128xbf16>, vector<64x128xf32> -> vector<64x128xf32>
    %173 = arith.addf %152, %172 : vector<64x128xf32>
    %174 = vector.extract_strided_slice %0 {offsets = [32, 0], sizes = [1, 128], strides = [1, 1]} : vector<64x128xf32> to vector<1x128xf32>
    %175 = vector.broadcast %174 : vector<1x128xf32> to vector<64x128xf32>
    %176 = arith.mulf %0, %175 : vector<64x128xf32>
    %177 = arith.truncf %176 : vector<64x128xf32> to vector<64x128xbf16>
    %178 = vector.extract_strided_slice %0 {offsets = [33, 0], sizes = [1, 128], strides = [1, 1]} : vector<64x128xf32> to vector<1x128xf32>
    %179 = vector.broadcast %178 : vector<1x128xf32> to vector<64x128xf32>
    %180 = arith.mulf %0, %179 : vector<64x128xf32>
    %181 = arith.truncf %180 : vector<64x128xf32> to vector<64x128xbf16>
    %182 = vector.extract_strided_slice %0 {offsets = [34, 0], sizes = [1, 128], strides = [1, 1]} : vector<64x128xf32> to vector<1x128xf32>
    %183 = vector.broadcast %182 : vector<1x128xf32> to vector<64x128xf32>
    %184 = arith.mulf %0, %183 : vector<64x128xf32>
    %185 = arith.truncf %184 : vector<64x128xf32> to vector<64x128xbf16>
    %186 = vector.extract_strided_slice %0 {offsets = [35, 0], sizes = [1, 128], strides = [1, 1]} : vector<64x128xf32> to vector<1x128xf32>
    %187 = vector.broadcast %186 : vector<1x128xf32> to vector<64x128xf32>
    %188 = arith.mulf %0, %187 : vector<64x128xf32>
    %189 = arith.truncf %188 : vector<64x128xf32> to vector<64x128xbf16>
    %190 = tpu.concatenate %177, %181, %185, %189 in 0 : vector<64x128xbf16>, vector<64x128xbf16>, vector<64x128xbf16>, vector<64x128xbf16> -> vector<256x128xbf16>
    %c8 = arith.constant 8 : index
    %c0_30 = arith.constant 0 : index
    %c0_31 = arith.constant 0 : index
    %191 = vector.load %arg2[%c8, %c0_30, %c0_31] : memref<14x64x256xbf16, #tpu.memory_space<vmem>>, vector<1x64x256xbf16>
    %192 = vector.shape_cast %191 : vector<1x64x256xbf16> to vector<64x256xbf16>
    %cst_32 = arith.constant dense<0.000000e+00> : vector<64x128xf32>
    %193 = tpu.matmul %192, %190, %cst_32 {dimension_numbers = #tpu.dot_dimension_numbers<[1], [0], [0], [1], [0, 0, 1, 1], [], []>} : vector<64x256xbf16>, vector<256x128xbf16>, vector<64x128xf32> -> vector<64x128xf32>
    %194 = arith.addf %173, %193 : vector<64x128xf32>
    %195 = vector.extract_strided_slice %0 {offsets = [36, 0], sizes = [1, 128], strides = [1, 1]} : vector<64x128xf32> to vector<1x128xf32>
    %196 = vector.broadcast %195 : vector<1x128xf32> to vector<64x128xf32>
    %197 = arith.mulf %0, %196 : vector<64x128xf32>
    %198 = arith.truncf %197 : vector<64x128xf32> to vector<64x128xbf16>
    %199 = vector.extract_strided_slice %0 {offsets = [37, 0], sizes = [1, 128], strides = [1, 1]} : vector<64x128xf32> to vector<1x128xf32>
    %200 = vector.broadcast %199 : vector<1x128xf32> to vector<64x128xf32>
    %201 = arith.mulf %0, %200 : vector<64x128xf32>
    %202 = arith.truncf %201 : vector<64x128xf32> to vector<64x128xbf16>
    %203 = vector.extract_strided_slice %0 {offsets = [38, 0], sizes = [1, 128], strides = [1, 1]} : vector<64x128xf32> to vector<1x128xf32>
    %204 = vector.broadcast %203 : vector<1x128xf32> to vector<64x128xf32>
    %205 = arith.mulf %0, %204 : vector<64x128xf32>
    %206 = arith.truncf %205 : vector<64x128xf32> to vector<64x128xbf16>
    %207 = vector.extract_strided_slice %0 {offsets = [39, 0], sizes = [1, 128], strides = [1, 1]} : vector<64x128xf32> to vector<1x128xf32>
    %208 = vector.broadcast %207 : vector<1x128xf32> to vector<64x128xf32>
    %209 = arith.mulf %0, %208 : vector<64x128xf32>
    %210 = arith.truncf %209 : vector<64x128xf32> to vector<64x128xbf16>
    %211 = tpu.concatenate %198, %202, %206, %210 in 0 : vector<64x128xbf16>, vector<64x128xbf16>, vector<64x128xbf16>, vector<64x128xbf16> -> vector<256x128xbf16>
    %c9 = arith.constant 9 : index
    %c0_33 = arith.constant 0 : index
    %c0_34 = arith.constant 0 : index
    %212 = vector.load %arg2[%c9, %c0_33, %c0_34] : memref<14x64x256xbf16, #tpu.memory_space<vmem>>, vector<1x64x256xbf16>
    %213 = vector.shape_cast %212 : vector<1x64x256xbf16> to vector<64x256xbf16>
    %cst_35 = arith.constant dense<0.000000e+00> : vector<64x128xf32>
    %214 = tpu.matmul %213, %211, %cst_35 {dimension_numbers = #tpu.dot_dimension_numbers<[1], [0], [0], [1], [0, 0, 1, 1], [], []>} : vector<64x256xbf16>, vector<256x128xbf16>, vector<64x128xf32> -> vector<64x128xf32>
    %215 = arith.addf %194, %214 : vector<64x128xf32>
    %216 = vector.extract_strided_slice %0 {offsets = [40, 0], sizes = [1, 128], strides = [1, 1]} : vector<64x128xf32> to vector<1x128xf32>
    %217 = vector.broadcast %216 : vector<1x128xf32> to vector<64x128xf32>
    %218 = arith.mulf %0, %217 : vector<64x128xf32>
    %219 = arith.truncf %218 : vector<64x128xf32> to vector<64x128xbf16>
    %220 = vector.extract_strided_slice %0 {offsets = [41, 0], sizes = [1, 128], strides = [1, 1]} : vector<64x128xf32> to vector<1x128xf32>
    %221 = vector.broadcast %220 : vector<1x128xf32> to vector<64x128xf32>
    %222 = arith.mulf %0, %221 : vector<64x128xf32>
    %223 = arith.truncf %222 : vector<64x128xf32> to vector<64x128xbf16>
    %224 = vector.extract_strided_slice %0 {offsets = [42, 0], sizes = [1, 128], strides = [1, 1]} : vector<64x128xf32> to vector<1x128xf32>
    %225 = vector.broadcast %224 : vector<1x128xf32> to vector<64x128xf32>
    %226 = arith.mulf %0, %225 : vector<64x128xf32>
    %227 = arith.truncf %226 : vector<64x128xf32> to vector<64x128xbf16>
    %228 = vector.extract_strided_slice %0 {offsets = [43, 0], sizes = [1, 128], strides = [1, 1]} : vector<64x128xf32> to vector<1x128xf32>
    %229 = vector.broadcast %228 : vector<1x128xf32> to vector<64x128xf32>
    %230 = arith.mulf %0, %229 : vector<64x128xf32>
    %231 = arith.truncf %230 : vector<64x128xf32> to vector<64x128xbf16>
    %232 = tpu.concatenate %219, %223, %227, %231 in 0 : vector<64x128xbf16>, vector<64x128xbf16>, vector<64x128xbf16>, vector<64x128xbf16> -> vector<256x128xbf16>
    %c10 = arith.constant 10 : index
    %c0_36 = arith.constant 0 : index
    %c0_37 = arith.constant 0 : index
    %233 = vector.load %arg2[%c10, %c0_36, %c0_37] : memref<14x64x256xbf16, #tpu.memory_space<vmem>>, vector<1x64x256xbf16>
    %234 = vector.shape_cast %233 : vector<1x64x256xbf16> to vector<64x256xbf16>
    %cst_38 = arith.constant dense<0.000000e+00> : vector<64x128xf32>
    %235 = tpu.matmul %234, %232, %cst_38 {dimension_numbers = #tpu.dot_dimension_numbers<[1], [0], [0], [1], [0, 0, 1, 1], [], []>} : vector<64x256xbf16>, vector<256x128xbf16>, vector<64x128xf32> -> vector<64x128xf32>
    %236 = arith.addf %215, %235 : vector<64x128xf32>
    %237 = vector.extract_strided_slice %0 {offsets = [44, 0], sizes = [1, 128], strides = [1, 1]} : vector<64x128xf32> to vector<1x128xf32>
    %238 = vector.broadcast %237 : vector<1x128xf32> to vector<64x128xf32>
    %239 = arith.mulf %0, %238 : vector<64x128xf32>
    %240 = arith.truncf %239 : vector<64x128xf32> to vector<64x128xbf16>
    %241 = vector.extract_strided_slice %0 {offsets = [45, 0], sizes = [1, 128], strides = [1, 1]} : vector<64x128xf32> to vector<1x128xf32>
    %242 = vector.broadcast %241 : vector<1x128xf32> to vector<64x128xf32>
    %243 = arith.mulf %0, %242 : vector<64x128xf32>
    %244 = arith.truncf %243 : vector<64x128xf32> to vector<64x128xbf16>
    %245 = vector.extract_strided_slice %0 {offsets = [46, 0], sizes = [1, 128], strides = [1, 1]} : vector<64x128xf32> to vector<1x128xf32>
    %246 = vector.broadcast %245 : vector<1x128xf32> to vector<64x128xf32>
    %247 = arith.mulf %0, %246 : vector<64x128xf32>
    %248 = arith.truncf %247 : vector<64x128xf32> to vector<64x128xbf16>
    %249 = vector.extract_strided_slice %0 {offsets = [47, 0], sizes = [1, 128], strides = [1, 1]} : vector<64x128xf32> to vector<1x128xf32>
    %250 = vector.broadcast %249 : vector<1x128xf32> to vector<64x128xf32>
    %251 = arith.mulf %0, %250 : vector<64x128xf32>
    %252 = arith.truncf %251 : vector<64x128xf32> to vector<64x128xbf16>
    %253 = tpu.concatenate %240, %244, %248, %252 in 0 : vector<64x128xbf16>, vector<64x128xbf16>, vector<64x128xbf16>, vector<64x128xbf16> -> vector<256x128xbf16>
    %c11 = arith.constant 11 : index
    %c0_39 = arith.constant 0 : index
    %c0_40 = arith.constant 0 : index
    %254 = vector.load %arg2[%c11, %c0_39, %c0_40] : memref<14x64x256xbf16, #tpu.memory_space<vmem>>, vector<1x64x256xbf16>
    %255 = vector.shape_cast %254 : vector<1x64x256xbf16> to vector<64x256xbf16>
    %cst_41 = arith.constant dense<0.000000e+00> : vector<64x128xf32>
    %256 = tpu.matmul %255, %253, %cst_41 {dimension_numbers = #tpu.dot_dimension_numbers<[1], [0], [0], [1], [0, 0, 1, 1], [], []>} : vector<64x256xbf16>, vector<256x128xbf16>, vector<64x128xf32> -> vector<64x128xf32>
    %257 = arith.addf %236, %256 : vector<64x128xf32>
    %258 = vector.extract_strided_slice %0 {offsets = [48, 0], sizes = [1, 128], strides = [1, 1]} : vector<64x128xf32> to vector<1x128xf32>
    %259 = vector.broadcast %258 : vector<1x128xf32> to vector<64x128xf32>
    %260 = arith.mulf %0, %259 : vector<64x128xf32>
    %261 = arith.truncf %260 : vector<64x128xf32> to vector<64x128xbf16>
    %262 = vector.extract_strided_slice %0 {offsets = [49, 0], sizes = [1, 128], strides = [1, 1]} : vector<64x128xf32> to vector<1x128xf32>
    %263 = vector.broadcast %262 : vector<1x128xf32> to vector<64x128xf32>
    %264 = arith.mulf %0, %263 : vector<64x128xf32>
    %265 = arith.truncf %264 : vector<64x128xf32> to vector<64x128xbf16>
    %266 = vector.extract_strided_slice %0 {offsets = [50, 0], sizes = [1, 128], strides = [1, 1]} : vector<64x128xf32> to vector<1x128xf32>
    %267 = vector.broadcast %266 : vector<1x128xf32> to vector<64x128xf32>
    %268 = arith.mulf %0, %267 : vector<64x128xf32>
    %269 = arith.truncf %268 : vector<64x128xf32> to vector<64x128xbf16>
    %270 = vector.extract_strided_slice %0 {offsets = [51, 0], sizes = [1, 128], strides = [1, 1]} : vector<64x128xf32> to vector<1x128xf32>
    %271 = vector.broadcast %270 : vector<1x128xf32> to vector<64x128xf32>
    %272 = arith.mulf %0, %271 : vector<64x128xf32>
    %273 = arith.truncf %272 : vector<64x128xf32> to vector<64x128xbf16>
    %274 = tpu.concatenate %261, %265, %269, %273 in 0 : vector<64x128xbf16>, vector<64x128xbf16>, vector<64x128xbf16>, vector<64x128xbf16> -> vector<256x128xbf16>
    %c12 = arith.constant 12 : index
    %c0_42 = arith.constant 0 : index
    %c0_43 = arith.constant 0 : index
    %275 = vector.load %arg2[%c12, %c0_42, %c0_43] : memref<14x64x256xbf16, #tpu.memory_space<vmem>>, vector<1x64x256xbf16>
    %276 = vector.shape_cast %275 : vector<1x64x256xbf16> to vector<64x256xbf16>
    %cst_44 = arith.constant dense<0.000000e+00> : vector<64x128xf32>
    %277 = tpu.matmul %276, %274, %cst_44 {dimension_numbers = #tpu.dot_dimension_numbers<[1], [0], [0], [1], [0, 0, 1, 1], [], []>} : vector<64x256xbf16>, vector<256x128xbf16>, vector<64x128xf32> -> vector<64x128xf32>
    %278 = arith.addf %257, %277 : vector<64x128xf32>
    %279 = vector.extract_strided_slice %0 {offsets = [52, 0], sizes = [1, 128], strides = [1, 1]} : vector<64x128xf32> to vector<1x128xf32>
    %280 = vector.broadcast %279 : vector<1x128xf32> to vector<64x128xf32>
    %281 = arith.mulf %0, %280 : vector<64x128xf32>
    %282 = arith.truncf %281 : vector<64x128xf32> to vector<64x128xbf16>
    %283 = vector.extract_strided_slice %0 {offsets = [53, 0], sizes = [1, 128], strides = [1, 1]} : vector<64x128xf32> to vector<1x128xf32>
    %284 = vector.broadcast %283 : vector<1x128xf32> to vector<64x128xf32>
    %285 = arith.mulf %0, %284 : vector<64x128xf32>
    %286 = arith.truncf %285 : vector<64x128xf32> to vector<64x128xbf16>
    %287 = vector.extract_strided_slice %0 {offsets = [54, 0], sizes = [1, 128], strides = [1, 1]} : vector<64x128xf32> to vector<1x128xf32>
    %288 = vector.broadcast %287 : vector<1x128xf32> to vector<64x128xf32>
    %289 = arith.mulf %0, %288 : vector<64x128xf32>
    %290 = arith.truncf %289 : vector<64x128xf32> to vector<64x128xbf16>
    %291 = vector.extract_strided_slice %0 {offsets = [55, 0], sizes = [1, 128], strides = [1, 1]} : vector<64x128xf32> to vector<1x128xf32>
    %292 = vector.broadcast %291 : vector<1x128xf32> to vector<64x128xf32>
    %293 = arith.mulf %0, %292 : vector<64x128xf32>
    %294 = arith.truncf %293 : vector<64x128xf32> to vector<64x128xbf16>
    %295 = tpu.concatenate %282, %286, %290, %294 in 0 : vector<64x128xbf16>, vector<64x128xbf16>, vector<64x128xbf16>, vector<64x128xbf16> -> vector<256x128xbf16>
    %c13 = arith.constant 13 : index
    %c0_45 = arith.constant 0 : index
    %c0_46 = arith.constant 0 : index
    %296 = vector.load %arg2[%c13, %c0_45, %c0_46] : memref<14x64x256xbf16, #tpu.memory_space<vmem>>, vector<1x64x256xbf16>
    %297 = vector.shape_cast %296 : vector<1x64x256xbf16> to vector<64x256xbf16>
    %cst_47 = arith.constant dense<0.000000e+00> : vector<64x128xf32>
    %298 = tpu.matmul %297, %295, %cst_47 {dimension_numbers = #tpu.dot_dimension_numbers<[1], [0], [0], [1], [0, 0, 1, 1], [], []>} : vector<64x256xbf16>, vector<256x128xbf16>, vector<64x128xf32> -> vector<64x128xf32>
    %299 = arith.addf %278, %298 : vector<64x128xf32>
    %c0_48 = arith.constant 0 : index
    %c0_49 = arith.constant 0 : index
    %300 = vector.load %arg5[%c0_48, %c0_49] : memref<64x64xf32, #tpu.memory_space<vmem>>, vector<64x64xf32>
    %cst_50 = arith.constant dense<0.000000e+00> : vector<64x128xf32>
    %301 = tpu.matmul %300, %299, %cst_50 {dimension_numbers = #tpu.dot_dimension_numbers<[1], [0], [0], [1], [0, 0, 1, 1], [], []>} : vector<64x64xf32>, vector<64x128xf32>, vector<64x128xf32> -> vector<64x128xf32>
    %c0_51 = arith.constant 0 : index
    %c0_52 = arith.constant 0 : index
    %302 = vector.load %arg6[%c0_51, %c0_52] : memref<64x1xf32, #tpu.memory_space<vmem>>, vector<64x1xf32>
    %303 = vector.broadcast %302 : vector<64x1xf32> to vector<64x128xf32>
    %304 = arith.addf %301, %303 : vector<64x128xf32>
    %cst_53 = arith.constant 0.000000e+00 : f32
    %305 = vector.broadcast %cst_53 : f32 to vector<64x128xf32>
    %306 = arith.cmpf ogt, %304, %305 : vector<64x128xf32>
    %cst_54 = arith.constant 0.00999999977 : f32
    %307 = vector.broadcast %cst_54 : f32 to vector<64x128xf32>
    %308 = arith.mulf %307, %304 : vector<64x128xf32>
    %309 = arith.select %306, %304, %308 : vector<64x128xi1>, vector<64x128xf32>
    %c0_55 = arith.constant 0 : index
    %c0_56 = arith.constant 0 : index
    %310 = vector.load %arg7[%c0_55, %c0_56] : memref<1x64xf32, #tpu.memory_space<vmem>>, vector<1x64xf32>
    %cst_57 = arith.constant dense<0.000000e+00> : vector<1x128xf32>
    %311 = tpu.matmul %310, %309, %cst_57 {dimension_numbers = #tpu.dot_dimension_numbers<[1], [0], [0], [1], [0, 0, 1, 1], [], []>} : vector<1x64xf32>, vector<64x128xf32>, vector<1x128xf32> -> vector<1x128xf32>
    %c0_58 = arith.constant 0 : index
    %c0_59 = arith.constant 0 : index
    %312 = vector.load %arg8[%c0_58, %c0_59] : memref<1x1xf32, #tpu.memory_space<vmem>>, vector<1x1xf32>
    %313 = vector.broadcast %312 : vector<1x1xf32> to vector<1x128xf32>
    %314 = arith.addf %311, %313 : vector<1x128xf32>
    %c0_60 = arith.constant 0 : index
    %c0_61 = arith.constant 0 : index
    %315 = vector.load %arg9[%c0_60, %c0_61] : memref<1x128xf32, #tpu.memory_space<vmem>>, vector<1x128xf32>
    tpu.vector_store %arg9[%c0_60, %c0_61], %314 {strides = array<i32>} : memref<1x128xf32, #tpu.memory_space<vmem>>, vector<1x128xf32>,
    return
  }
  func.func @transform_0(%arg0: i32) -> (i32, i32) {
    %c0_i32 = arith.constant 0 : i32
    %c0_i32_0 = arith.constant 0 : i32
    return %c0_i32, %arg0 : i32, i32
  }
  func.func @transform_1(%arg0: i32) -> (i32, i32, i32) {
    %c0_i32 = arith.constant 0 : i32
    %c0_i32_0 = arith.constant 0 : i32
    %c0_i32_1 = arith.constant 0 : i32
    %c0_i32_2 = arith.constant 0 : i32
    return %c0_i32, %c0_i32_0, %c0_i32_1 : i32, i32, i32
  }
  func.func @transform_2(%arg0: i32) -> (i32, i32) {
    %c0_i32 = arith.constant 0 : i32
    %c0_i32_0 = arith.constant 0 : i32
    %c0_i32_1 = arith.constant 0 : i32
    return %c0_i32, %c0_i32_0 : i32, i32
  }
  func.func @transform_3(%arg0: i32) -> (i32, i32) {
    %c0_i32 = arith.constant 0 : i32
    %c0_i32_0 = arith.constant 0 : i32
    %c0_i32_1 = arith.constant 0 : i32
    return %c0_i32, %c0_i32_0 : i32, i32
  }
  func.func @transform_4(%arg0: i32) -> (i32, i32) {
    %c0_i32 = arith.constant 0 : i32
    %c0_i32_0 = arith.constant 0 : i32
    %c0_i32_1 = arith.constant 0 : i32
    return %c0_i32, %c0_i32_0 : i32, i32
  }
  func.func @transform_5(%arg0: i32) -> (i32, i32) {
    %c0_i32 = arith.constant 0 : i32
    %c0_i32_0 = arith.constant 0 : i32
    %c0_i32_1 = arith.constant 0 : i32
    return %c0_i32, %c0_i32_0 : i32, i32
  }
  func.func @transform_6(%arg0: i32) -> (i32, i32) {
    %c0_i32 = arith.constant 0 : i32
    %c0_i32_0 = arith.constant 0 : i32
    %c0_i32_1 = arith.constant 0 : i32
    return %c0_i32, %c0_i32_0 : i32, i32
  }
  func.func @transform_7(%arg0: i32) -> (i32, i32) {
    %c0_i32 = arith.constant 0 : i32
    %c0_i32_0 = arith.constant 0 : i32
    %c0_i32_1 = arith.constant 0 : i32
    return %c0_i32, %c0_i32_0 : i32, i32
  }
  func.func @transform_8(%arg0: i32) -> (i32, i32) {
    %c0_i32 = arith.constant 0 : i32
    %c0_i32_0 = arith.constant 0 : i32
    return %c0_i32, %arg0 : i32, i32
  }
}

</mosaic_0001>

<llo_original>
// kernel: critic_forward.1
$region0: #{critic_forward.1}
  #allocation0 [shape = 'u32[]', space=smem, size = 0x4, offset = 0x4, fixed_abs, tag = 'smem constant byte address 0x4 - core index']
  #allocation1 [shape = 'u32[144,128]{1,0:T(1,128)}', space=vmem, size = 0x12000, scoped, tag = 'internal scratch']
  #allocation2 [shape = 'f32[1,1]{1,0:T(1,128)S(1)}', space=vmem, size = 0x200, scoped, tag = 'scoped memory for critic_forward.1']
  %s0 = inlined_call_operand.vmem [shape: f32[64,128], index: 0, kind: input, shape index: {}]
  %s1 = inlined_call_operand.hbm [shape: bf16[14,64,256], index: 1, kind: input, shape index: {}]
  %s2 = inlined_call_operand.vmem [shape: f32[64,64], index: 2, kind: input, shape index: {}]
  %s3 = inlined_call_operand.vmem [shape: f32[64,1], index: 3, kind: input, shape index: {}]
  %s4 = inlined_call_operand.vmem [shape: f32[64,64], index: 4, kind: input, shape index: {}]
  %s5 = inlined_call_operand.vmem [shape: f32[64,1], index: 5, kind: input, shape index: {}]
  %s6 = inlined_call_operand.vmem [shape: f32[1,64], index: 6, kind: input, shape index: {}]
  %s7 = inlined_call_operand.<no memory space> [shape: f32[1,1], index: 7, kind: input, shape index: {}]
  %s8 = inlined_call_operand.vmem [shape: f32[1,128], index: 8, kind: output, shape index: {}]
  %s9 = sld [smem:[#allocation0]]
  $region46: #{critic_forward.1} parent=0
    _
  %s11 = ssub.s32 1, %s9
  %s12 = scalar_select 0, %s11, %s9
  %v13 = vstv %s7
  %14 = vst [vmem:[#allocation2] sm:$0x1] %v13
  $region1: #{critic_forward.1} parent=0
    #allocation3 [shape = 'u8[458752]{0}', space=vmem, size = 0x70000, scoped, tag = 'input window, operand 1, single buffered']
    #allocation4 [shape = 's32[1]{0}', space=sflag, size = 0x4, scoped, tag = 'scoped memory for critic_forward.1']
    %15 = vsyncpa [#allocation4], 0
    // Predicated region
    $region2: #{critic_forward.1} parent=1 // pred_check
      _
    $region3: #{critic_forward.1} parent=1 // pred_check_branch
      %17 = sbr.rel (0) target = $region5
    $region4: #{critic_forward.1} parent=1 // pred_region
      _
    $region5: #{critic_forward.1} parent=1 // pred_fallthru
      _
    // Predicated region
    $region6: #{critic_forward.1} parent=1 // pred_check
      _
    $region7: #{critic_forward.1} parent=1 // pred_check_branch
      %19 = sbr.rel (0) target = $region9
    $region8: #{critic_forward.1} parent=1 // pred_region
      %s21 = ssub.s32 14336, 14336
      %22 = vsyncadd [#allocation4], %s21
      %s23 = sshll.u32 [#allocation3], 4
      %s24 = int_to_ptr.vmem [resolvable:$true] %s23
      %29 = dma.hbm_to_vmem [thread:$0]  %s1, 14336, %s24, [#allocation4], 128, 128, 8
    $region9: #{critic_forward.1} parent=1 // pred_fallthru
      _
    // Predicated region
    $region10: #{critic_forward.1} parent=1 // pred_check
      _
    $region11: #{critic_forward.1} parent=1 // pred_check_branch
      %31 = sbr.rel (0) target = $region13
    $region12: #{critic_forward.1} parent=1 // pred_region
      _
    $region13: #{critic_forward.1} parent=1 // pred_fallthru
      _
    // Predicated region
    $region14: #{critic_forward.1} parent=1 // pred_check
      _
    $region15: #{critic_forward.1} parent=1 // pred_check_branch
      %33 = sbr.rel (0) target = $region17
    $region16: #{critic_forward.1} parent=1 // pred_region
      _
    $region17: #{critic_forward.1} parent=1 // pred_fallthru
      _
    // Predicated region
    $region18: #{critic_forward.1} parent=1 // pred_check
      _
    $region19: #{critic_forward.1} parent=1 // pred_check_branch
      %35 = sbr.rel (0) target = $region21
    $region20: #{critic_forward.1} parent=1 // pred_region
      _
    $region21: #{critic_forward.1} parent=1 // pred_fallthru
      _
    // Predicated region
    $region22: #{critic_forward.1} parent=1 // pred_check
      _
    $region23: #{critic_forward.1} parent=1 // pred_check_branch
      %37 = sbr.rel (0) target = $region25
    $region24: #{critic_forward.1} parent=1 // pred_region
      _
    $region25: #{critic_forward.1} parent=1 // pred_fallthru
      _
    // Predicated region
    $region26: #{critic_forward.1} parent=1 // pred_check
      _
    $region27: #{critic_forward.1} parent=1 // pred_check_branch
      %39 = sbr.rel (0) target = $region29
    $region28: #{critic_forward.1} parent=1 // pred_region
      _
    $region29: #{critic_forward.1} parent=1 // pred_fallthru
      _
    // Predicated region
    $region30: #{critic_forward.1} parent=1 // pred_check
      _
    $region31: #{critic_forward.1} parent=1 // pred_check_branch
      %41 = sbr.rel (0) target = $region33
    $region32: #{critic_forward.1} parent=1 // pred_region
      _
    $region33: #{critic_forward.1} parent=1 // pred_fallthru
      _
    // Predicated region
    $region34: #{critic_forward.1} parent=1 // pred_check
      _
    $region35: #{critic_forward.1} parent=1 // pred_check_branch
      %43 = sbr.rel (0) target = $region37
    $region36: #{critic_forward.1} parent=1 // pred_region
      %44 = dma.done [#allocation4], 14336
    $region37: #{critic_forward.1} parent=1 // pred_fallthru
      _
    %v46 = vld [vmem:[%s0] sm:$0xff]
    %v47 = vld [vmem:[%s0 + $0x8] sm:$0xff]
    %v48 = vld [vmem:[%s0 + $0x10] sm:$0xff]
    %v49 = vld [vmem:[%s0 + $0x18] sm:$0xff]
    %v50 = vld [vmem:[%s0 + $0x20] sm:$0xff]
    %v51 = vld [vmem:[%s0 + $0x28] sm:$0xff]
    %v52 = vld [vmem:[%s0 + $0x30] sm:$0xff]
    %v53 = vld [vmem:[%s0 + $0x38] sm:$0xff]
    %v54 = vld [vmem:[%s2] sm:$0xff]
    %v55 = vld [vmem:[%s2 + $0x8] sm:$0xff]
    %v56 = vld [vmem:[%s2 + $0x10] sm:$0xff]
    %v57 = vld [vmem:[%s2 + $0x18] sm:$0xff]
    %v58 = vld [vmem:[%s2 + $0x20] sm:$0xff]
    %v59 = vld [vmem:[%s2 + $0x28] sm:$0xff]
    %v60 = vld [vmem:[%s2 + $0x30] sm:$0xff]
    %v61 = vld [vmem:[%s2 + $0x38] sm:$0xff]
    %v62 = vld [vmem:[%s3] sm:$0xff]
    %v63 = vld [vmem:[%s3 + $0x8] sm:$0xff]
    %v64 = vld [vmem:[%s3 + $0x10] sm:$0xff]
    %v65 = vld [vmem:[%s3 + $0x18] sm:$0xff]
    %v66 = vld [vmem:[%s3 + $0x20] sm:$0xff]
    %v67 = vld [vmem:[%s3 + $0x28] sm:$0xff]
    %v68 = vld [vmem:[%s3 + $0x30] sm:$0xff]
    %v69 = vld [vmem:[%s3 + $0x38] sm:$0xff]
    %71 = vset.pattern.permute.xlu0 0
    %72 = vperm.xlu0 %71, %v62
    %v73 = vpop.permute.xlu0 %72
    %76 = vset.pattern.permute.xlu0 0
    %77 = vperm.xlu0 %76, %v63
    %v78 = vpop.permute.xlu0 %77
    %81 = vset.pattern.permute.xlu0 0
    %82 = vperm.xlu0 %81, %v64
    %v83 = vpop.permute.xlu0 %82
    %86 = vset.pattern.permute.xlu0 0
    %87 = vperm.xlu0 %86, %v65
    %v88 = vpop.permute.xlu0 %87
    %91 = vset.pattern.permute.xlu0 0
    %92 = vperm.xlu0 %91, %v66
    %v93 = vpop.permute.xlu0 %92
    %96 = vset.pattern.permute.xlu0 0
    %97 = vperm.xlu0 %96, %v67
    %v98 = vpop.permute.xlu0 %97
    %101 = vset.pattern.permute.xlu0 0
    %102 = vperm.xlu0 %101, %v68
    %v103 = vpop.permute.xlu0 %102
    %106 = vset.pattern.permute.xlu0 0
    %107 = vperm.xlu0 %106, %v69
    %v108 = vpop.permute.xlu0 %107
    %vm110 = vcmask 523264
    %v112 = vsel %vm110, %v54, 0
    %v115 = vsel %vm110, %v55, 0
    %v118 = vsel %vm110, %v56, 0
    %v121 = vsel %vm110, %v57, 0
    %v124 = vsel %vm110, %v58, 0
    %v127 = vsel %vm110, %v59, 0
    %v130 = vsel %vm110, %v60, 0
    %v133 = vsel %vm110, %v61, 0
    %135 = vmatprep.subr.mxu0 0.0
    %136 = vmatpush1.msra.mxu0 %v46
    %137 = vmatprep.subr.mxu0 0.0
    %138 = vmatpush1.msra.mxu0 %v47
    %139 = vmatprep.subr.mxu0 0.0
    %140 = vmatpush1.msra.mxu0 %v48
    %141 = vmatprep.subr.mxu0 0.0
    %142 = vmatpush1.msra.mxu0 %v49
    %143 = vmatprep.subr.mxu0 0.0
    %144 = vmatpush1.msra.mxu0 %v50
    %145 = vmatprep.subr.mxu0 0.0
    %146 = vmatpush1.msra.mxu0 %v51
    %147 = vmatprep.subr.mxu0 0.0
    %148 = vmatpush1.msra.mxu0 %v52
    %149 = vmatprep.subr.mxu0 0.0
    %150 = vmatpush1.msra.mxu0 %v53
    %151 = vmatprep.subr.mxu0 0.0
    %152 = vmatpush1.msra.mxu0 0.0
    %153 = vmatprep.subr.mxu0 0.0
    %154 = vmatpush1.msra.mxu0 0.0
    %155 = vmatprep.subr.mxu0 0.0
    %156 = vmatpush1.msra.mxu0 0.0
    %157 = vmatprep.subr.mxu0 0.0
    %158 = vmatpush1.msra.mxu0 0.0
    %159 = vmatprep.subr.mxu0 0.0
    %160 = vmatpush1.msra.mxu0 0.0
    %161 = vmatprep.subr.mxu0 0.0
    %162 = vmatpush1.msra.mxu0 0.0
    %163 = vmatprep.subr.mxu0 0.0
    %164 = vmatpush1.msra.mxu0 0.0
    %165 = vmatprep.subr.mxu0 0.0
    %166 = vmatpush1.msra.mxu0 0.0
    %167 = vmatprep.subr.mxu0 0.0
    %168 = vmatpush1.msra.mxu0 0.0
    %169 = vmatprep.subr.mxu0 0.0
    %170 = vmatpush1.msra.mxu0 0.0
    %171 = vmatprep.subr.mxu0 0.0
    %172 = vmatpush1.msra.mxu0 0.0
    %173 = vmatprep.subr.mxu0 0.0
    %174 = vmatpush1.msra.mxu0 0.0
    %175 = vmatprep.subr.mxu0 0.0
    %176 = vmatpush1.msra.mxu0 0.0
    %177 = vmatprep.subr.mxu0 0.0
    %178 = vmatpush1.msra.mxu0 0.0
    %179 = vmatprep.subr.mxu0 0.0
    %180 = vmatpush1.msra.mxu0 0.0
    %181 = vmatprep.subr.mxu0 0.0
    %182 = vmatpush1.msra.mxu0 0.0
    %183 = vmatprep.subr.mxu0 0.0
    %184 = vmatpush1.msra.mxu0 0.0
    %185 = vmatprep.subr.mxu0 0.0
    %186 = vmatpush1.msra.mxu0 0.0
    %187 = vmatprep.subr.mxu0 0.0
    %188 = vmatpush1.msra.mxu0 0.0
    %189 = vmatprep.subr.mxu0 0.0
    %190 = vmatpush1.msra.mxu0 0.0
    %191 = vmatprep.subr.mxu0 0.0
    %192 = vmatpush1.msra.mxu0 0.0
    %193 = vmatprep.subr.mxu0 0.0
    %194 = vmatpush1.msra.mxu0 0.0
    %195 = vmatprep.subr.mxu0 0.0
    %196 = vmatpush1.msra.mxu0 0.0
    %197 = vmatprep.subr.mxu0 0.0
    %198 = vmatpush1.msra.mxu0 0.0
    %199 = vmatprep.mubr.f32.mxu0 0.0
    %200 = vmatmul.mubr.f32.gmra.mrb[0].mxu0 %v112
    %v201 = vpop.f32.mrb[0].mxu0
    %v202 = vadd.f32 %v73, %v201
    %v203 = vpop.f32.mrb[0].mxu0
    %204 = vmatprep.mubr.f32.mxu0 0.0
    %205 = vmatmul.mubr.f32.gmra.mrb[0].mxu0 %v115
    %v206 = vpop.f32.mrb[0].mxu0
    %v207 = vadd.f32 %v78, %v206
    %v208 = vpop.f32.mrb[0].mxu0
    %209 = vmatprep.mubr.f32.mxu0 0.0
    %210 = vmatmul.mubr.f32.gmra.mrb[0].mxu0 %v118
    %v211 = vpop.f32.mrb[0].mxu0
    %v212 = vadd.f32 %v83, %v211
    %v213 = vpop.f32.mrb[0].mxu0
    %214 = vmatprep.mubr.f32.mxu0 0.0
    %215 = vmatmul.mubr.f32.gmra.mrb[0].mxu0 %v121
    %v216 = vpop.f32.mrb[0].mxu0
    %v217 = vadd.f32 %v88, %v216
    %v218 = vpop.f32.mrb[0].mxu0
    %219 = vmatprep.mubr.f32.mxu0 0.0
    %220 = vmatmul.mubr.f32.gmra.mrb[0].mxu0 %v124
    %v221 = vpop.f32.mrb[0].mxu0
    %v222 = vadd.f32 %v93, %v221
    %v223 = vpop.f32.mrb[0].mxu0
    %224 = vmatprep.mubr.f32.mxu0 0.0
    %225 = vmatmul.mubr.f32.gmra.mrb[0].mxu0 %v127
    %v226 = vpop.f32.mrb[0].mxu0
    %v227 = vadd.f32 %v98, %v226
    %v228 = vpop.f32.mrb[0].mxu0
    %229 = vmatprep.mubr.f32.mxu0 0.0
    %230 = vmatmul.mubr.f32.gmra.mrb[0].mxu0 %v130
    %v231 = vpop.f32.mrb[0].mxu0
    %v232 = vadd.f32 %v103, %v231
    %v233 = vpop.f32.mrb[0].mxu0
    %234 = vmatprep.mubr.f32.mxu0 0.0
    %235 = vmatmul.mubr.f32.gmra.mrb[0].mxu0 %v133
    %v236 = vpop.f32.mrb[0].mxu0
    %v237 = vadd.f32 %v108, %v236
    %v238 = vpop.f32.mrb[0].mxu0
    %239 = vdwg.mxu0
    %v240 = vlaneseq
    %v241 = vshrl.u32 %v240, 7
    %v242 = vsub.s32 0, %v241
    %v243 = vrot.slane %v46, %v242
    %v244 = vmul.f32 %v46, %v243
    %v245 = vmul.f32 %v47, %v243
    %v246 = vmul.f32 %v48, %v243
    %v247 = vmul.f32 %v49, %v243
    %v248 = vmul.f32 %v50, %v243
    %v249 = vmul.f32 %v51, %v243
    %v250 = vmul.f32 %v52, %v243
    %v251 = vmul.f32 %v53, %v243
    %v252 = vpack.c.bf16 %v245, %v244
    %v253 = vpack.c.bf16 %v247, %v246
    %v254 = vpack.c.bf16 %v249, %v248
    %v255 = vpack.c.bf16 %v251, %v250
    %v256 = vlaneseq
    %v257 = vshrl.u32 %v256, 7
    %v258 = vsub.s32 1, %v257
    %v259 = vrot.slane %v46, %v258
    %v260 = vmul.f32 %v46, %v259
    %v261 = vmul.f32 %v47, %v259
    %v262 = vmul.f32 %v48, %v259
    %v263 = vmul.f32 %v49, %v259
    %v264 = vmul.f32 %v50, %v259
    %v265 = vmul.f32 %v51, %v259
    %v266 = vmul.f32 %v52, %v259
    %v267 = vmul.f32 %v53, %v259
    %v268 = vpack.c.bf16 %v261, %v260
    %v269 = vpack.c.bf16 %v263, %v262
    %v270 = vpack.c.bf16 %v265, %v264
    %v271 = vpack.c.bf16 %v267, %v266
    %v272 = vlaneseq
    %v273 = vshrl.u32 %v272, 7
    %v274 = vsub.s32 2, %v273
    %v275 = vrot.slane %v46, %v274
    %v276 = vmul.f32 %v46, %v275
    %v277 = vmul.f32 %v47, %v275
    %v278 = vmul.f32 %v48, %v275
    %v279 = vmul.f32 %v49, %v275
    %v280 = vmul.f32 %v50, %v275
    %v281 = vmul.f32 %v51, %v275
    %v282 = vmul.f32 %v52, %v275
    %v283 = vmul.f32 %v53, %v275
    %v284 = vpack.c.bf16 %v277, %v276
    %v285 = vpack.c.bf16 %v279, %v278
    %v286 = vpack.c.bf16 %v281, %v280
    %v287 = vpack.c.bf16 %v283, %v282
    %v288 = vlaneseq
    %v289 = vshrl.u32 %v288, 7
    %v290 = vsub.s32 3, %v289
    %v291 = vrot.slane %v46, %v290
    %v292 = vmul.f32 %v46, %v291
    %v293 = vmul.f32 %v47, %v291
    %v294 = vmul.f32 %v48, %v291
    %v295 = vmul.f32 %v49, %v291
    %v296 = vmul.f32 %v50, %v291
    %v297 = vmul.f32 %v51, %v291
    %v298 = vmul.f32 %v52, %v291
    %v299 = vmul.f32 %v53, %v291
    %v300 = vpack.c.bf16 %v293, %v292
    %v301 = vpack.c.bf16 %v295, %v294
    %v302 = vpack.c.bf16 %v297, %v296
    %v303 = vpack.c.bf16 %v299, %v298
    %v304 = vld [vmem:[#allocation3] sm:$0xff]
    %v305 = vld [vmem:[#allocation3 + $0x8] sm:$0xff]
    %v306 = vld [vmem:[#allocation3 + $0x10] sm:$0xff]
    %v307 = vld [vmem:[#allocation3 + $0x18] sm:$0xff]
    %v308 = vld [vmem:[#allocation3 + $0x20] sm:$0xff]
    %v309 = vld [vmem:[#allocation3 + $0x28] sm:$0xff]
    %v310 = vld [vmem:[#allocation3 + $0x30] sm:$0xff]
    %v311 = vld [vmem:[#allocation3 + $0x38] sm:$0xff]
    %v320 = vunpack.c.l.b16 %v304
    %v321 = vunpack.c.h.b16 %v304
    %v322 = vunpack.c.l.b16 %v305
    %v323 = vunpack.c.h.b16 %v305
    %v324 = vunpack.c.l.b16 %v306
    %v325 = vunpack.c.h.b16 %v306
    %v326 = vunpack.c.l.b16 %v307
    %v327 = vunpack.c.h.b16 %v307
    %v328 = vunpack.c.l.b16 %v308
    %v329 = vunpack.c.h.b16 %v308
    %v330 = vunpack.c.l.b16 %v309
    %v331 = vunpack.c.h.b16 %v309
    %v332 = vunpack.c.l.b16 %v310
    %v333 = vunpack.c.h.b16 %v310
    %v334 = vunpack.c.l.b16 %v311
    %v335 = vunpack.c.h.b16 %v311
    %v336 = vpack.c.b16 %v322, %v320
    %v337 = vpack.c.b16 %v323, %v321
    %v338 = vpack.c.b16 %v326, %v324
    %v339 = vpack.c.b16 %v327, %v325
    %v340 = vpack.c.b16 %v330, %v328
    %v341 = vpack.c.b16 %v331, %v329
    %v342 = vpack.c.b16 %v334, %v332
    %v343 = vpack.c.b16 %v335, %v333
    %352 = vmatprep.subr.bf16.mxu0 0
    %353 = vmatpush1.bf16.msra.mxu0 %v252
    %354 = vmatprep.subr.bf16.mxu0 0
    %355 = vmatpush1.bf16.msra.mxu0 %v253
    %356 = vmatprep.subr.bf16.mxu0 0
    %357 = vmatpush1.bf16.msra.mxu0 %v254
    %358 = vmatprep.subr.bf16.mxu0 0
    %359 = vmatpush1.bf16.msra.mxu0 %v255
    %360 = vmatprep.subr.bf16.mxu0 0
    %361 = vmatpush1.bf16.msra.mxu0 %v268
    %362 = vmatprep.subr.bf16.mxu0 0
    %363 = vmatpush1.bf16.msra.mxu0 %v269
    %364 = vmatprep.subr.bf16.mxu0 0
    %365 = vmatpush1.bf16.msra.mxu0 %v270
    %366 = vmatprep.subr.bf16.mxu0 0
    %367 = vmatpush1.bf16.msra.mxu0 %v271
    %368 = vmatprep.subr.bf16.mxu0 0
    %369 = vmatpush1.bf16.msra.mxu0 %v284
    %370 = vmatprep.subr.bf16.mxu0 0
    %371 = vmatpush1.bf16.msra.mxu0 %v285
    %372 = vmatprep.subr.bf16.mxu0 0
    %373 = vmatpush1.bf16.msra.mxu0 %v286
    %374 = vmatprep.subr.bf16.mxu0 0
    %375 = vmatpush1.bf16.msra.mxu0 %v287
    %376 = vmatprep.subr.bf16.mxu0 0
    %377 = vmatpush1.bf16.msra.mxu0 %v300
    %378 = vmatprep.subr.bf16.mxu0 0
    %379 = vmatpush1.bf16.msra.mxu0 %v301
    %380 = vmatprep.subr.bf16.mxu0 0
    %381 = vmatpush1.bf16.msra.mxu0 %v302
    %382 = vmatprep.subr.bf16.mxu0 0
    %383 = vmatpush1.bf16.msra.mxu0 %v303
    %384 = vmatprep.mubr.bf16.mxu0 %v337
    %385 = vmatmul.mubr.bf16.gmra.mrb[0].mxu0 %v336
    %v386 = vpop.f32.mrb[0].mxu0
    %v387 = vadd.f32 0.0, %v386
    %v388 = vpop.f32.mrb[0].mxu0
    %v389 = vpop.f32.mrb[0].mxu0
    %v390 = vadd.f32 0.0, %v389
    %v391 = vpop.f32.mrb[0].mxu0
    %392 = vmatprep.mubr.bf16.mxu0 %v339
    %393 = vmatmul.mubr.bf16.gmra.mrb[0].mxu0 %v338
    %v394 = vpop.f32.mrb[0].mxu0
    %v395 = vadd.f32 0.0, %v394
    %v396 = vpop.f32.mrb[0].mxu0
    %v397 = vpop.f32.mrb[0].mxu0
    %v398 = vadd.f32 0.0, %v397
    %v399 = vpop.f32.mrb[0].mxu0
    %400 = vmatprep.mubr.bf16.mxu0 %v341
    %401 = vmatmul.mubr.bf16.gmra.mrb[0].mxu0 %v340
    %v402 = vpop.f32.mrb[0].mxu0
    %v403 = vadd.f32 0.0, %v402
    %v404 = vpop.f32.mrb[0].mxu0
    %v405 = vpop.f32.mrb[0].mxu0
    %v406 = vadd.f32 0.0, %v405
    %v407 = vpop.f32.mrb[0].mxu0
    %408 = vmatprep.mubr.bf16.mxu0 %v343
    %409 = vmatmul.mubr.bf16.gmra.mrb[0].mxu0 %v342
    %v410 = vpop.f32.mrb[0].mxu0
    %v411 = vadd.f32 0.0, %v410
    %v412 = vpop.f32.mrb[0].mxu0
    %v413 = vpop.f32.mrb[0].mxu0
    %v414 = vadd.f32 0.0, %v413
    %v415 = vpop.f32.mrb[0].mxu0
    %416 = vdwg.mxu0
    %v417 = vadd.f32 %v202, %v387
    %v418 = vadd.f32 %v207, %v390
    %v419 = vadd.f32 %v212, %v395
    %v420 = vadd.f32 %v217, %v398
    %v421 = vadd.f32 %v222, %v403
    %v422 = vadd.f32 %v227, %v406
    %v423 = vadd.f32 %v232, %v411
    %v424 = vadd.f32 %v237, %v414
    %v425 = vlaneseq
    %v426 = vshrl.u32 %v425, 7
    %v427 = vsub.s32 4, %v426
    %v428 = vrot.slane %v46, %v427
    %v429 = vmul.f32 %v46, %v428
    %v430 = vmul.f32 %v47, %v428
    %v431 = vmul.f32 %v48, %v428
    %v432 = vmul.f32 %v49, %v428
    %v433 = vmul.f32 %v50, %v428
    %v434 = vmul.f32 %v51, %v428
    %v435 = vmul.f32 %v52, %v428
    %v436 = vmul.f32 %v53, %v428
    %v437 = vpack.c.bf16 %v430, %v429
    %v438 = vpack.c.bf16 %v432, %v431
    %v439 = vpack.c.bf16 %v434, %v433
    %v440 = vpack.c.bf16 %v436, %v435
    %v441 = vlaneseq
    %v442 = vshrl.u32 %v441, 7
    %v443 = vsub.s32 5, %v442
    %v444 = vrot.slane %v46, %v443
    %v445 = vmul.f32 %v46, %v444
    %v446 = vmul.f32 %v47, %v444
    %v447 = vmul.f32 %v48, %v444
    %v448 = vmul.f32 %v49, %v444
    %v449 = vmul.f32 %v50, %v444
    %v450 = vmul.f32 %v51, %v444
    %v451 = vmul.f32 %v52, %v444
    %v452 = vmul.f32 %v53, %v444
    %v453 = vpack.c.bf16 %v446, %v445
    %v454 = vpack.c.bf16 %v448, %v447
    %v455 = vpack.c.bf16 %v450, %v449
    %v456 = vpack.c.bf16 %v452, %v451
    %v457 = vlaneseq
    %v458 = vshrl.u32 %v457, 7
    %v459 = vsub.s32 6, %v458
    %v460 = vrot.slane %v46, %v459
    %v461 = vmul.f32 %v46, %v460
    %v462 = vmul.f32 %v47, %v460
    %v463 = vmul.f32 %v48, %v460
    %v464 = vmul.f32 %v49, %v460
    %v465 = vmul.f32 %v50, %v460
    %v466 = vmul.f32 %v51, %v460
    %v467 = vmul.f32 %v52, %v460
    %v468 = vmul.f32 %v53, %v460
    %v469 = vpack.c.bf16 %v462, %v461
    %v470 = vpack.c.bf16 %v464, %v463
    %v471 = vpack.c.bf16 %v466, %v465
    %v472 = vpack.c.bf16 %v468, %v467
    %v473 = vlaneseq
    %v474 = vshrl.u32 %v473, 7
    %v475 = vsub.s32 7, %v474
    %v476 = vrot.slane %v46, %v475
    %v477 = vmul.f32 %v46, %v476
    %v478 = vmul.f32 %v47, %v476
    %v479 = vmul.f32 %v48, %v476
    %v480 = vmul.f32 %v49, %v476
    %v481 = vmul.f32 %v50, %v476
    %v482 = vmul.f32 %v51, %v476
    %v483 = vmul.f32 %v52, %v476
    %v484 = vmul.f32 %v53, %v476
    %v485 = vpack.c.bf16 %v478, %v477
    %v486 = vpack.c.bf16 %v480, %v479
    %v487 = vpack.c.bf16 %v482, %v481
    %v488 = vpack.c.bf16 %v484, %v483
    %s489 = scalar_lea.vmem [#allocation3], 64
    %v490 = vld [vmem:[%s489] sm:$0xff]
    %v491 = vld [vmem:[%s489 + $0x8] sm:$0xff]
    %v492 = vld [vmem:[%s489 + $0x10] sm:$0xff]
    %v493 = vld [vmem:[%s489 + $0x18] sm:$0xff]
    %v494 = vld [vmem:[%s489 + $0x20] sm:$0xff]
    %v495 = vld [vmem:[%s489 + $0x28] sm:$0xff]
    %v496 = vld [vmem:[%s489 + $0x30] sm:$0xff]
    %v497 = vld [vmem:[%s489 + $0x38] sm:$0xff]
    %v506 = vunpack.c.l.b16 %v490
    %v507 = vunpack.c.h.b16 %v490
    %v508 = vunpack.c.l.b16 %v491
    %v509 = vunpack.c.h.b16 %v491
    %v510 = vunpack.c.l.b16 %v492
    %v511 = vunpack.c.h.b16 %v492
    %v512 = vunpack.c.l.b16 %v493
    %v513 = vunpack.c.h.b16 %v493
    %v514 = vunpack.c.l.b16 %v494
    %v515 = vunpack.c.h.b16 %v494
    %v516 = vunpack.c.l.b16 %v495
    %v517 = vunpack.c.h.b16 %v495
    %v518 = vunpack.c.l.b16 %v496
    %v519 = vunpack.c.h.b16 %v496
    %v520 = vunpack.c.l.b16 %v497
    %v521 = vunpack.c.h.b16 %v497
    %v522 = vpack.c.b16 %v508, %v506
    %v523 = vpack.c.b16 %v509, %v507
    %v524 = vpack.c.b16 %v512, %v510
    %v525 = vpack.c.b16 %v513, %v511
    %v526 = vpack.c.b16 %v516, %v514
    %v527 = vpack.c.b16 %v517, %v515
    %v528 = vpack.c.b16 %v520, %v518
    %v529 = vpack.c.b16 %v521, %v519
    %538 = vmatprep.subr.bf16.mxu0 0
    %539 = vmatpush1.bf16.msra.mxu0 %v437
    %540 = vmatprep.subr.bf16.mxu0 0
    %541 = vmatpush1.bf16.msra.mxu0 %v438
    %542 = vmatprep.subr.bf16.mxu0 0
    %543 = vmatpush1.bf16.msra.mxu0 %v439
    %544 = vmatprep.subr.bf16.mxu0 0
    %545 = vmatpush1.bf16.msra.mxu0 %v440
    %546 = vmatprep.subr.bf16.mxu0 0
    %547 = vmatpush1.bf16.msra.mxu0 %v453
    %548 = vmatprep.subr.bf16.mxu0 0
    %549 = vmatpush1.bf16.msra.mxu0 %v454
    %550 = vmatprep.subr.bf16.mxu0 0
    %551 = vmatpush1.bf16.msra.mxu0 %v455
    %552 = vmatprep.subr.bf16.mxu0 0
    %553 = vmatpush1.bf16.msra.mxu0 %v456
    %554 = vmatprep.subr.bf16.mxu0 0
    %555 = vmatpush1.bf16.msra.mxu0 %v469
    %556 = vmatprep.subr.bf16.mxu0 0
    %557 = vmatpush1.bf16.msra.mxu0 %v470
    %558 = vmatprep.subr.bf16.mxu0 0
    %559 = vmatpush1.bf16.msra.mxu0 %v471
    %560 = vmatprep.subr.bf16.mxu0 0
    %561 = vmatpush1.bf16.msra.mxu0 %v472
    %562 = vmatprep.subr.bf16.mxu0 0
    %563 = vmatpush1.bf16.msra.mxu0 %v485
    %564 = vmatprep.subr.bf16.mxu0 0
    %565 = vmatpush1.bf16.msra.mxu0 %v486
    %566 = vmatprep.subr.bf16.mxu0 0
    %567 = vmatpush1.bf16.msra.mxu0 %v487
    %568 = vmatprep.subr.bf16.mxu0 0
    %569 = vmatpush1.bf16.msra.mxu0 %v488
    %570 = vmatprep.mubr.bf16.mxu0 %v523
    %571 = vmatmul.mubr.bf16.gmra.mrb[0].mxu0 %v522
    %v572 = vpop.f32.mrb[0].mxu0
    %v573 = vadd.f32 0.0, %v572
    %v574 = vpop.f32.mrb[0].mxu0
    %v575 = vpop.f32.mrb[0].mxu0
    %v576 = vadd.f32 0.0, %v575
    %v577 = vpop.f32.mrb[0].mxu0
    %578 = vmatprep.mubr.bf16.mxu0 %v525
    %579 = vmatmul.mubr.bf16.gmra.mrb[0].mxu0 %v524
    %v580 = vpop.f32.mrb[0].mxu0
    %v581 = vadd.f32 0.0, %v580
    %v582 = vpop.f32.mrb[0].mxu0
    %v583 = vpop.f32.mrb[0].mxu0
    %v584 = vadd.f32 0.0, %v583
    %v585 = vpop.f32.mrb[0].mxu0
    %586 = vmatprep.mubr.bf16.mxu0 %v527
    %587 = vmatmul.mubr.bf16.gmra.mrb[0].mxu0 %v526
    %v588 = vpop.f32.mrb[0].mxu0
    %v589 = vadd.f32 0.0, %v588
    %v590 = vpop.f32.mrb[0].mxu0
    %v591 = vpop.f32.mrb[0].mxu0
    %v592 = vadd.f32 0.0, %v591
    %v593 = vpop.f32.mrb[0].mxu0
    %594 = vmatprep.mubr.bf16.mxu0 %v529
    %595 = vmatmul.mubr.bf16.gmra.mrb[0].mxu0 %v528
    %v596 = vpop.f32.mrb[0].mxu0
    %v597 = vadd.f32 0.0, %v596
    %v598 = vpop.f32.mrb[0].mxu0
    %v599 = vpop.f32.mrb[0].mxu0
    %v600 = vadd.f32 0.0, %v599
    %v601 = vpop.f32.mrb[0].mxu0
    %602 = vdwg.mxu0
    %v603 = vadd.f32 %v417, %v573
    %v604 = vadd.f32 %v418, %v576
    %v605 = vadd.f32 %v419, %v581
    %v606 = vadd.f32 %v420, %v584
    %v607 = vadd.f32 %v421, %v589
    %v608 = vadd.f32 %v422, %v592
    %v609 = vadd.f32 %v423, %v597
    %v610 = vadd.f32 %v424, %v600
    %v611 = vlaneseq
    %v612 = vshrl.u32 %v611, 7
    %v613 = vsub.s32 0, %v612
    %v614 = vrot.slane %v47, %v613
    %v615 = vmul.f32 %v46, %v614
    %v616 = vmul.f32 %v47, %v614
    %v617 = vmul.f32 %v48, %v614
    %v618 = vmul.f32 %v49, %v614
    %v619 = vmul.f32 %v50, %v614
    %v620 = vmul.f32 %v51, %v614
    %v621 = vmul.f32 %v52, %v614
    %v622 = vmul.f32 %v53, %v614
    %v623 = vpack.c.bf16 %v616, %v615
    %v624 = vpack.c.bf16 %v618, %v617
    %v625 = vpack.c.bf16 %v620, %v619
    %v626 = vpack.c.bf16 %v622, %v621
    %v627 = vlaneseq
    %v628 = vshrl.u32 %v627, 7
    %v629 = vsub.s32 1, %v628
    %v630 = vrot.slane %v47, %v629
    %v631 = vmul.f32 %v46, %v630
    %v632 = vmul.f32 %v47, %v630
    %v633 = vmul.f32 %v48, %v630
    %v634 = vmul.f32 %v49, %v630
    %v635 = vmul.f32 %v50, %v630
    %v636 = vmul.f32 %v51, %v630
    %v637 = vmul.f32 %v52, %v630
    %v638 = vmul.f32 %v53, %v630
    %v639 = vpack.c.bf16 %v632, %v631
    %v640 = vpack.c.bf16 %v634, %v633
    %v641 = vpack.c.bf16 %v636, %v635
    %v642 = vpack.c.bf16 %v638, %v637
    %v643 = vlaneseq
    %v644 = vshrl.u32 %v643, 7
    %v645 = vsub.s32 2, %v644
    %v646 = vrot.slane %v47, %v645
    %v647 = vmul.f32 %v46, %v646
    %v648 = vmul.f32 %v47, %v646
    %v649 = vmul.f32 %v48, %v646
    %v650 = vmul.f32 %v49, %v646
    %v651 = vmul.f32 %v50, %v646
    %v652 = vmul.f32 %v51, %v646
    %v653 = vmul.f32 %v52, %v646
    %v654 = vmul.f32 %v53, %v646
    %v655 = vpack.c.bf16 %v648, %v647
    %v656 = vpack.c.bf16 %v650, %v649
    %v657 = vpack.c.bf16 %v652, %v651
    %v658 = vpack.c.bf16 %v654, %v653
    %v659 = vlaneseq
    %v660 = vshrl.u32 %v659, 7
    %v661 = vsub.s32 3, %v660
    %v662 = vrot.slane %v47, %v661
    %v663 = vmul.f32 %v46, %v662
    %v664 = vmul.f32 %v47, %v662
    %v665 = vmul.f32 %v48, %v662
    %v666 = vmul.f32 %v49, %v662
    %v667 = vmul.f32 %v50, %v662
    %v668 = vmul.f32 %v51, %v662
    %v669 = vmul.f32 %v52, %v662
    %v670 = vmul.f32 %v53, %v662
    %v671 = vpack.c.bf16 %v664, %v663
    %v672 = vpack.c.bf16 %v666, %v665
    %v673 = vpack.c.bf16 %v668, %v667
    %v674 = vpack.c.bf16 %v670, %v669
    %s675 = scalar_lea.vmem [#allocation3], 128
    %v676 = vld [vmem:[%s675] sm:$0xff]
    %v677 = vld [vmem:[%s675 + $0x8] sm:$0xff]
    %v678 = vld [vmem:[%s675 + $0x10] sm:$0xff]
    %v679 = vld [vmem:[%s675 + $0x18] sm:$0xff]
    %v680 = vld [vmem:[%s675 + $0x20] sm:$0xff]
    %v681 = vld [vmem:[%s675 + $0x28] sm:$0xff]
    %v682 = vld [vmem:[%s675 + $0x30] sm:$0xff]
    %v683 = vld [vmem:[%s675 + $0x38] sm:$0xff]
    %v692 = vunpack.c.l.b16 %v676
    %v693 = vunpack.c.h.b16 %v676
    %v694 = vunpack.c.l.b16 %v677
    %v695 = vunpack.c.h.b16 %v677
    %v696 = vunpack.c.l.b16 %v678
    %v697 = vunpack.c.h.b16 %v678
    %v698 = vunpack.c.l.b16 %v679
    %v699 = vunpack.c.h.b16 %v679
    %v700 = vunpack.c.l.b16 %v680
    %v701 = vunpack.c.h.b16 %v680
    %v702 = vunpack.c.l.b16 %v681
    %v703 = vunpack.c.h.b16 %v681
    %v704 = vunpack.c.l.b16 %v682
    %v705 = vunpack.c.h.b16 %v682
    %v706 = vunpack.c.l.b16 %v683
    %v707 = vunpack.c.h.b16 %v683
    %v708 = vpack.c.b16 %v694, %v692
    %v709 = vpack.c.b16 %v695, %v693
    %v710 = vpack.c.b16 %v698, %v696
    %v711 = vpack.c.b16 %v699, %v697
    %v712 = vpack.c.b16 %v702, %v700
    %v713 = vpack.c.b16 %v703, %v701
    %v714 = vpack.c.b16 %v706, %v704
    %v715 = vpack.c.b16 %v707, %v705
    %724 = vmatprep.subr.bf16.mxu0 0
    %725 = vmatpush1.bf16.msra.mxu0 %v623
    %726 = vmatprep.subr.bf16.mxu0 0
    %727 = vmatpush1.bf16.msra.mxu0 %v624
    %728 = vmatprep.subr.bf16.mxu0 0
    %729 = vmatpush1.bf16.msra.mxu0 %v625
    %730 = vmatprep.subr.bf16.mxu0 0
    %731 = vmatpush1.bf16.msra.mxu0 %v626
    %732 = vmatprep.subr.bf16.mxu0 0
    %733 = vmatpush1.bf16.msra.mxu0 %v639
    %734 = vmatprep.subr.bf16.mxu0 0
    %735 = vmatpush1.bf16.msra.mxu0 %v640
    %736 = vmatprep.subr.bf16.mxu0 0
    %737 = vmatpush1.bf16.msra.mxu0 %v641
    %738 = vmatprep.subr.bf16.mxu0 0
    %739 = vmatpush1.bf16.msra.mxu0 %v642
    %740 = vmatprep.subr.bf16.mxu0 0
    %741 = vmatpush1.bf16.msra.mxu0 %v655
    %742 = vmatprep.subr.bf16.mxu0 0
    %743 = vmatpush1.bf16.msra.mxu0 %v656
    %744 = vmatprep.subr.bf16.mxu0 0
    %745 = vmatpush1.bf16.msra.mxu0 %v657
    %746 = vmatprep.subr.bf16.mxu0 0
    %747 = vmatpush1.bf16.msra.mxu0 %v658
    %748 = vmatprep.subr.bf16.mxu0 0
    %749 = vmatpush1.bf16.msra.mxu0 %v671
    %750 = vmatprep.subr.bf16.mxu0 0
    %751 = vmatpush1.bf16.msra.mxu0 %v672
    %752 = vmatprep.subr.bf16.mxu0 0
    %753 = vmatpush1.bf16.msra.mxu0 %v673
    %754 = vmatprep.subr.bf16.mxu0 0
    %755 = vmatpush1.bf16.msra.mxu0 %v674
    %756 = vmatprep.mubr.bf16.mxu0 %v709
    %757 = vmatmul.mubr.bf16.gmra.mrb[0].mxu0 %v708
    %v758 = vpop.f32.mrb[0].mxu0
    %v759 = vadd.f32 0.0, %v758
    %v760 = vpop.f32.mrb[0].mxu0
    %v761 = vpop.f32.mrb[0].mxu0
    %v762 = vadd.f32 0.0, %v761
    %v763 = vpop.f32.mrb[0].mxu0
    %764 = vmatprep.mubr.bf16.mxu0 %v711
    %765 = vmatmul.mubr.bf16.gmra.mrb[0].mxu0 %v710
    %v766 = vpop.f32.mrb[0].mxu0
    %v767 = vadd.f32 0.0, %v766
    %v768 = vpop.f32.mrb[0].mxu0
    %v769 = vpop.f32.mrb[0].mxu0
    %v770 = vadd.f32 0.0, %v769
    %v771 = vpop.f32.mrb[0].mxu0
    %772 = vmatprep.mubr.bf16.mxu0 %v713
    %773 = vmatmul.mubr.bf16.gmra.mrb[0].mxu0 %v712
    %v774 = vpop.f32.mrb[0].mxu0
    %v775 = vadd.f32 0.0, %v774
    %v776 = vpop.f32.mrb[0].mxu0
    %v777 = vpop.f32.mrb[0].mxu0
    %v778 = vadd.f32 0.0, %v777
    %v779 = vpop.f32.mrb[0].mxu0
    %780 = vmatprep.mubr.bf16.mxu0 %v715
    %781 = vmatmul.mubr.bf16.gmra.mrb[0].mxu0 %v714
    %v782 = vpop.f32.mrb[0].mxu0
    %v783 = vadd.f32 0.0, %v782
    %v784 = vpop.f32.mrb[0].mxu0
    %v785 = vpop.f32.mrb[0].mxu0
    %v786 = vadd.f32 0.0, %v785
    %v787 = vpop.f32.mrb[0].mxu0
    %788 = vdwg.mxu0
    %v789 = vadd.f32 %v603, %v759
    %v790 = vadd.f32 %v604, %v762
    %v791 = vadd.f32 %v605, %v767
    %v792 = vadd.f32 %v606, %v770
    %v793 = vadd.f32 %v607, %v775
    %v794 = vadd.f32 %v608, %v778
    %v795 = vadd.f32 %v609, %v783
    %v796 = vadd.f32 %v610, %v786
    %v797 = vlaneseq
    %v798 = vshrl.u32 %v797, 7
    %v799 = vsub.s32 4, %v798
    %v800 = vrot.slane %v47, %v799
    %v801 = vmul.f32 %v46, %v800
    %v802 = vmul.f32 %v47, %v800
    %v803 = vmul.f32 %v48, %v800
    %v804 = vmul.f32 %v49, %v800
    %v805 = vmul.f32 %v50, %v800
    %v806 = vmul.f32 %v51, %v800
    %v807 = vmul.f32 %v52, %v800
    %v808 = vmul.f32 %v53, %v800
    %v809 = vpack.c.bf16 %v802, %v801
    %v810 = vpack.c.bf16 %v804, %v803
    %v811 = vpack.c.bf16 %v806, %v805
    %v812 = vpack.c.bf16 %v808, %v807
    %v813 = vlaneseq
    %v814 = vshrl.u32 %v813, 7
    %v815 = vsub.s32 5, %v814
    %v816 = vrot.slane %v47, %v815
    %v817 = vmul.f32 %v46, %v816
    %v818 = vmul.f32 %v47, %v816
    %v819 = vmul.f32 %v48, %v816
    %v820 = vmul.f32 %v49, %v816
    %v821 = vmul.f32 %v50, %v816
    %v822 = vmul.f32 %v51, %v816
    %v823 = vmul.f32 %v52, %v816
    %v824 = vmul.f32 %v53, %v816
    %v825 = vpack.c.bf16 %v818, %v817
    %v826 = vpack.c.bf16 %v820, %v819
    %v827 = vpack.c.bf16 %v822, %v821
    %v828 = vpack.c.bf16 %v824, %v823
    %v829 = vlaneseq
    %v830 = vshrl.u32 %v829, 7
    %v831 = vsub.s32 6, %v830
    %v832 = vrot.slane %v47, %v831
    %v833 = vmul.f32 %v46, %v832
    %v834 = vmul.f32 %v47, %v832
    %v835 = vmul.f32 %v48, %v832
    %v836 = vmul.f32 %v49, %v832
    %v837 = vmul.f32 %v50, %v832
    %v838 = vmul.f32 %v51, %v832
    %v839 = vmul.f32 %v52, %v832
    %v840 = vmul.f32 %v53, %v832
    %v841 = vpack.c.bf16 %v834, %v833
    %v842 = vpack.c.bf16 %v836, %v835
    %v843 = vpack.c.bf16 %v838, %v837
    %v844 = vpack.c.bf16 %v840, %v839
    %v845 = vlaneseq
    %v846 = vshrl.u32 %v845, 7
    %v847 = vsub.s32 7, %v846
    %v848 = vrot.slane %v47, %v847
    %v849 = vmul.f32 %v46, %v848
    %v850 = vmul.f32 %v47, %v848
    %v851 = vmul.f32 %v48, %v848
    %v852 = vmul.f32 %v49, %v848
    %v853 = vmul.f32 %v50, %v848
    %v854 = vmul.f32 %v51, %v848
    %v855 = vmul.f32 %v52, %v848
    %v856 = vmul.f32 %v53, %v848
    %v857 = vpack.c.bf16 %v850, %v849
    %v858 = vpack.c.bf16 %v852, %v851
    %v859 = vpack.c.bf16 %v854, %v853
    %v860 = vpack.c.bf16 %v856, %v855
    %s861 = scalar_lea.vmem [#allocation3], 192
    %v862 = vld [vmem:[%s861] sm:$0xff]
    %v863 = vld [vmem:[%s861 + $0x8] sm:$0xff]
    %v864 = vld [vmem:[%s861 + $0x10] sm:$0xff]
    %v865 = vld [vmem:[%s861 + $0x18] sm:$0xff]
    %v866 = vld [vmem:[%s861 + $0x20] sm:$0xff]
    %v867 = vld [vmem:[%s861 + $0x28] sm:$0xff]
    %v868 = vld [vmem:[%s861 + $0x30] sm:$0xff]
    %v869 = vld [vmem:[%s861 + $0x38] sm:$0xff]
    %v878 = vunpack.c.l.b16 %v862
    %v879 = vunpack.c.h.b16 %v862
    %v880 = vunpack.c.l.b16 %v863
    %v881 = vunpack.c.h.b16 %v863
    %v882 = vunpack.c.l.b16 %v864
    %v883 = vunpack.c.h.b16 %v864
    %v884 = vunpack.c.l.b16 %v865
    %v885 = vunpack.c.h.b16 %v865
    %v886 = vunpack.c.l.b16 %v866
    %v887 = vunpack.c.h.b16 %v866
    %v888 = vunpack.c.l.b16 %v867
    %v889 = vunpack.c.h.b16 %v867
    %v890 = vunpack.c.l.b16 %v868
    %v891 = vunpack.c.h.b16 %v868
    %v892 = vunpack.c.l.b16 %v869
    %v893 = vunpack.c.h.b16 %v869
    %v894 = vpack.c.b16 %v880, %v878
    %v895 = vpack.c.b16 %v881, %v879
    %v896 = vpack.c.b16 %v884, %v882
    %v897 = vpack.c.b16 %v885, %v883
    %v898 = vpack.c.b16 %v888, %v886
    %v899 = vpack.c.b16 %v889, %v887
    %v900 = vpack.c.b16 %v892, %v890
    %v901 = vpack.c.b16 %v893, %v891
    %910 = vmatprep.subr.bf16.mxu0 0
    %911 = vmatpush1.bf16.msra.mxu0 %v809
    %912 = vmatprep.subr.bf16.mxu0 0
    %913 = vmatpush1.bf16.msra.mxu0 %v810
    %914 = vmatprep.subr.bf16.mxu0 0
    %915 = vmatpush1.bf16.msra.mxu0 %v811
    %916 = vmatprep.subr.bf16.mxu0 0
    %917 = vmatpush1.bf16.msra.mxu0 %v812
    %918 = vmatprep.subr.bf16.mxu0 0
    %919 = vmatpush1.bf16.msra.mxu0 %v825
    %920 = vmatprep.subr.bf16.mxu0 0
    %921 = vmatpush1.bf16.msra.mxu0 %v826
    %922 = vmatprep.subr.bf16.mxu0 0
    %923 = vmatpush1.bf16.msra.mxu0 %v827
    %924 = vmatprep.subr.bf16.mxu0 0
    %925 = vmatpush1.bf16.msra.mxu0 %v828
    %926 = vmatprep.subr.bf16.mxu0 0
    %927 = vmatpush1.bf16.msra.mxu0 %v841
    %928 = vmatprep.subr.bf16.mxu0 0
    %929 = vmatpush1.bf16.msra.mxu0 %v842
    %930 = vmatprep.subr.bf16.mxu0 0
    %931 = vmatpush1.bf16.msra.mxu0 %v843
    %932 = vmatprep.subr.bf16.mxu0 0
    %933 = vmatpush1.bf16.msra.mxu0 %v844
    %934 = vmatprep.subr.bf16.mxu0 0
    %935 = vmatpush1.bf16.msra.mxu0 %v857
    %936 = vmatprep.subr.bf16.mxu0 0
    %937 = vmatpush1.bf16.msra.mxu0 %v858
    %938 = vmatprep.subr.bf16.mxu0 0
    %939 = vmatpush1.bf16.msra.mxu0 %v859
    %940 = vmatprep.subr.bf16.mxu0 0
    %941 = vmatpush1.bf16.msra.mxu0 %v860
    %942 = vmatprep.mubr.bf16.mxu0 %v895
    %943 = vmatmul.mubr.bf16.gmra.mrb[0].mxu0 %v894
    %v944 = vpop.f32.mrb[0].mxu0
    %v945 = vadd.f32 0.0, %v944
    %v946 = vpop.f32.mrb[0].mxu0
    %v947 = vpop.f32.mrb[0].mxu0
    %v948 = vadd.f32 0.0, %v947
    %v949 = vpop.f32.mrb[0].mxu0
    %950 = vmatprep.mubr.bf16.mxu0 %v897
    %951 = vmatmul.mubr.bf16.gmra.mrb[0].mxu0 %v896
    %v952 = vpop.f32.mrb[0].mxu0
    %v953 = vadd.f32 0.0, %v952
    %v954 = vpop.f32.mrb[0].mxu0
    %v955 = vpop.f32.mrb[0].mxu0
    %v956 = vadd.f32 0.0, %v955
    %v957 = vpop.f32.mrb[0].mxu0
    %958 = vmatprep.mubr.bf16.mxu0 %v899
    %959 = vmatmul.mubr.bf16.gmra.mrb[0].mxu0 %v898
    %v960 = vpop.f32.mrb[0].mxu0
    %v961 = vadd.f32 0.0, %v960
    %v962 = vpop.f32.mrb[0].mxu0
    %v963 = vpop.f32.mrb[0].mxu0
    %v964 = vadd.f32 0.0, %v963
    %v965 = vpop.f32.mrb[0].mxu0
    %966 = vmatprep.mubr.bf16.mxu0 %v901
    %967 = vmatmul.mubr.bf16.gmra.mrb[0].mxu0 %v900
    %v968 = vpop.f32.mrb[0].mxu0
    %v969 = vadd.f32 0.0, %v968
    %v970 = vpop.f32.mrb[0].mxu0
    %v971 = vpop.f32.mrb[0].mxu0
    %v972 = vadd.f32 0.0, %v971
    %v973 = vpop.f32.mrb[0].mxu0
    %974 = vdwg.mxu0
    %v975 = vadd.f32 %v789, %v945
    %v976 = vadd.f32 %v790, %v948
    %v977 = vadd.f32 %v791, %v953
    %v978 = vadd.f32 %v792, %v956
    %v979 = vadd.f32 %v793, %v961
    %v980 = vadd.f32 %v794, %v964
    %v981 = vadd.f32 %v795, %v969
    %v982 = vadd.f32 %v796, %v972
    %v983 = vlaneseq
    %v984 = vshrl.u32 %v983, 7
    %v985 = vsub.s32 0, %v984
    %v986 = vrot.slane %v48, %v985
    %v987 = vmul.f32 %v46, %v986
    %v988 = vmul.f32 %v47, %v986
    %v989 = vmul.f32 %v48, %v986
    %v990 = vmul.f32 %v49, %v986
    %v991 = vmul.f32 %v50, %v986
    %v992 = vmul.f32 %v51, %v986
    %v993 = vmul.f32 %v52, %v986
    %v994 = vmul.f32 %v53, %v986
    %v995 = vpack.c.bf16 %v988, %v987
    %v996 = vpack.c.bf16 %v990, %v989
    %v997 = vpack.c.bf16 %v992, %v991
    %v998 = vpack.c.bf16 %v994, %v993
    %v999 = vlaneseq
    %v1000 = vshrl.u32 %v999, 7
    %v1001 = vsub.s32 1, %v1000
    %v1002 = vrot.slane %v48, %v1001
    %v1003 = vmul.f32 %v46, %v1002
    %v1004 = vmul.f32 %v47, %v1002
    %v1005 = vmul.f32 %v48, %v1002
    %v1006 = vmul.f32 %v49, %v1002
    %v1007 = vmul.f32 %v50, %v1002
    %v1008 = vmul.f32 %v51, %v1002
    %v1009 = vmul.f32 %v52, %v1002
    %v1010 = vmul.f32 %v53, %v1002
    %v1011 = vpack.c.bf16 %v1004, %v1003
    %v1012 = vpack.c.bf16 %v1006, %v1005
    %v1013 = vpack.c.bf16 %v1008, %v1007
    %v1014 = vpack.c.bf16 %v1010, %v1009
    %v1015 = vlaneseq
    %v1016 = vshrl.u32 %v1015, 7
    %v1017 = vsub.s32 2, %v1016
    %v1018 = vrot.slane %v48, %v1017
    %v1019 = vmul.f32 %v46, %v1018
    %v1020 = vmul.f32 %v47, %v1018
    %v1021 = vmul.f32 %v48, %v1018
    %v1022 = vmul.f32 %v49, %v1018
    %v1023 = vmul.f32 %v50, %v1018
    %v1024 = vmul.f32 %v51, %v1018
    %v1025 = vmul.f32 %v52, %v1018
    %v1026 = vmul.f32 %v53, %v1018
    %v1027 = vpack.c.bf16 %v1020, %v1019
    %v1028 = vpack.c.bf16 %v1022, %v1021
    %v1029 = vpack.c.bf16 %v1024, %v1023
    %v1030 = vpack.c.bf16 %v1026, %v1025
    %v1031 = vlaneseq
    %v1032 = vshrl.u32 %v1031, 7
    %v1033 = vsub.s32 3, %v1032
    %v1034 = vrot.slane %v48, %v1033
    %v1035 = vmul.f32 %v46, %v1034
    %v1036 = vmul.f32 %v47, %v1034
    %v1037 = vmul.f32 %v48, %v1034
    %v1038 = vmul.f32 %v49, %v1034
    %v1039 = vmul.f32 %v50, %v1034
    %v1040 = vmul.f32 %v51, %v1034
    %v1041 = vmul.f32 %v52, %v1034
    %v1042 = vmul.f32 %v53, %v1034
    %v1043 = vpack.c.bf16 %v1036, %v1035
    %v1044 = vpack.c.bf16 %v1038, %v1037
    %v1045 = vpack.c.bf16 %v1040, %v1039
    %v1046 = vpack.c.bf16 %v1042, %v1041
    %s1047 = scalar_lea.vmem [#allocation3], 256
    %v1048 = vld [vmem:[%s1047] sm:$0xff]
    %v1049 = vld [vmem:[%s1047 + $0x8] sm:$0xff]
    %v1050 = vld [vmem:[%s1047 + $0x10] sm:$0xff]
    %v1051 = vld [vmem:[%s1047 + $0x18] sm:$0xff]
    %v1052 = vld [vmem:[%s1047 + $0x20] sm:$0xff]
    %v1053 = vld [vmem:[%s1047 + $0x28] sm:$0xff]
    %v1054 = vld [vmem:[%s1047 + $0x30] sm:$0xff]
    %v1055 = vld [vmem:[%s1047 + $0x38] sm:$0xff]
    %v1064 = vunpack.c.l.b16 %v1048
    %v1065 = vunpack.c.h.b16 %v1048
    %v1066 = vunpack.c.l.b16 %v1049
    %v1067 = vunpack.c.h.b16 %v1049
    %v1068 = vunpack.c.l.b16 %v1050
    %v1069 = vunpack.c.h.b16 %v1050
    %v1070 = vunpack.c.l.b16 %v1051
    %v1071 = vunpack.c.h.b16 %v1051
    %v1072 = vunpack.c.l.b16 %v1052
    %v1073 = vunpack.c.h.b16 %v1052
    %v1074 = vunpack.c.l.b16 %v1053
    %v1075 = vunpack.c.h.b16 %v1053
    %v1076 = vunpack.c.l.b16 %v1054
    %v1077 = vunpack.c.h.b16 %v1054
    %v1078 = vunpack.c.l.b16 %v1055
    %v1079 = vunpack.c.h.b16 %v1055
    %v1080 = vpack.c.b16 %v1066, %v1064
    %v1081 = vpack.c.b16 %v1067, %v1065
    %v1082 = vpack.c.b16 %v1070, %v1068
    %v1083 = vpack.c.b16 %v1071, %v1069
    %v1084 = vpack.c.b16 %v1074, %v1072
    %v1085 = vpack.c.b16 %v1075, %v1073
    %v1086 = vpack.c.b16 %v1078, %v1076
    %v1087 = vpack.c.b16 %v1079, %v1077
    %1096 = vmatprep.subr.bf16.mxu0 0
    %1097 = vmatpush1.bf16.msra.mxu0 %v995
    %1098 = vmatprep.subr.bf16.mxu0 0
    %1099 = vmatpush1.bf16.msra.mxu0 %v996
    %1100 = vmatprep.subr.bf16.mxu0 0
    %1101 = vmatpush1.bf16.msra.mxu0 %v997
    %1102 = vmatprep.subr.bf16.mxu0 0
    %1103 = vmatpush1.bf16.msra.mxu0 %v998
    %1104 = vmatprep.subr.bf16.mxu0 0
    %1105 = vmatpush1.bf16.msra.mxu0 %v1011
    %1106 = vmatprep.subr.bf16.mxu0 0
    %1107 = vmatpush1.bf16.msra.mxu0 %v1012
    %1108 = vmatprep.subr.bf16.mxu0 0
    %1109 = vmatpush1.bf16.msra.mxu0 %v1013
    %1110 = vmatprep.subr.bf16.mxu0 0
    %1111 = vmatpush1.bf16.msra.mxu0 %v1014
    %1112 = vmatprep.subr.bf16.mxu0 0
    %1113 = vmatpush1.bf16.msra.mxu0 %v1027
    %1114 = vmatprep.subr.bf16.mxu0 0
    %1115 = vmatpush1.bf16.msra.mxu0 %v1028
    %1116 = vmatprep.subr.bf16.mxu0 0
    %1117 = vmatpush1.bf16.msra.mxu0 %v1029
    %1118 = vmatprep.subr.bf16.mxu0 0
    %1119 = vmatpush1.bf16.msra.mxu0 %v1030
    %1120 = vmatprep.subr.bf16.mxu0 0
    %1121 = vmatpush1.bf16.msra.mxu0 %v1043
    %1122 = vmatprep.subr.bf16.mxu0 0
    %1123 = vmatpush1.bf16.msra.mxu0 %v1044
    %1124 = vmatprep.subr.bf16.mxu0 0
    %1125 = vmatpush1.bf16.msra.mxu0 %v1045
    %1126 = vmatprep.subr.bf16.mxu0 0
    %1127 = vmatpush1.bf16.msra.mxu0 %v1046
    %1128 = vmatprep.mubr.bf16.mxu0 %v1081
    %1129 = vmatmul.mubr.bf16.gmra.mrb[0].mxu0 %v1080
    %v1130 = vpop.f32.mrb[0].mxu0
    %v1131 = vadd.f32 0.0, %v1130
    %v1132 = vpop.f32.mrb[0].mxu0
    %v1133 = vpop.f32.mrb[0].mxu0
    %v1134 = vadd.f32 0.0, %v1133
    %v1135 = vpop.f32.mrb[0].mxu0
    %1136 = vmatprep.mubr.bf16.mxu0 %v1083
    %1137 = vmatmul.mubr.bf16.gmra.mrb[0].mxu0 %v1082
    %v1138 = vpop.f32.mrb[0].mxu0
    %v1139 = vadd.f32 0.0, %v1138
    %v1140 = vpop.f32.mrb[0].mxu0
    %v1141 = vpop.f32.mrb[0].mxu0
    %v1142 = vadd.f32 0.0, %v1141
    %v1143 = vpop.f32.mrb[0].mxu0
    %1144 = vmatprep.mubr.bf16.mxu0 %v1085
    %1145 = vmatmul.mubr.bf16.gmra.mrb[0].mxu0 %v1084
    %v1146 = vpop.f32.mrb[0].mxu0
    %v1147 = vadd.f32 0.0, %v1146
    %v1148 = vpop.f32.mrb[0].mxu0
    %v1149 = vpop.f32.mrb[0].mxu0
    %v1150 = vadd.f32 0.0, %v1149
    %v1151 = vpop.f32.mrb[0].mxu0
    %1152 = vmatprep.mubr.bf16.mxu0 %v1087
    %1153 = vmatmul.mubr.bf16.gmra.mrb[0].mxu0 %v1086
    %v1154 = vpop.f32.mrb[0].mxu0
    %v1155 = vadd.f32 0.0, %v1154
    %v1156 = vpop.f32.mrb[0].mxu0
    %v1157 = vpop.f32.mrb[0].mxu0
    %v1158 = vadd.f32 0.0, %v1157
    %v1159 = vpop.f32.mrb[0].mxu0
    %1160 = vdwg.mxu0
    %v1161 = vadd.f32 %v975, %v1131
    %v1162 = vadd.f32 %v976, %v1134
    %v1163 = vadd.f32 %v977, %v1139
    %v1164 = vadd.f32 %v978, %v1142
    %v1165 = vadd.f32 %v979, %v1147
    %v1166 = vadd.f32 %v980, %v1150
    %v1167 = vadd.f32 %v981, %v1155
    %v1168 = vadd.f32 %v982, %v1158
    %v1169 = vlaneseq
    %v1170 = vshrl.u32 %v1169, 7
    %v1171 = vsub.s32 4, %v1170
    %v1172 = vrot.slane %v48, %v1171
    %v1173 = vmul.f32 %v46, %v1172
    %v1174 = vmul.f32 %v47, %v1172
    %v1175 = vmul.f32 %v48, %v1172
    %v1176 = vmul.f32 %v49, %v1172
    %v1177 = vmul.f32 %v50, %v1172
    %v1178 = vmul.f32 %v51, %v1172
    %v1179 = vmul.f32 %v52, %v1172
    %v1180 = vmul.f32 %v53, %v1172
    %v1181 = vpack.c.bf16 %v1174, %v1173
    %v1182 = vpack.c.bf16 %v1176, %v1175
    %v1183 = vpack.c.bf16 %v1178, %v1177
    %v1184 = vpack.c.bf16 %v1180, %v1179
    %v1185 = vlaneseq
    %v1186 = vshrl.u32 %v1185, 7
    %v1187 = vsub.s32 5, %v1186
    %v1188 = vrot.slane %v48, %v1187
    %v1189 = vmul.f32 %v46, %v1188
    %v1190 = vmul.f32 %v47, %v1188
    %v1191 = vmul.f32 %v48, %v1188
    %v1192 = vmul.f32 %v49, %v1188
    %v1193 = vmul.f32 %v50, %v1188
    %v1194 = vmul.f32 %v51, %v1188
    %v1195 = vmul.f32 %v52, %v1188
    %v1196 = vmul.f32 %v53, %v1188
    %v1197 = vpack.c.bf16 %v1190, %v1189
    %v1198 = vpack.c.bf16 %v1192, %v1191
    %v1199 = vpack.c.bf16 %v1194, %v1193
    %v1200 = vpack.c.bf16 %v1196, %v1195
    %v1201 = vlaneseq
    %v1202 = vshrl.u32 %v1201, 7
    %v1203 = vsub.s32 6, %v1202
    %v1204 = vrot.slane %v48, %v1203
    %v1205 = vmul.f32 %v46, %v1204
    %v1206 = vmul.f32 %v47, %v1204
    %v1207 = vmul.f32 %v48, %v1204
    %v1208 = vmul.f32 %v49, %v1204
    %v1209 = vmul.f32 %v50, %v1204
    %v1210 = vmul.f32 %v51, %v1204
    %v1211 = vmul.f32 %v52, %v1204
    %v1212 = vmul.f32 %v53, %v1204
    %v1213 = vpack.c.bf16 %v1206, %v1205
    %v1214 = vpack.c.bf16 %v1208, %v1207
    %v1215 = vpack.c.bf16 %v1210, %v1209
    %v1216 = vpack.c.bf16 %v1212, %v1211
    %v1217 = vlaneseq
    %v1218 = vshrl.u32 %v1217, 7
    %v1219 = vsub.s32 7, %v1218
    %v1220 = vrot.slane %v48, %v1219
    %v1221 = vmul.f32 %v46, %v1220
    %v1222 = vmul.f32 %v47, %v1220
    %v1223 = vmul.f32 %v48, %v1220
    %v1224 = vmul.f32 %v49, %v1220
    %v1225 = vmul.f32 %v50, %v1220
    %v1226 = vmul.f32 %v51, %v1220
    %v1227 = vmul.f32 %v52, %v1220
    %v1228 = vmul.f32 %v53, %v1220
    %v1229 = vpack.c.bf16 %v1222, %v1221
    %v1230 = vpack.c.bf16 %v1224, %v1223
    %v1231 = vpack.c.bf16 %v1226, %v1225
    %v1232 = vpack.c.bf16 %v1228, %v1227
    %s1233 = scalar_lea.vmem [#allocation3], 320
    %v1234 = vld [vmem:[%s1233] sm:$0xff]
    %v1235 = vld [vmem:[%s1233 + $0x8] sm:$0xff]
    %v1236 = vld [vmem:[%s1233 + $0x10] sm:$0xff]
    %v1237 = vld [vmem:[%s1233 + $0x18] sm:$0xff]
    %v1238 = vld [vmem:[%s1233 + $0x20] sm:$0xff]
    %v1239 = vld [vmem:[%s1233 + $0x28] sm:$0xff]
    %v1240 = vld [vmem:[%s1233 + $0x30] sm:$0xff]
    %v1241 = vld [vmem:[%s1233 + $0x38] sm:$0xff]
    %v1250 = vunpack.c.l.b16 %v1234
    %v1251 = vunpack.c.h.b16 %v1234
    %v1252 = vunpack.c.l.b16 %v1235
    %v1253 = vunpack.c.h.b16 %v1235
    %v1254 = vunpack.c.l.b16 %v1236
    %v1255 = vunpack.c.h.b16 %v1236
    %v1256 = vunpack.c.l.b16 %v1237
    %v1257 = vunpack.c.h.b16 %v1237
    %v1258 = vunpack.c.l.b16 %v1238
    %v1259 = vunpack.c.h.b16 %v1238
    %v1260 = vunpack.c.l.b16 %v1239
    %v1261 = vunpack.c.h.b16 %v1239
    %v1262 = vunpack.c.l.b16 %v1240
    %v1263 = vunpack.c.h.b16 %v1240
    %v1264 = vunpack.c.l.b16 %v1241
    %v1265 = vunpack.c.h.b16 %v1241
    %v1266 = vpack.c.b16 %v1252, %v1250
    %v1267 = vpack.c.b16 %v1253, %v1251
    %v1268 = vpack.c.b16 %v1256, %v1254
    %v1269 = vpack.c.b16 %v1257, %v1255
    %v1270 = vpack.c.b16 %v1260, %v1258
    %v1271 = vpack.c.b16 %v1261, %v1259
    %v1272 = vpack.c.b16 %v1264, %v1262
    %v1273 = vpack.c.b16 %v1265, %v1263
    %1282 = vmatprep.subr.bf16.mxu0 0
    %1283 = vmatpush1.bf16.msra.mxu0 %v1181
    %1284 = vmatprep.subr.bf16.mxu0 0
    %1285 = vmatpush1.bf16.msra.mxu0 %v1182
    %1286 = vmatprep.subr.bf16.mxu0 0
    %1287 = vmatpush1.bf16.msra.mxu0 %v1183
    %1288 = vmatprep.subr.bf16.mxu0 0
    %1289 = vmatpush1.bf16.msra.mxu0 %v1184
    %1290 = vmatprep.subr.bf16.mxu0 0
    %1291 = vmatpush1.bf16.msra.mxu0 %v1197
    %1292 = vmatprep.subr.bf16.mxu0 0
    %1293 = vmatpush1.bf16.msra.mxu0 %v1198
    %1294 = vmatprep.subr.bf16.mxu0 0
    %1295 = vmatpush1.bf16.msra.mxu0 %v1199
    %1296 = vmatprep.subr.bf16.mxu0 0
    %1297 = vmatpush1.bf16.msra.mxu0 %v1200
    %1298 = vmatprep.subr.bf16.mxu0 0
    %1299 = vmatpush1.bf16.msra.mxu0 %v1213
    %1300 = vmatprep.subr.bf16.mxu0 0
    %1301 = vmatpush1.bf16.msra.mxu0 %v1214
    %1302 = vmatprep.subr.bf16.mxu0 0
    %1303 = vmatpush1.bf16.msra.mxu0 %v1215
    %1304 = vmatprep.subr.bf16.mxu0 0
    %1305 = vmatpush1.bf16.msra.mxu0 %v1216
    %1306 = vmatprep.subr.bf16.mxu0 0
    %1307 = vmatpush1.bf16.msra.mxu0 %v1229
    %1308 = vmatprep.subr.bf16.mxu0 0
    %1309 = vmatpush1.bf16.msra.mxu0 %v1230
    %1310 = vmatprep.subr.bf16.mxu0 0
    %1311 = vmatpush1.bf16.msra.mxu0 %v1231
    %1312 = vmatprep.subr.bf16.mxu0 0
    %1313 = vmatpush1.bf16.msra.mxu0 %v1232
    %1314 = vmatprep.mubr.bf16.mxu0 %v1267
    %1315 = vmatmul.mubr.bf16.gmra.mrb[0].mxu0 %v1266
    %v1316 = vpop.f32.mrb[0].mxu0
    %v1317 = vadd.f32 0.0, %v1316
    %v1318 = vpop.f32.mrb[0].mxu0
    %v1319 = vpop.f32.mrb[0].mxu0
    %v1320 = vadd.f32 0.0, %v1319
    %v1321 = vpop.f32.mrb[0].mxu0
    %1322 = vmatprep.mubr.bf16.mxu0 %v1269
    %1323 = vmatmul.mubr.bf16.gmra.mrb[0].mxu0 %v1268
    %v1324 = vpop.f32.mrb[0].mxu0
    %v1325 = vadd.f32 0.0, %v1324
    %v1326 = vpop.f32.mrb[0].mxu0
    %v1327 = vpop.f32.mrb[0].mxu0
    %v1328 = vadd.f32 0.0, %v1327
    %v1329 = vpop.f32.mrb[0].mxu0
    %1330 = vmatprep.mubr.bf16.mxu0 %v1271
    %1331 = vmatmul.mubr.bf16.gmra.mrb[0].mxu0 %v1270
    %v1332 = vpop.f32.mrb[0].mxu0
    %v1333 = vadd.f32 0.0, %v1332
    %v1334 = vpop.f32.mrb[0].mxu0
    %v1335 = vpop.f32.mrb[0].mxu0
    %v1336 = vadd.f32 0.0, %v1335
    %v1337 = vpop.f32.mrb[0].mxu0
    %1338 = vmatprep.mubr.bf16.mxu0 %v1273
    %1339 = vmatmul.mubr.bf16.gmra.mrb[0].mxu0 %v1272
    %v1340 = vpop.f32.mrb[0].mxu0
    %v1341 = vadd.f32 0.0, %v1340
    %v1342 = vpop.f32.mrb[0].mxu0
    %v1343 = vpop.f32.mrb[0].mxu0
    %v1344 = vadd.f32 0.0, %v1343
    %v1345 = vpop.f32.mrb[0].mxu0
    %1346 = vdwg.mxu0
    %v1347 = vadd.f32 %v1161, %v1317
    %v1348 = vadd.f32 %v1162, %v1320
    %v1349 = vadd.f32 %v1163, %v1325
    %v1350 = vadd.f32 %v1164, %v1328
    %v1351 = vadd.f32 %v1165, %v1333
    %v1352 = vadd.f32 %v1166, %v1336
    %v1353 = vadd.f32 %v1167, %v1341
    %v1354 = vadd.f32 %v1168, %v1344
    %v1355 = vlaneseq
    %v1356 = vshrl.u32 %v1355, 7
    %v1357 = vsub.s32 0, %v1356
    %v1358 = vrot.slane %v49, %v1357
    %v1359 = vmul.f32 %v46, %v1358
    %v1360 = vmul.f32 %v47, %v1358
    %v1361 = vmul.f32 %v48, %v1358
    %v1362 = vmul.f32 %v49, %v1358
    %v1363 = vmul.f32 %v50, %v1358
    %v1364 = vmul.f32 %v51, %v1358
    %v1365 = vmul.f32 %v52, %v1358
    %v1366 = vmul.f32 %v53, %v1358
    %v1367 = vpack.c.bf16 %v1360, %v1359
    %v1368 = vpack.c.bf16 %v1362, %v1361
    %v1369 = vpack.c.bf16 %v1364, %v1363
    %v1370 = vpack.c.bf16 %v1366, %v1365
    %v1371 = vlaneseq
    %v1372 = vshrl.u32 %v1371, 7
    %v1373 = vsub.s32 1, %v1372
    %v1374 = vrot.slane %v49, %v1373
    %v1375 = vmul.f32 %v46, %v1374
    %v1376 = vmul.f32 %v47, %v1374
    %v1377 = vmul.f32 %v48, %v1374
    %v1378 = vmul.f32 %v49, %v1374
    %v1379 = vmul.f32 %v50, %v1374
    %v1380 = vmul.f32 %v51, %v1374
    %v1381 = vmul.f32 %v52, %v1374
    %v1382 = vmul.f32 %v53, %v1374
    %v1383 = vpack.c.bf16 %v1376, %v1375
    %v1384 = vpack.c.bf16 %v1378, %v1377
    %v1385 = vpack.c.bf16 %v1380, %v1379
    %v1386 = vpack.c.bf16 %v1382, %v1381
    %v1387 = vlaneseq
    %v1388 = vshrl.u32 %v1387, 7
    %v1389 = vsub.s32 2, %v1388
    %v1390 = vrot.slane %v49, %v1389
    %v1391 = vmul.f32 %v46, %v1390
    %v1392 = vmul.f32 %v47, %v1390
    %v1393 = vmul.f32 %v48, %v1390
    %v1394 = vmul.f32 %v49, %v1390
    %v1395 = vmul.f32 %v50, %v1390
    %v1396 = vmul.f32 %v51, %v1390
    %v1397 = vmul.f32 %v52, %v1390
    %v1398 = vmul.f32 %v53, %v1390
    %v1399 = vpack.c.bf16 %v1392, %v1391
    %v1400 = vpack.c.bf16 %v1394, %v1393
    %v1401 = vpack.c.bf16 %v1396, %v1395
    %v1402 = vpack.c.bf16 %v1398, %v1397
    %v1403 = vlaneseq
    %v1404 = vshrl.u32 %v1403, 7
    %v1405 = vsub.s32 3, %v1404
    %v1406 = vrot.slane %v49, %v1405
    %v1407 = vmul.f32 %v46, %v1406
    %v1408 = vmul.f32 %v47, %v1406
    %v1409 = vmul.f32 %v48, %v1406
    %v1410 = vmul.f32 %v49, %v1406
    %v1411 = vmul.f32 %v50, %v1406
    %v1412 = vmul.f32 %v51, %v1406
    %v1413 = vmul.f32 %v52, %v1406
    %v1414 = vmul.f32 %v53, %v1406
    %v1415 = vpack.c.bf16 %v1408, %v1407
    %v1416 = vpack.c.bf16 %v1410, %v1409
    %v1417 = vpack.c.bf16 %v1412, %v1411
    %v1418 = vpack.c.bf16 %v1414, %v1413
    %s1419 = scalar_lea.vmem [#allocation3], 384
    %v1420 = vld [vmem:[%s1419] sm:$0xff]
    %v1421 = vld [vmem:[%s1419 + $0x8] sm:$0xff]
    %v1422 = vld [vmem:[%s1419 + $0x10] sm:$0xff]
    %v1423 = vld [vmem:[%s1419 + $0x18] sm:$0xff]
    %v1424 = vld [vmem:[%s1419 + $0x20] sm:$0xff]
    %v1425 = vld [vmem:[%s1419 + $0x28] sm:$0xff]
    %v1426 = vld [vmem:[%s1419 + $0x30] sm:$0xff]
    %v1427 = vld [vmem:[%s1419 + $0x38] sm:$0xff]
    %v1436 = vunpack.c.l.b16 %v1420
    %v1437 = vunpack.c.h.b16 %v1420
    %v1438 = vunpack.c.l.b16 %v1421
    %v1439 = vunpack.c.h.b16 %v1421
    %v1440 = vunpack.c.l.b16 %v1422
    %v1441 = vunpack.c.h.b16 %v1422
    %v1442 = vunpack.c.l.b16 %v1423
    %v1443 = vunpack.c.h.b16 %v1423
    %v1444 = vunpack.c.l.b16 %v1424
    %v1445 = vunpack.c.h.b16 %v1424
    %v1446 = vunpack.c.l.b16 %v1425
    %v1447 = vunpack.c.h.b16 %v1425
    %v1448 = vunpack.c.l.b16 %v1426
    %v1449 = vunpack.c.h.b16 %v1426
    %v1450 = vunpack.c.l.b16 %v1427
    %v1451 = vunpack.c.h.b16 %v1427
    %v1452 = vpack.c.b16 %v1438, %v1436
    %v1453 = vpack.c.b16 %v1439, %v1437
    %v1454 = vpack.c.b16 %v1442, %v1440
    %v1455 = vpack.c.b16 %v1443, %v1441
    %v1456 = vpack.c.b16 %v1446, %v1444
    %v1457 = vpack.c.b16 %v1447, %v1445
    %v1458 = vpack.c.b16 %v1450, %v1448
    %v1459 = vpack.c.b16 %v1451, %v1449
    %1468 = vmatprep.subr.bf16.mxu0 0
    %1469 = vmatpush1.bf16.msra.mxu0 %v1367
    %1470 = vmatprep.subr.bf16.mxu0 0
    %1471 = vmatpush1.bf16.msra.mxu0 %v1368
    %1472 = vmatprep.subr.bf16.mxu0 0
    %1473 = vmatpush1.bf16.msra.mxu0 %v1369
    %1474 = vmatprep.subr.bf16.mxu0 0
    %1475 = vmatpush1.bf16.msra.mxu0 %v1370
    %1476 = vmatprep.subr.bf16.mxu0 0
    %1477 = vmatpush1.bf16.msra.mxu0 %v1383
    %1478 = vmatprep.subr.bf16.mxu0 0
    %1479 = vmatpush1.bf16.msra.mxu0 %v1384
    %1480 = vmatprep.subr.bf16.mxu0 0
    %1481 = vmatpush1.bf16.msra.mxu0 %v1385
    %1482 = vmatprep.subr.bf16.mxu0 0
    %1483 = vmatpush1.bf16.msra.mxu0 %v1386
    %1484 = vmatprep.subr.bf16.mxu0 0
    %1485 = vmatpush1.bf16.msra.mxu0 %v1399
    %1486 = vmatprep.subr.bf16.mxu0 0
    %1487 = vmatpush1.bf16.msra.mxu0 %v1400
    %1488 = vmatprep.subr.bf16.mxu0 0
    %1489 = vmatpush1.bf16.msra.mxu0 %v1401
    %1490 = vmatprep.subr.bf16.mxu0 0
    %1491 = vmatpush1.bf16.msra.mxu0 %v1402
    %1492 = vmatprep.subr.bf16.mxu0 0
    %1493 = vmatpush1.bf16.msra.mxu0 %v1415
    %1494 = vmatprep.subr.bf16.mxu0 0
    %1495 = vmatpush1.bf16.msra.mxu0 %v1416
    %1496 = vmatprep.subr.bf16.mxu0 0
    %1497 = vmatpush1.bf16.msra.mxu0 %v1417
    %1498 = vmatprep.subr.bf16.mxu0 0
    %1499 = vmatpush1.bf16.msra.mxu0 %v1418
    %1500 = vmatprep.mubr.bf16.mxu0 %v1453
    %1501 = vmatmul.mubr.bf16.gmra.mrb[0].mxu0 %v1452
    %v1502 = vpop.f32.mrb[0].mxu0
    %v1503 = vadd.f32 0.0, %v1502
    %v1504 = vpop.f32.mrb[0].mxu0
    %v1505 = vpop.f32.mrb[0].mxu0
    %v1506 = vadd.f32 0.0, %v1505
    %v1507 = vpop.f32.mrb[0].mxu0
    %1508 = vmatprep.mubr.bf16.mxu0 %v1455
    %1509 = vmatmul.mubr.bf16.gmra.mrb[0].mxu0 %v1454
    %v1510 = vpop.f32.mrb[0].mxu0
    %v1511 = vadd.f32 0.0, %v1510
    %v1512 = vpop.f32.mrb[0].mxu0
    %v1513 = vpop.f32.mrb[0].mxu0
    %v1514 = vadd.f32 0.0, %v1513
    %v1515 = vpop.f32.mrb[0].mxu0
    %1516 = vmatprep.mubr.bf16.mxu0 %v1457
    %1517 = vmatmul.mubr.bf16.gmra.mrb[0].mxu0 %v1456
    %v1518 = vpop.f32.mrb[0].mxu0
    %v1519 = vadd.f32 0.0, %v1518
    %v1520 = vpop.f32.mrb[0].mxu0
    %v1521 = vpop.f32.mrb[0].mxu0
    %v1522 = vadd.f32 0.0, %v1521
    %v1523 = vpop.f32.mrb[0].mxu0
    %1524 = vmatprep.mubr.bf16.mxu0 %v1459
    %1525 = vmatmul.mubr.bf16.gmra.mrb[0].mxu0 %v1458
    %v1526 = vpop.f32.mrb[0].mxu0
    %v1527 = vadd.f32 0.0, %v1526
    %v1528 = vpop.f32.mrb[0].mxu0
    %v1529 = vpop.f32.mrb[0].mxu0
    %v1530 = vadd.f32 0.0, %v1529
    %v1531 = vpop.f32.mrb[0].mxu0
    %1532 = vdwg.mxu0
    %v1533 = vadd.f32 %v1347, %v1503
    %v1534 = vadd.f32 %v1348, %v1506
    %v1535 = vadd.f32 %v1349, %v1511
    %v1536 = vadd.f32 %v1350, %v1514
    %v1537 = vadd.f32 %v1351, %v1519
    %v1538 = vadd.f32 %v1352, %v1522
    %v1539 = vadd.f32 %v1353, %v1527
    %v1540 = vadd.f32 %v1354, %v1530
    %v1541 = vlaneseq
    %v1542 = vshrl.u32 %v1541, 7
    %v1543 = vsub.s32 4, %v1542
    %v1544 = vrot.slane %v49, %v1543
    %v1545 = vmul.f32 %v46, %v1544
    %v1546 = vmul.f32 %v47, %v1544
    %v1547 = vmul.f32 %v48, %v1544
    %v1548 = vmul.f32 %v49, %v1544
    %v1549 = vmul.f32 %v50, %v1544
    %v1550 = vmul.f32 %v51, %v1544
    %v1551 = vmul.f32 %v52, %v1544
    %v1552 = vmul.f32 %v53, %v1544
    %v1553 = vpack.c.bf16 %v1546, %v1545
    %v1554 = vpack.c.bf16 %v1548, %v1547
    %v1555 = vpack.c.bf16 %v1550, %v1549
    %v1556 = vpack.c.bf16 %v1552, %v1551
    %v1557 = vlaneseq
    %v1558 = vshrl.u32 %v1557, 7
    %v1559 = vsub.s32 5, %v1558
    %v1560 = vrot.slane %v49, %v1559
    %v1561 = vmul.f32 %v46, %v1560
    %v1562 = vmul.f32 %v47, %v1560
    %v1563 = vmul.f32 %v48, %v1560
    %v1564 = vmul.f32 %v49, %v1560
    %v1565 = vmul.f32 %v50, %v1560
    %v1566 = vmul.f32 %v51, %v1560
    %v1567 = vmul.f32 %v52, %v1560
    %v1568 = vmul.f32 %v53, %v1560
    %v1569 = vpack.c.bf16 %v1562, %v1561
    %v1570 = vpack.c.bf16 %v1564, %v1563
    %v1571 = vpack.c.bf16 %v1566, %v1565
    %v1572 = vpack.c.bf16 %v1568, %v1567
    %v1573 = vlaneseq
    %v1574 = vshrl.u32 %v1573, 7
    %v1575 = vsub.s32 6, %v1574
    %v1576 = vrot.slane %v49, %v1575
    %v1577 = vmul.f32 %v46, %v1576
    %v1578 = vmul.f32 %v47, %v1576
    %v1579 = vmul.f32 %v48, %v1576
    %v1580 = vmul.f32 %v49, %v1576
    %v1581 = vmul.f32 %v50, %v1576
    %v1582 = vmul.f32 %v51, %v1576
    %v1583 = vmul.f32 %v52, %v1576
    %v1584 = vmul.f32 %v53, %v1576
    %v1585 = vpack.c.bf16 %v1578, %v1577
    %v1586 = vpack.c.bf16 %v1580, %v1579
    %v1587 = vpack.c.bf16 %v1582, %v1581
    %v1588 = vpack.c.bf16 %v1584, %v1583
    %v1589 = vlaneseq
    %v1590 = vshrl.u32 %v1589, 7
    %v1591 = vsub.s32 7, %v1590
    %v1592 = vrot.slane %v49, %v1591
    %v1593 = vmul.f32 %v46, %v1592
    %v1594 = vmul.f32 %v47, %v1592
    %v1595 = vmul.f32 %v48, %v1592
    %v1596 = vmul.f32 %v49, %v1592
    %v1597 = vmul.f32 %v50, %v1592
    %v1598 = vmul.f32 %v51, %v1592
    %v1599 = vmul.f32 %v52, %v1592
    %v1600 = vmul.f32 %v53, %v1592
    %v1601 = vpack.c.bf16 %v1594, %v1593
    %v1602 = vpack.c.bf16 %v1596, %v1595
    %v1603 = vpack.c.bf16 %v1598, %v1597
    %v1604 = vpack.c.bf16 %v1600, %v1599
    %s1605 = scalar_lea.vmem [#allocation3], 448
    %v1606 = vld [vmem:[%s1605] sm:$0xff]
    %v1607 = vld [vmem:[%s1605 + $0x8] sm:$0xff]
    %v1608 = vld [vmem:[%s1605 + $0x10] sm:$0xff]
    %v1609 = vld [vmem:[%s1605 + $0x18] sm:$0xff]
    %v1610 = vld [vmem:[%s1605 + $0x20] sm:$0xff]
    %v1611 = vld [vmem:[%s1605 + $0x28] sm:$0xff]
    %v1612 = vld [vmem:[%s1605 + $0x30] sm:$0xff]
    %v1613 = vld [vmem:[%s1605 + $0x38] sm:$0xff]
    %v1622 = vunpack.c.l.b16 %v1606
    %v1623 = vunpack.c.h.b16 %v1606
    %v1624 = vunpack.c.l.b16 %v1607
    %v1625 = vunpack.c.h.b16 %v1607
    %v1626 = vunpack.c.l.b16 %v1608
    %v1627 = vunpack.c.h.b16 %v1608
    %v1628 = vunpack.c.l.b16 %v1609
    %v1629 = vunpack.c.h.b16 %v1609
    %v1630 = vunpack.c.l.b16 %v1610
    %v1631 = vunpack.c.h.b16 %v1610
    %v1632 = vunpack.c.l.b16 %v1611
    %v1633 = vunpack.c.h.b16 %v1611
    %v1634 = vunpack.c.l.b16 %v1612
    %v1635 = vunpack.c.h.b16 %v1612
    %v1636 = vunpack.c.l.b16 %v1613
    %v1637 = vunpack.c.h.b16 %v1613
    %v1638 = vpack.c.b16 %v1624, %v1622
    %v1639 = vpack.c.b16 %v1625, %v1623
    %v1640 = vpack.c.b16 %v1628, %v1626
    %v1641 = vpack.c.b16 %v1629, %v1627
    %v1642 = vpack.c.b16 %v1632, %v1630
    %v1643 = vpack.c.b16 %v1633, %v1631
    %v1644 = vpack.c.b16 %v1636, %v1634
    %v1645 = vpack.c.b16 %v1637, %v1635
    %1654 = vmatprep.subr.bf16.mxu0 0
    %1655 = vmatpush1.bf16.msra.mxu0 %v1553
    %1656 = vmatprep.subr.bf16.mxu0 0
    %1657 = vmatpush1.bf16.msra.mxu0 %v1554
    %1658 = vmatprep.subr.bf16.mxu0 0
    %1659 = vmatpush1.bf16.msra.mxu0 %v1555
    %1660 = vmatprep.subr.bf16.mxu0 0
    %1661 = vmatpush1.bf16.msra.mxu0 %v1556
    %1662 = vmatprep.subr.bf16.mxu0 0
    %1663 = vmatpush1.bf16.msra.mxu0 %v1569
    %1664 = vmatprep.subr.bf16.mxu0 0
    %1665 = vmatpush1.bf16.msra.mxu0 %v1570
    %1666 = vmatprep.subr.bf16.mxu0 0
    %1667 = vmatpush1.bf16.msra.mxu0 %v1571
    %1668 = vmatprep.subr.bf16.mxu0 0
    %1669 = vmatpush1.bf16.msra.mxu0 %v1572
    %1670 = vmatprep.subr.bf16.mxu0 0
    %1671 = vmatpush1.bf16.msra.mxu0 %v1585
    %1672 = vmatprep.subr.bf16.mxu0 0
    %1673 = vmatpush1.bf16.msra.mxu0 %v1586
    %1674 = vmatprep.subr.bf16.mxu0 0
    %1675 = vmatpush1.bf16.msra.mxu0 %v1587
    %1676 = vmatprep.subr.bf16.mxu0 0
    %1677 = vmatpush1.bf16.msra.mxu0 %v1588
    %1678 = vmatprep.subr.bf16.mxu0 0
    %1679 = vmatpush1.bf16.msra.mxu0 %v1601
    %1680 = vmatprep.subr.bf16.mxu0 0
    %1681 = vmatpush1.bf16.msra.mxu0 %v1602
    %1682 = vmatprep.subr.bf16.mxu0 0
    %1683 = vmatpush1.bf16.msra.mxu0 %v1603
    %1684 = vmatprep.subr.bf16.mxu0 0
    %1685 = vmatpush1.bf16.msra.mxu0 %v1604
    %1686 = vmatprep.mubr.bf16.mxu0 %v1639
    %1687 = vmatmul.mubr.bf16.gmra.mrb[0].mxu0 %v1638
    %v1688 = vpop.f32.mrb[0].mxu0
    %v1689 = vadd.f32 0.0, %v1688
    %v1690 = vpop.f32.mrb[0].mxu0
    %v1691 = vpop.f32.mrb[0].mxu0
    %v1692 = vadd.f32 0.0, %v1691
    %v1693 = vpop.f32.mrb[0].mxu0
    %1694 = vmatprep.mubr.bf16.mxu0 %v1641
    %1695 = vmatmul.mubr.bf16.gmra.mrb[0].mxu0 %v1640
    %v1696 = vpop.f32.mrb[0].mxu0
    %v1697 = vadd.f32 0.0, %v1696
    %v1698 = vpop.f32.mrb[0].mxu0
    %v1699 = vpop.f32.mrb[0].mxu0
    %v1700 = vadd.f32 0.0, %v1699
    %v1701 = vpop.f32.mrb[0].mxu0
    %1702 = vmatprep.mubr.bf16.mxu0 %v1643
    %1703 = vmatmul.mubr.bf16.gmra.mrb[0].mxu0 %v1642
    %v1704 = vpop.f32.mrb[0].mxu0
    %v1705 = vadd.f32 0.0, %v1704
    %v1706 = vpop.f32.mrb[0].mxu0
    %v1707 = vpop.f32.mrb[0].mxu0
    %v1708 = vadd.f32 0.0, %v1707
    %v1709 = vpop.f32.mrb[0].mxu0
    %1710 = vmatprep.mubr.bf16.mxu0 %v1645
    %1711 = vmatmul.mubr.bf16.gmra.mrb[0].mxu0 %v1644
    %v1712 = vpop.f32.mrb[0].mxu0
    %v1713 = vadd.f32 0.0, %v1712
    %v1714 = vpop.f32.mrb[0].mxu0
    %v1715 = vpop.f32.mrb[0].mxu0
    %v1716 = vadd.f32 0.0, %v1715
    %v1717 = vpop.f32.mrb[0].mxu0
    %1718 = vdwg.mxu0
    %v1719 = vadd.f32 %v1533, %v1689
    %v1720 = vadd.f32 %v1534, %v1692
    %v1721 = vadd.f32 %v1535, %v1697
    %v1722 = vadd.f32 %v1536, %v1700
    %v1723 = vadd.f32 %v1537, %v1705
    %v1724 = vadd.f32 %v1538, %v1708
    %v1725 = vadd.f32 %v1539, %v1713
    %v1726 = vadd.f32 %v1540, %v1716
    %v1727 = vlaneseq
    %v1728 = vshrl.u32 %v1727, 7
    %v1729 = vsub.s32 0, %v1728
    %v1730 = vrot.slane %v50, %v1729
    %v1731 = vmul.f32 %v46, %v1730
    %v1732 = vmul.f32 %v47, %v1730
    %v1733 = vmul.f32 %v48, %v1730
    %v1734 = vmul.f32 %v49, %v1730
    %v1735 = vmul.f32 %v50, %v1730
    %v1736 = vmul.f32 %v51, %v1730
    %v1737 = vmul.f32 %v52, %v1730
    %v1738 = vmul.f32 %v53, %v1730
    %v1739 = vpack.c.bf16 %v1732, %v1731
    %v1740 = vpack.c.bf16 %v1734, %v1733
    %v1741 = vpack.c.bf16 %v1736, %v1735
    %v1742 = vpack.c.bf16 %v1738, %v1737
    %v1743 = vlaneseq
    %v1744 = vshrl.u32 %v1743, 7
    %v1745 = vsub.s32 1, %v1744
    %v1746 = vrot.slane %v50, %v1745
    %v1747 = vmul.f32 %v46, %v1746
    %v1748 = vmul.f32 %v47, %v1746
    %v1749 = vmul.f32 %v48, %v1746
    %v1750 = vmul.f32 %v49, %v1746
    %v1751 = vmul.f32 %v50, %v1746
    %v1752 = vmul.f32 %v51, %v1746
    %v1753 = vmul.f32 %v52, %v1746
    %v1754 = vmul.f32 %v53, %v1746
    %v1755 = vpack.c.bf16 %v1748, %v1747
    %v1756 = vpack.c.bf16 %v1750, %v1749
    %v1757 = vpack.c.bf16 %v1752, %v1751
    %v1758 = vpack.c.bf16 %v1754, %v1753
    %v1759 = vlaneseq
    %v1760 = vshrl.u32 %v1759, 7
    %v1761 = vsub.s32 2, %v1760
    %v1762 = vrot.slane %v50, %v1761
    %v1763 = vmul.f32 %v46, %v1762
    %v1764 = vmul.f32 %v47, %v1762
    %v1765 = vmul.f32 %v48, %v1762
    %v1766 = vmul.f32 %v49, %v1762
    %v1767 = vmul.f32 %v50, %v1762
    %v1768 = vmul.f32 %v51, %v1762
    %v1769 = vmul.f32 %v52, %v1762
    %v1770 = vmul.f32 %v53, %v1762
    %v1771 = vpack.c.bf16 %v1764, %v1763
    %v1772 = vpack.c.bf16 %v1766, %v1765
    %v1773 = vpack.c.bf16 %v1768, %v1767
    %v1774 = vpack.c.bf16 %v1770, %v1769
    %v1775 = vlaneseq
    %v1776 = vshrl.u32 %v1775, 7
    %v1777 = vsub.s32 3, %v1776
    %v1778 = vrot.slane %v50, %v1777
    %v1779 = vmul.f32 %v46, %v1778
    %v1780 = vmul.f32 %v47, %v1778
    %v1781 = vmul.f32 %v48, %v1778
    %v1782 = vmul.f32 %v49, %v1778
    %v1783 = vmul.f32 %v50, %v1778
    %v1784 = vmul.f32 %v51, %v1778
    %v1785 = vmul.f32 %v52, %v1778
    %v1786 = vmul.f32 %v53, %v1778
    %v1787 = vpack.c.bf16 %v1780, %v1779
    %v1788 = vpack.c.bf16 %v1782, %v1781
    %v1789 = vpack.c.bf16 %v1784, %v1783
    %v1790 = vpack.c.bf16 %v1786, %v1785
    %s1791 = scalar_lea.vmem [#allocation3], 512
    %v1792 = vld [vmem:[%s1791] sm:$0xff]
    %v1793 = vld [vmem:[%s1791 + $0x8] sm:$0xff]
    %v1794 = vld [vmem:[%s1791 + $0x10] sm:$0xff]
    %v1795 = vld [vmem:[%s1791 + $0x18] sm:$0xff]
    %v1796 = vld [vmem:[%s1791 + $0x20] sm:$0xff]
    %v1797 = vld [vmem:[%s1791 + $0x28] sm:$0xff]
    %v1798 = vld [vmem:[%s1791 + $0x30] sm:$0xff]
    %v1799 = vld [vmem:[%s1791 + $0x38] sm:$0xff]
    %v1808 = vunpack.c.l.b16 %v1792
    %v1809 = vunpack.c.h.b16 %v1792
    %v1810 = vunpack.c.l.b16 %v1793
    %v1811 = vunpack.c.h.b16 %v1793
    %v1812 = vunpack.c.l.b16 %v1794
    %v1813 = vunpack.c.h.b16 %v1794
    %v1814 = vunpack.c.l.b16 %v1795
    %v1815 = vunpack.c.h.b16 %v1795
    %v1816 = vunpack.c.l.b16 %v1796
    %v1817 = vunpack.c.h.b16 %v1796
    %v1818 = vunpack.c.l.b16 %v1797
    %v1819 = vunpack.c.h.b16 %v1797
    %v1820 = vunpack.c.l.b16 %v1798
    %v1821 = vunpack.c.h.b16 %v1798
    %v1822 = vunpack.c.l.b16 %v1799
    %v1823 = vunpack.c.h.b16 %v1799
    %v1824 = vpack.c.b16 %v1810, %v1808
    %v1825 = vpack.c.b16 %v1811, %v1809
    %v1826 = vpack.c.b16 %v1814, %v1812
    %v1827 = vpack.c.b16 %v1815, %v1813
    %v1828 = vpack.c.b16 %v1818, %v1816
    %v1829 = vpack.c.b16 %v1819, %v1817
    %v1830 = vpack.c.b16 %v1822, %v1820
    %v1831 = vpack.c.b16 %v1823, %v1821
    %1840 = vmatprep.subr.bf16.mxu0 0
    %1841 = vmatpush1.bf16.msra.mxu0 %v1739
    %1842 = vmatprep.subr.bf16.mxu0 0
    %1843 = vmatpush1.bf16.msra.mxu0 %v1740
    %1844 = vmatprep.subr.bf16.mxu0 0
    %1845 = vmatpush1.bf16.msra.mxu0 %v1741
    %1846 = vmatprep.subr.bf16.mxu0 0
    %1847 = vmatpush1.bf16.msra.mxu0 %v1742
    %1848 = vmatprep.subr.bf16.mxu0 0
    %1849 = vmatpush1.bf16.msra.mxu0 %v1755
    %1850 = vmatprep.subr.bf16.mxu0 0
    %1851 = vmatpush1.bf16.msra.mxu0 %v1756
    %1852 = vmatprep.subr.bf16.mxu0 0
    %1853 = vmatpush1.bf16.msra.mxu0 %v1757
    %1854 = vmatprep.subr.bf16.mxu0 0
    %1855 = vmatpush1.bf16.msra.mxu0 %v1758
    %1856 = vmatprep.subr.bf16.mxu0 0
    %1857 = vmatpush1.bf16.msra.mxu0 %v1771
    %1858 = vmatprep.subr.bf16.mxu0 0
    %1859 = vmatpush1.bf16.msra.mxu0 %v1772
    %1860 = vmatprep.subr.bf16.mxu0 0
    %1861 = vmatpush1.bf16.msra.mxu0 %v1773
    %1862 = vmatprep.subr.bf16.mxu0 0
    %1863 = vmatpush1.bf16.msra.mxu0 %v1774
    %1864 = vmatprep.subr.bf16.mxu0 0
    %1865 = vmatpush1.bf16.msra.mxu0 %v1787
    %1866 = vmatprep.subr.bf16.mxu0 0
    %1867 = vmatpush1.bf16.msra.mxu0 %v1788
    %1868 = vmatprep.subr.bf16.mxu0 0
    %1869 = vmatpush1.bf16.msra.mxu0 %v1789
    %1870 = vmatprep.subr.bf16.mxu0 0
    %1871 = vmatpush1.bf16.msra.mxu0 %v1790
    %1872 = vmatprep.mubr.bf16.mxu0 %v1825
    %1873 = vmatmul.mubr.bf16.gmra.mrb[0].mxu0 %v1824
    %v1874 = vpop.f32.mrb[0].mxu0
    %v1875 = vadd.f32 0.0, %v1874
    %v1876 = vpop.f32.mrb[0].mxu0
    %v1877 = vpop.f32.mrb[0].mxu0
    %v1878 = vadd.f32 0.0, %v1877
    %v1879 = vpop.f32.mrb[0].mxu0
    %1880 = vmatprep.mubr.bf16.mxu0 %v1827
    %1881 = vmatmul.mubr.bf16.gmra.mrb[0].mxu0 %v1826
    %v1882 = vpop.f32.mrb[0].mxu0
    %v1883 = vadd.f32 0.0, %v1882
    %v1884 = vpop.f32.mrb[0].mxu0
    %v1885 = vpop.f32.mrb[0].mxu0
    %v1886 = vadd.f32 0.0, %v1885
    %v1887 = vpop.f32.mrb[0].mxu0
    %1888 = vmatprep.mubr.bf16.mxu0 %v1829
    %1889 = vmatmul.mubr.bf16.gmra.mrb[0].mxu0 %v1828
    %v1890 = vpop.f32.mrb[0].mxu0
    %v1891 = vadd.f32 0.0, %v1890
    %v1892 = vpop.f32.mrb[0].mxu0
    %v1893 = vpop.f32.mrb[0].mxu0
    %v1894 = vadd.f32 0.0, %v1893
    %v1895 = vpop.f32.mrb[0].mxu0
    %1896 = vmatprep.mubr.bf16.mxu0 %v1831
    %1897 = vmatmul.mubr.bf16.gmra.mrb[0].mxu0 %v1830
    %v1898 = vpop.f32.mrb[0].mxu0
    %v1899 = vadd.f32 0.0, %v1898
    %v1900 = vpop.f32.mrb[0].mxu0
    %v1901 = vpop.f32.mrb[0].mxu0
    %v1902 = vadd.f32 0.0, %v1901
    %v1903 = vpop.f32.mrb[0].mxu0
    %1904 = vdwg.mxu0
    %v1905 = vadd.f32 %v1719, %v1875
    %v1906 = vadd.f32 %v1720, %v1878
    %v1907 = vadd.f32 %v1721, %v1883
    %v1908 = vadd.f32 %v1722, %v1886
    %v1909 = vadd.f32 %v1723, %v1891
    %v1910 = vadd.f32 %v1724, %v1894
    %v1911 = vadd.f32 %v1725, %v1899
    %v1912 = vadd.f32 %v1726, %v1902
    %v1913 = vlaneseq
    %v1914 = vshrl.u32 %v1913, 7
    %v1915 = vsub.s32 4, %v1914
    %v1916 = vrot.slane %v50, %v1915
    %v1917 = vmul.f32 %v46, %v1916
    %v1918 = vmul.f32 %v47, %v1916
    %v1919 = vmul.f32 %v48, %v1916
    %v1920 = vmul.f32 %v49, %v1916
    %v1921 = vmul.f32 %v50, %v1916
    %v1922 = vmul.f32 %v51, %v1916
    %v1923 = vmul.f32 %v52, %v1916
    %v1924 = vmul.f32 %v53, %v1916
    %v1925 = vpack.c.bf16 %v1918, %v1917
    %v1926 = vpack.c.bf16 %v1920, %v1919
    %v1927 = vpack.c.bf16 %v1922, %v1921
    %v1928 = vpack.c.bf16 %v1924, %v1923
    %v1929 = vlaneseq
    %v1930 = vshrl.u32 %v1929, 7
    %v1931 = vsub.s32 5, %v1930
    %v1932 = vrot.slane %v50, %v1931
    %v1933 = vmul.f32 %v46, %v1932
    %v1934 = vmul.f32 %v47, %v1932
    %v1935 = vmul.f32 %v48, %v1932
    %v1936 = vmul.f32 %v49, %v1932
    %v1937 = vmul.f32 %v50, %v1932
    %v1938 = vmul.f32 %v51, %v1932
    %v1939 = vmul.f32 %v52, %v1932
    %v1940 = vmul.f32 %v53, %v1932
    %v1941 = vpack.c.bf16 %v1934, %v1933
    %v1942 = vpack.c.bf16 %v1936, %v1935
    %v1943 = vpack.c.bf16 %v1938, %v1937
    %v1944 = vpack.c.bf16 %v1940, %v1939
    %v1945 = vlaneseq
    %v1946 = vshrl.u32 %v1945, 7
    %v1947 = vsub.s32 6, %v1946
    %v1948 = vrot.slane %v50, %v1947
    %v1949 = vmul.f32 %v46, %v1948
    %v1950 = vmul.f32 %v47, %v1948
    %v1951 = vmul.f32 %v48, %v1948
    %v1952 = vmul.f32 %v49, %v1948
    %v1953 = vmul.f32 %v50, %v1948
    %v1954 = vmul.f32 %v51, %v1948
    %v1955 = vmul.f32 %v52, %v1948
    %v1956 = vmul.f32 %v53, %v1948
    %v1957 = vpack.c.bf16 %v1950, %v1949
    %v1958 = vpack.c.bf16 %v1952, %v1951
    %v1959 = vpack.c.bf16 %v1954, %v1953
    %v1960 = vpack.c.bf16 %v1956, %v1955
    %v1961 = vlaneseq
    %v1962 = vshrl.u32 %v1961, 7
    %v1963 = vsub.s32 7, %v1962
    %v1964 = vrot.slane %v50, %v1963
    %v1965 = vmul.f32 %v46, %v1964
    %v1966 = vmul.f32 %v47, %v1964
    %v1967 = vmul.f32 %v48, %v1964
    %v1968 = vmul.f32 %v49, %v1964
    %v1969 = vmul.f32 %v50, %v1964
    %v1970 = vmul.f32 %v51, %v1964
    %v1971 = vmul.f32 %v52, %v1964
    %v1972 = vmul.f32 %v53, %v1964
    %v1973 = vpack.c.bf16 %v1966, %v1965
    %v1974 = vpack.c.bf16 %v1968, %v1967
    %v1975 = vpack.c.bf16 %v1970, %v1969
    %v1976 = vpack.c.bf16 %v1972, %v1971
    %s1977 = scalar_lea.vmem [#allocation3], 576
    %v1978 = vld [vmem:[%s1977] sm:$0xff]
    %v1979 = vld [vmem:[%s1977 + $0x8] sm:$0xff]
    %v1980 = vld [vmem:[%s1977 + $0x10] sm:$0xff]
    %v1981 = vld [vmem:[%s1977 + $0x18] sm:$0xff]
    %v1982 = vld [vmem:[%s1977 + $0x20] sm:$0xff]
    %v1983 = vld [vmem:[%s1977 + $0x28] sm:$0xff]
    %v1984 = vld [vmem:[%s1977 + $0x30] sm:$0xff]
    %v1985 = vld [vmem:[%s1977 + $0x38] sm:$0xff]
    %v1994 = vunpack.c.l.b16 %v1978
    %v1995 = vunpack.c.h.b16 %v1978
    %v1996 = vunpack.c.l.b16 %v1979
    %v1997 = vunpack.c.h.b16 %v1979
    %v1998 = vunpack.c.l.b16 %v1980
    %v1999 = vunpack.c.h.b16 %v1980
    %v2000 = vunpack.c.l.b16 %v1981
    %v2001 = vunpack.c.h.b16 %v1981
    %v2002 = vunpack.c.l.b16 %v1982
    %v2003 = vunpack.c.h.b16 %v1982
    %v2004 = vunpack.c.l.b16 %v1983
    %v2005 = vunpack.c.h.b16 %v1983
    %v2006 = vunpack.c.l.b16 %v1984
    %v2007 = vunpack.c.h.b16 %v1984
    %v2008 = vunpack.c.l.b16 %v1985
    %v2009 = vunpack.c.h.b16 %v1985
    %v2010 = vpack.c.b16 %v1996, %v1994
    %v2011 = vpack.c.b16 %v1997, %v1995
    %v2012 = vpack.c.b16 %v2000, %v1998
    %v2013 = vpack.c.b16 %v2001, %v1999
    %v2014 = vpack.c.b16 %v2004, %v2002
    %v2015 = vpack.c.b16 %v2005, %v2003
    %v2016 = vpack.c.b16 %v2008, %v2006
    %v2017 = vpack.c.b16 %v2009, %v2007
    %2026 = vmatprep.subr.bf16.mxu0 0
    %2027 = vmatpush1.bf16.msra.mxu0 %v1925
    %2028 = vmatprep.subr.bf16.mxu0 0
    %2029 = vmatpush1.bf16.msra.mxu0 %v1926
    %2030 = vmatprep.subr.bf16.mxu0 0
    %2031 = vmatpush1.bf16.msra.mxu0 %v1927
    %2032 = vmatprep.subr.bf16.mxu0 0
    %2033 = vmatpush1.bf16.msra.mxu0 %v1928
    %2034 = vmatprep.subr.bf16.mxu0 0
    %2035 = vmatpush1.bf16.msra.mxu0 %v1941
    %2036 = vmatprep.subr.bf16.mxu0 0
    %2037 = vmatpush1.bf16.msra.mxu0 %v1942
    %2038 = vmatprep.subr.bf16.mxu0 0
    %2039 = vmatpush1.bf16.msra.mxu0 %v1943
    %2040 = vmatprep.subr.bf16.mxu0 0
    %2041 = vmatpush1.bf16.msra.mxu0 %v1944
    %2042 = vmatprep.subr.bf16.mxu0 0
    %2043 = vmatpush1.bf16.msra.mxu0 %v1957
    %2044 = vmatprep.subr.bf16.mxu0 0
    %2045 = vmatpush1.bf16.msra.mxu0 %v1958
    %2046 = vmatprep.subr.bf16.mxu0 0
    %2047 = vmatpush1.bf16.msra.mxu0 %v1959
    %2048 = vmatprep.subr.bf16.mxu0 0
    %2049 = vmatpush1.bf16.msra.mxu0 %v1960
    %2050 = vmatprep.subr.bf16.mxu0 0
    %2051 = vmatpush1.bf16.msra.mxu0 %v1973
    %2052 = vmatprep.subr.bf16.mxu0 0
    %2053 = vmatpush1.bf16.msra.mxu0 %v1974
    %2054 = vmatprep.subr.bf16.mxu0 0
    %2055 = vmatpush1.bf16.msra.mxu0 %v1975
    %2056 = vmatprep.subr.bf16.mxu0 0
    %2057 = vmatpush1.bf16.msra.mxu0 %v1976
    %2058 = vmatprep.mubr.bf16.mxu0 %v2011
    %2059 = vmatmul.mubr.bf16.gmra.mrb[0].mxu0 %v2010
    %v2060 = vpop.f32.mrb[0].mxu0
    %v2061 = vadd.f32 0.0, %v2060
    %v2062 = vpop.f32.mrb[0].mxu0
    %v2063 = vpop.f32.mrb[0].mxu0
    %v2064 = vadd.f32 0.0, %v2063
    %v2065 = vpop.f32.mrb[0].mxu0
    %2066 = vmatprep.mubr.bf16.mxu0 %v2013
    %2067 = vmatmul.mubr.bf16.gmra.mrb[0].mxu0 %v2012
    %v2068 = vpop.f32.mrb[0].mxu0
    %v2069 = vadd.f32 0.0, %v2068
    %v2070 = vpop.f32.mrb[0].mxu0
    %v2071 = vpop.f32.mrb[0].mxu0
    %v2072 = vadd.f32 0.0, %v2071
    %v2073 = vpop.f32.mrb[0].mxu0
    %2074 = vmatprep.mubr.bf16.mxu0 %v2015
    %2075 = vmatmul.mubr.bf16.gmra.mrb[0].mxu0 %v2014
    %v2076 = vpop.f32.mrb[0].mxu0
    %v2077 = vadd.f32 0.0, %v2076
    %v2078 = vpop.f32.mrb[0].mxu0
    %v2079 = vpop.f32.mrb[0].mxu0
    %v2080 = vadd.f32 0.0, %v2079
    %v2081 = vpop.f32.mrb[0].mxu0
    %2082 = vmatprep.mubr.bf16.mxu0 %v2017
    %2083 = vmatmul.mubr.bf16.gmra.mrb[0].mxu0 %v2016
    %v2084 = vpop.f32.mrb[0].mxu0
    %v2085 = vadd.f32 0.0, %v2084
    %v2086 = vpop.f32.mrb[0].mxu0
    %v2087 = vpop.f32.mrb[0].mxu0
    %v2088 = vadd.f32 0.0, %v2087
    %v2089 = vpop.f32.mrb[0].mxu0
    %2090 = vdwg.mxu0
    %v2091 = vadd.f32 %v1905, %v2061
    %v2092 = vadd.f32 %v1906, %v2064
    %v2093 = vadd.f32 %v1907, %v2069
    %v2094 = vadd.f32 %v1908, %v2072
    %v2095 = vadd.f32 %v1909, %v2077
    %v2096 = vadd.f32 %v1910, %v2080
    %v2097 = vadd.f32 %v1911, %v2085
    %v2098 = vadd.f32 %v1912, %v2088
    %v2099 = vlaneseq
    %v2100 = vshrl.u32 %v2099, 7
    %v2101 = vsub.s32 0, %v2100
    %v2102 = vrot.slane %v51, %v2101
    %v2103 = vmul.f32 %v46, %v2102
    %v2104 = vmul.f32 %v47, %v2102
    %v2105 = vmul.f32 %v48, %v2102
    %v2106 = vmul.f32 %v49, %v2102
    %v2107 = vmul.f32 %v50, %v2102
    %v2108 = vmul.f32 %v51, %v2102
    %v2109 = vmul.f32 %v52, %v2102
    %v2110 = vmul.f32 %v53, %v2102
    %v2111 = vpack.c.bf16 %v2104, %v2103
    %v2112 = vpack.c.bf16 %v2106, %v2105
    %v2113 = vpack.c.bf16 %v2108, %v2107
    %v2114 = vpack.c.bf16 %v2110, %v2109
    %v2115 = vlaneseq
    %v2116 = vshrl.u32 %v2115, 7
    %v2117 = vsub.s32 1, %v2116
    %v2118 = vrot.slane %v51, %v2117
    %v2119 = vmul.f32 %v46, %v2118
    %v2120 = vmul.f32 %v47, %v2118
    %v2121 = vmul.f32 %v48, %v2118
    %v2122 = vmul.f32 %v49, %v2118
    %v2123 = vmul.f32 %v50, %v2118
    %v2124 = vmul.f32 %v51, %v2118
    %v2125 = vmul.f32 %v52, %v2118
    %v2126 = vmul.f32 %v53, %v2118
    %v2127 = vpack.c.bf16 %v2120, %v2119
    %v2128 = vpack.c.bf16 %v2122, %v2121
    %v2129 = vpack.c.bf16 %v2124, %v2123
    %v2130 = vpack.c.bf16 %v2126, %v2125
    %v2131 = vlaneseq
    %v2132 = vshrl.u32 %v2131, 7
    %v2133 = vsub.s32 2, %v2132
    %v2134 = vrot.slane %v51, %v2133
    %v2135 = vmul.f32 %v46, %v2134
    %v2136 = vmul.f32 %v47, %v2134
    %v2137 = vmul.f32 %v48, %v2134
    %v2138 = vmul.f32 %v49, %v2134
    %v2139 = vmul.f32 %v50, %v2134
    %v2140 = vmul.f32 %v51, %v2134
    %v2141 = vmul.f32 %v52, %v2134
    %v2142 = vmul.f32 %v53, %v2134
    %v2143 = vpack.c.bf16 %v2136, %v2135
    %v2144 = vpack.c.bf16 %v2138, %v2137
    %v2145 = vpack.c.bf16 %v2140, %v2139
    %v2146 = vpack.c.bf16 %v2142, %v2141
    %v2147 = vlaneseq
    %v2148 = vshrl.u32 %v2147, 7
    %v2149 = vsub.s32 3, %v2148
    %v2150 = vrot.slane %v51, %v2149
    %v2151 = vmul.f32 %v46, %v2150
    %v2152 = vmul.f32 %v47, %v2150
    %v2153 = vmul.f32 %v48, %v2150
    %v2154 = vmul.f32 %v49, %v2150
    %v2155 = vmul.f32 %v50, %v2150
    %v2156 = vmul.f32 %v51, %v2150
    %v2157 = vmul.f32 %v52, %v2150
    %v2158 = vmul.f32 %v53, %v2150
    %v2159 = vpack.c.bf16 %v2152, %v2151
    %v2160 = vpack.c.bf16 %v2154, %v2153
    %v2161 = vpack.c.bf16 %v2156, %v2155
    %v2162 = vpack.c.bf16 %v2158, %v2157
    %s2163 = scalar_lea.vmem [#allocation3], 640
    %v2164 = vld [vmem:[%s2163] sm:$0xff]
    %v2165 = vld [vmem:[%s2163 + $0x8] sm:$0xff]
    %v2166 = vld [vmem:[%s2163 + $0x10] sm:$0xff]
    %v2167 = vld [vmem:[%s2163 + $0x18] sm:$0xff]
    %v2168 = vld [vmem:[%s2163 + $0x20] sm:$0xff]
    %v2169 = vld [vmem:[%s2163 + $0x28] sm:$0xff]
    %v2170 = vld [vmem:[%s2163 + $0x30] sm:$0xff]
    %v2171 = vld [vmem:[%s2163 + $0x38] sm:$0xff]
    %v2180 = vunpack.c.l.b16 %v2164
    %v2181 = vunpack.c.h.b16 %v2164
    %v2182 = vunpack.c.l.b16 %v2165
    %v2183 = vunpack.c.h.b16 %v2165
    %v2184 = vunpack.c.l.b16 %v2166
    %v2185 = vunpack.c.h.b16 %v2166
    %v2186 = vunpack.c.l.b16 %v2167
    %v2187 = vunpack.c.h.b16 %v2167
    %v2188 = vunpack.c.l.b16 %v2168
    %v2189 = vunpack.c.h.b16 %v2168
    %v2190 = vunpack.c.l.b16 %v2169
    %v2191 = vunpack.c.h.b16 %v2169
    %v2192 = vunpack.c.l.b16 %v2170
    %v2193 = vunpack.c.h.b16 %v2170
    %v2194 = vunpack.c.l.b16 %v2171
    %v2195 = vunpack.c.h.b16 %v2171
    %v2196 = vpack.c.b16 %v2182, %v2180
    %v2197 = vpack.c.b16 %v2183, %v2181
    %v2198 = vpack.c.b16 %v2186, %v2184
    %v2199 = vpack.c.b16 %v2187, %v2185
    %v2200 = vpack.c.b16 %v2190, %v2188
    %v2201 = vpack.c.b16 %v2191, %v2189
    %v2202 = vpack.c.b16 %v2194, %v2192
    %v2203 = vpack.c.b16 %v2195, %v2193
    %2212 = vmatprep.subr.bf16.mxu0 0
    %2213 = vmatpush1.bf16.msra.mxu0 %v2111
    %2214 = vmatprep.subr.bf16.mxu0 0
    %2215 = vmatpush1.bf16.msra.mxu0 %v2112
    %2216 = vmatprep.subr.bf16.mxu0 0
    %2217 = vmatpush1.bf16.msra.mxu0 %v2113
    %2218 = vmatprep.subr.bf16.mxu0 0
    %2219 = vmatpush1.bf16.msra.mxu0 %v2114
    %2220 = vmatprep.subr.bf16.mxu0 0
    %2221 = vmatpush1.bf16.msra.mxu0 %v2127
    %2222 = vmatprep.subr.bf16.mxu0 0
    %2223 = vmatpush1.bf16.msra.mxu0 %v2128
    %2224 = vmatprep.subr.bf16.mxu0 0
    %2225 = vmatpush1.bf16.msra.mxu0 %v2129
    %2226 = vmatprep.subr.bf16.mxu0 0
    %2227 = vmatpush1.bf16.msra.mxu0 %v2130
    %2228 = vmatprep.subr.bf16.mxu0 0
    %2229 = vmatpush1.bf16.msra.mxu0 %v2143
    %2230 = vmatprep.subr.bf16.mxu0 0
    %2231 = vmatpush1.bf16.msra.mxu0 %v2144
    %2232 = vmatprep.subr.bf16.mxu0 0
    %2233 = vmatpush1.bf16.msra.mxu0 %v2145
    %2234 = vmatprep.subr.bf16.mxu0 0
    %2235 = vmatpush1.bf16.msra.mxu0 %v2146
    %2236 = vmatprep.subr.bf16.mxu0 0
    %2237 = vmatpush1.bf16.msra.mxu0 %v2159
    %2238 = vmatprep.subr.bf16.mxu0 0
    %2239 = vmatpush1.bf16.msra.mxu0 %v2160
    %2240 = vmatprep.subr.bf16.mxu0 0
    %2241 = vmatpush1.bf16.msra.mxu0 %v2161
    %2242 = vmatprep.subr.bf16.mxu0 0
    %2243 = vmatpush1.bf16.msra.mxu0 %v2162
    %2244 = vmatprep.mubr.bf16.mxu0 %v2197
    %2245 = vmatmul.mubr.bf16.gmra.mrb[0].mxu0 %v2196
    %v2246 = vpop.f32.mrb[0].mxu0
    %v2247 = vadd.f32 0.0, %v2246
    %v2248 = vpop.f32.mrb[0].mxu0
    %v2249 = vpop.f32.mrb[0].mxu0
    %v2250 = vadd.f32 0.0, %v2249
    %v2251 = vpop.f32.mrb[0].mxu0
    %2252 = vmatprep.mubr.bf16.mxu0 %v2199
    %2253 = vmatmul.mubr.bf16.gmra.mrb[0].mxu0 %v2198
    %v2254 = vpop.f32.mrb[0].mxu0
    %v2255 = vadd.f32 0.0, %v2254
    %v2256 = vpop.f32.mrb[0].mxu0
    %v2257 = vpop.f32.mrb[0].mxu0
    %v2258 = vadd.f32 0.0, %v2257
    %v2259 = vpop.f32.mrb[0].mxu0
    %2260 = vmatprep.mubr.bf16.mxu0 %v2201
    %2261 = vmatmul.mubr.bf16.gmra.mrb[0].mxu0 %v2200
    %v2262 = vpop.f32.mrb[0].mxu0
    %v2263 = vadd.f32 0.0, %v2262
    %v2264 = vpop.f32.mrb[0].mxu0
    %v2265 = vpop.f32.mrb[0].mxu0
    %v2266 = vadd.f32 0.0, %v2265
    %v2267 = vpop.f32.mrb[0].mxu0
    %2268 = vmatprep.mubr.bf16.mxu0 %v2203
    %2269 = vmatmul.mubr.bf16.gmra.mrb[0].mxu0 %v2202
    %v2270 = vpop.f32.mrb[0].mxu0
    %v2271 = vadd.f32 0.0, %v2270
    %v2272 = vpop.f32.mrb[0].mxu0
    %v2273 = vpop.f32.mrb[0].mxu0
    %v2274 = vadd.f32 0.0, %v2273
    %v2275 = vpop.f32.mrb[0].mxu0
    %2276 = vdwg.mxu0
    %v2277 = vadd.f32 %v2091, %v2247
    %v2278 = vadd.f32 %v2092, %v2250
    %v2279 = vadd.f32 %v2093, %v2255
    %v2280 = vadd.f32 %v2094, %v2258
    %v2281 = vadd.f32 %v2095, %v2263
    %v2282 = vadd.f32 %v2096, %v2266
    %v2283 = vadd.f32 %v2097, %v2271
    %v2284 = vadd.f32 %v2098, %v2274
    %v2285 = vlaneseq
    %v2286 = vshrl.u32 %v2285, 7
    %v2287 = vsub.s32 4, %v2286
    %v2288 = vrot.slane %v51, %v2287
    %v2289 = vmul.f32 %v46, %v2288
    %v2290 = vmul.f32 %v47, %v2288
    %v2291 = vmul.f32 %v48, %v2288
    %v2292 = vmul.f32 %v49, %v2288
    %v2293 = vmul.f32 %v50, %v2288
    %v2294 = vmul.f32 %v51, %v2288
    %v2295 = vmul.f32 %v52, %v2288
    %v2296 = vmul.f32 %v53, %v2288
    %v2297 = vpack.c.bf16 %v2290, %v2289
    %v2298 = vpack.c.bf16 %v2292, %v2291
    %v2299 = vpack.c.bf16 %v2294, %v2293
    %v2300 = vpack.c.bf16 %v2296, %v2295
    %v2301 = vlaneseq
    %v2302 = vshrl.u32 %v2301, 7
    %v2303 = vsub.s32 5, %v2302
    %v2304 = vrot.slane %v51, %v2303
    %v2305 = vmul.f32 %v46, %v2304
    %v2306 = vmul.f32 %v47, %v2304
    %v2307 = vmul.f32 %v48, %v2304
    %v2308 = vmul.f32 %v49, %v2304
    %v2309 = vmul.f32 %v50, %v2304
    %v2310 = vmul.f32 %v51, %v2304
    %v2311 = vmul.f32 %v52, %v2304
    %v2312 = vmul.f32 %v53, %v2304
    %v2313 = vpack.c.bf16 %v2306, %v2305
    %v2314 = vpack.c.bf16 %v2308, %v2307
    %v2315 = vpack.c.bf16 %v2310, %v2309
    %v2316 = vpack.c.bf16 %v2312, %v2311
    %v2317 = vlaneseq
    %v2318 = vshrl.u32 %v2317, 7
    %v2319 = vsub.s32 6, %v2318
    %v2320 = vrot.slane %v51, %v2319
    %v2321 = vmul.f32 %v46, %v2320
    %v2322 = vmul.f32 %v47, %v2320
    %v2323 = vmul.f32 %v48, %v2320
    %v2324 = vmul.f32 %v49, %v2320
    %v2325 = vmul.f32 %v50, %v2320
    %v2326 = vmul.f32 %v51, %v2320
    %v2327 = vmul.f32 %v52, %v2320
    %v2328 = vmul.f32 %v53, %v2320
    %v2329 = vpack.c.bf16 %v2322, %v2321
    %v2330 = vpack.c.bf16 %v2324, %v2323
    %v2331 = vpack.c.bf16 %v2326, %v2325
    %v2332 = vpack.c.bf16 %v2328, %v2327
    %v2333 = vlaneseq
    %v2334 = vshrl.u32 %v2333, 7
    %v2335 = vsub.s32 7, %v2334
    %v2336 = vrot.slane %v51, %v2335
    %v2337 = vmul.f32 %v46, %v2336
    %v2338 = vmul.f32 %v47, %v2336
    %v2339 = vmul.f32 %v48, %v2336
    %v2340 = vmul.f32 %v49, %v2336
    %v2341 = vmul.f32 %v50, %v2336
    %v2342 = vmul.f32 %v51, %v2336
    %v2343 = vmul.f32 %v52, %v2336
    %v2344 = vmul.f32 %v53, %v2336
    %v2345 = vpack.c.bf16 %v2338, %v2337
    %v2346 = vpack.c.bf16 %v2340, %v2339
    %v2347 = vpack.c.bf16 %v2342, %v2341
    %v2348 = vpack.c.bf16 %v2344, %v2343
    %s2349 = scalar_lea.vmem [#allocation3], 704
    %v2350 = vld [vmem:[%s2349] sm:$0xff]
    %v2351 = vld [vmem:[%s2349 + $0x8] sm:$0xff]
    %v2352 = vld [vmem:[%s2349 + $0x10] sm:$0xff]
    %v2353 = vld [vmem:[%s2349 + $0x18] sm:$0xff]
    %v2354 = vld [vmem:[%s2349 + $0x20] sm:$0xff]
    %v2355 = vld [vmem:[%s2349 + $0x28] sm:$0xff]
    %v2356 = vld [vmem:[%s2349 + $0x30] sm:$0xff]
    %v2357 = vld [vmem:[%s2349 + $0x38] sm:$0xff]
    %v2366 = vunpack.c.l.b16 %v2350
    %v2367 = vunpack.c.h.b16 %v2350
    %v2368 = vunpack.c.l.b16 %v2351
    %v2369 = vunpack.c.h.b16 %v2351
    %v2370 = vunpack.c.l.b16 %v2352
    %v2371 = vunpack.c.h.b16 %v2352
    %v2372 = vunpack.c.l.b16 %v2353
    %v2373 = vunpack.c.h.b16 %v2353
    %v2374 = vunpack.c.l.b16 %v2354
    %v2375 = vunpack.c.h.b16 %v2354
    %v2376 = vunpack.c.l.b16 %v2355
    %v2377 = vunpack.c.h.b16 %v2355
    %v2378 = vunpack.c.l.b16 %v2356
    %v2379 = vunpack.c.h.b16 %v2356
    %v2380 = vunpack.c.l.b16 %v2357
    %v2381 = vunpack.c.h.b16 %v2357
    %v2382 = vpack.c.b16 %v2368, %v2366
    %v2383 = vpack.c.b16 %v2369, %v2367
    %v2384 = vpack.c.b16 %v2372, %v2370
    %v2385 = vpack.c.b16 %v2373, %v2371
    %v2386 = vpack.c.b16 %v2376, %v2374
    %v2387 = vpack.c.b16 %v2377, %v2375
    %v2388 = vpack.c.b16 %v2380, %v2378
    %v2389 = vpack.c.b16 %v2381, %v2379
    %2398 = vmatprep.subr.bf16.mxu0 0
    %2399 = vmatpush1.bf16.msra.mxu0 %v2297
    %2400 = vmatprep.subr.bf16.mxu0 0
    %2401 = vmatpush1.bf16.msra.mxu0 %v2298
    %2402 = vmatprep.subr.bf16.mxu0 0
    %2403 = vmatpush1.bf16.msra.mxu0 %v2299
    %2404 = vmatprep.subr.bf16.mxu0 0
    %2405 = vmatpush1.bf16.msra.mxu0 %v2300
    %2406 = vmatprep.subr.bf16.mxu0 0
    %2407 = vmatpush1.bf16.msra.mxu0 %v2313
    %2408 = vmatprep.subr.bf16.mxu0 0
    %2409 = vmatpush1.bf16.msra.mxu0 %v2314
    %2410 = vmatprep.subr.bf16.mxu0 0
    %2411 = vmatpush1.bf16.msra.mxu0 %v2315
    %2412 = vmatprep.subr.bf16.mxu0 0
    %2413 = vmatpush1.bf16.msra.mxu0 %v2316
    %2414 = vmatprep.subr.bf16.mxu0 0
    %2415 = vmatpush1.bf16.msra.mxu0 %v2329
    %2416 = vmatprep.subr.bf16.mxu0 0
    %2417 = vmatpush1.bf16.msra.mxu0 %v2330
    %2418 = vmatprep.subr.bf16.mxu0 0
    %2419 = vmatpush1.bf16.msra.mxu0 %v2331
    %2420 = vmatprep.subr.bf16.mxu0 0
    %2421 = vmatpush1.bf16.msra.mxu0 %v2332
    %2422 = vmatprep.subr.bf16.mxu0 0
    %2423 = vmatpush1.bf16.msra.mxu0 %v2345
    %2424 = vmatprep.subr.bf16.mxu0 0
    %2425 = vmatpush1.bf16.msra.mxu0 %v2346
    %2426 = vmatprep.subr.bf16.mxu0 0
    %2427 = vmatpush1.bf16.msra.mxu0 %v2347
    %2428 = vmatprep.subr.bf16.mxu0 0
    %2429 = vmatpush1.bf16.msra.mxu0 %v2348
    %2430 = vmatprep.mubr.bf16.mxu0 %v2383
    %2431 = vmatmul.mubr.bf16.gmra.mrb[0].mxu0 %v2382
    %v2432 = vpop.f32.mrb[0].mxu0
    %v2433 = vadd.f32 0.0, %v2432
    %v2434 = vpop.f32.mrb[0].mxu0
    %v2435 = vpop.f32.mrb[0].mxu0
    %v2436 = vadd.f32 0.0, %v2435
    %v2437 = vpop.f32.mrb[0].mxu0
    %2438 = vmatprep.mubr.bf16.mxu0 %v2385
    %2439 = vmatmul.mubr.bf16.gmra.mrb[0].mxu0 %v2384
    %v2440 = vpop.f32.mrb[0].mxu0
    %v2441 = vadd.f32 0.0, %v2440
    %v2442 = vpop.f32.mrb[0].mxu0
    %v2443 = vpop.f32.mrb[0].mxu0
    %v2444 = vadd.f32 0.0, %v2443
    %v2445 = vpop.f32.mrb[0].mxu0
    %2446 = vmatprep.mubr.bf16.mxu0 %v2387
    %2447 = vmatmul.mubr.bf16.gmra.mrb[0].mxu0 %v2386
    %v2448 = vpop.f32.mrb[0].mxu0
    %v2449 = vadd.f32 0.0, %v2448
    %v2450 = vpop.f32.mrb[0].mxu0
    %v2451 = vpop.f32.mrb[0].mxu0
    %v2452 = vadd.f32 0.0, %v2451
    %v2453 = vpop.f32.mrb[0].mxu0
    %2454 = vmatprep.mubr.bf16.mxu0 %v2389
    %2455 = vmatmul.mubr.bf16.gmra.mrb[0].mxu0 %v2388
    %v2456 = vpop.f32.mrb[0].mxu0
    %v2457 = vadd.f32 0.0, %v2456
    %v2458 = vpop.f32.mrb[0].mxu0
    %v2459 = vpop.f32.mrb[0].mxu0
    %v2460 = vadd.f32 0.0, %v2459
    %v2461 = vpop.f32.mrb[0].mxu0
    %2462 = vdwg.mxu0
    %v2463 = vadd.f32 %v2277, %v2433
    %v2464 = vadd.f32 %v2278, %v2436
    %v2465 = vadd.f32 %v2279, %v2441
    %v2466 = vadd.f32 %v2280, %v2444
    %v2467 = vadd.f32 %v2281, %v2449
    %v2468 = vadd.f32 %v2282, %v2452
    %v2469 = vadd.f32 %v2283, %v2457
    %v2470 = vadd.f32 %v2284, %v2460
    %v2471 = vlaneseq
    %v2472 = vshrl.u32 %v2471, 7
    %v2473 = vsub.s32 0, %v2472
    %v2474 = vrot.slane %v52, %v2473
    %v2475 = vmul.f32 %v46, %v2474
    %v2476 = vmul.f32 %v47, %v2474
    %v2477 = vmul.f32 %v48, %v2474
    %v2478 = vmul.f32 %v49, %v2474
    %v2479 = vmul.f32 %v50, %v2474
    %v2480 = vmul.f32 %v51, %v2474
    %v2481 = vmul.f32 %v52, %v2474
    %v2482 = vmul.f32 %v53, %v2474
    %v2483 = vpack.c.bf16 %v2476, %v2475
    %v2484 = vpack.c.bf16 %v2478, %v2477
    %v2485 = vpack.c.bf16 %v2480, %v2479
    %v2486 = vpack.c.bf16 %v2482, %v2481
    %v2487 = vlaneseq
    %v2488 = vshrl.u32 %v2487, 7
    %v2489 = vsub.s32 1, %v2488
    %v2490 = vrot.slane %v52, %v2489
    %v2491 = vmul.f32 %v46, %v2490
    %v2492 = vmul.f32 %v47, %v2490
    %v2493 = vmul.f32 %v48, %v2490
    %v2494 = vmul.f32 %v49, %v2490
    %v2495 = vmul.f32 %v50, %v2490
    %v2496 = vmul.f32 %v51, %v2490
    %v2497 = vmul.f32 %v52, %v2490
    %v2498 = vmul.f32 %v53, %v2490
    %v2499 = vpack.c.bf16 %v2492, %v2491
    %v2500 = vpack.c.bf16 %v2494, %v2493
    %v2501 = vpack.c.bf16 %v2496, %v2495
    %v2502 = vpack.c.bf16 %v2498, %v2497
    %v2503 = vlaneseq
    %v2504 = vshrl.u32 %v2503, 7
    %v2505 = vsub.s32 2, %v2504
    %v2506 = vrot.slane %v52, %v2505
    %v2507 = vmul.f32 %v46, %v2506
    %v2508 = vmul.f32 %v47, %v2506
    %v2509 = vmul.f32 %v48, %v2506
    %v2510 = vmul.f32 %v49, %v2506
    %v2511 = vmul.f32 %v50, %v2506
    %v2512 = vmul.f32 %v51, %v2506
    %v2513 = vmul.f32 %v52, %v2506
    %v2514 = vmul.f32 %v53, %v2506
    %v2515 = vpack.c.bf16 %v2508, %v2507
    %v2516 = vpack.c.bf16 %v2510, %v2509
    %v2517 = vpack.c.bf16 %v2512, %v2511
    %v2518 = vpack.c.bf16 %v2514, %v2513
    %v2519 = vlaneseq
    %v2520 = vshrl.u32 %v2519, 7
    %v2521 = vsub.s32 3, %v2520
    %v2522 = vrot.slane %v52, %v2521
    %v2523 = vmul.f32 %v46, %v2522
    %v2524 = vmul.f32 %v47, %v2522
    %v2525 = vmul.f32 %v48, %v2522
    %v2526 = vmul.f32 %v49, %v2522
    %v2527 = vmul.f32 %v50, %v2522
    %v2528 = vmul.f32 %v51, %v2522
    %v2529 = vmul.f32 %v52, %v2522
    %v2530 = vmul.f32 %v53, %v2522
    %v2531 = vpack.c.bf16 %v2524, %v2523
    %v2532 = vpack.c.bf16 %v2526, %v2525
    %v2533 = vpack.c.bf16 %v2528, %v2527
    %v2534 = vpack.c.bf16 %v2530, %v2529
    %s2535 = scalar_lea.vmem [#allocation3], 768
    %v2536 = vld [vmem:[%s2535] sm:$0xff]
    %v2537 = vld [vmem:[%s2535 + $0x8] sm:$0xff]
    %v2538 = vld [vmem:[%s2535 + $0x10] sm:$0xff]
    %v2539 = vld [vmem:[%s2535 + $0x18] sm:$0xff]
    %v2540 = vld [vmem:[%s2535 + $0x20] sm:$0xff]
    %v2541 = vld [vmem:[%s2535 + $0x28] sm:$0xff]
    %v2542 = vld [vmem:[%s2535 + $0x30] sm:$0xff]
    %v2543 = vld [vmem:[%s2535 + $0x38] sm:$0xff]
    %v2552 = vunpack.c.l.b16 %v2536
    %v2553 = vunpack.c.h.b16 %v2536
    %v2554 = vunpack.c.l.b16 %v2537
    %v2555 = vunpack.c.h.b16 %v2537
    %v2556 = vunpack.c.l.b16 %v2538
    %v2557 = vunpack.c.h.b16 %v2538
    %v2558 = vunpack.c.l.b16 %v2539
    %v2559 = vunpack.c.h.b16 %v2539
    %v2560 = vunpack.c.l.b16 %v2540
    %v2561 = vunpack.c.h.b16 %v2540
    %v2562 = vunpack.c.l.b16 %v2541
    %v2563 = vunpack.c.h.b16 %v2541
    %v2564 = vunpack.c.l.b16 %v2542
    %v2565 = vunpack.c.h.b16 %v2542
    %v2566 = vunpack.c.l.b16 %v2543
    %v2567 = vunpack.c.h.b16 %v2543
    %v2568 = vpack.c.b16 %v2554, %v2552
    %v2569 = vpack.c.b16 %v2555, %v2553
    %v2570 = vpack.c.b16 %v2558, %v2556
    %v2571 = vpack.c.b16 %v2559, %v2557
    %v2572 = vpack.c.b16 %v2562, %v2560
    %v2573 = vpack.c.b16 %v2563, %v2561
    %v2574 = vpack.c.b16 %v2566, %v2564
    %v2575 = vpack.c.b16 %v2567, %v2565
    %2584 = vmatprep.subr.bf16.mxu0 0
    %2585 = vmatpush1.bf16.msra.mxu0 %v2483
    %2586 = vmatprep.subr.bf16.mxu0 0
    %2587 = vmatpush1.bf16.msra.mxu0 %v2484
    %2588 = vmatprep.subr.bf16.mxu0 0
    %2589 = vmatpush1.bf16.msra.mxu0 %v2485
    %2590 = vmatprep.subr.bf16.mxu0 0
    %2591 = vmatpush1.bf16.msra.mxu0 %v2486
    %2592 = vmatprep.subr.bf16.mxu0 0
    %2593 = vmatpush1.bf16.msra.mxu0 %v2499
    %2594 = vmatprep.subr.bf16.mxu0 0
    %2595 = vmatpush1.bf16.msra.mxu0 %v2500
    %2596 = vmatprep.subr.bf16.mxu0 0
    %2597 = vmatpush1.bf16.msra.mxu0 %v2501
    %2598 = vmatprep.subr.bf16.mxu0 0
    %2599 = vmatpush1.bf16.msra.mxu0 %v2502
    %2600 = vmatprep.subr.bf16.mxu0 0
    %2601 = vmatpush1.bf16.msra.mxu0 %v2515
    %2602 = vmatprep.subr.bf16.mxu0 0
    %2603 = vmatpush1.bf16.msra.mxu0 %v2516
    %2604 = vmatprep.subr.bf16.mxu0 0
    %2605 = vmatpush1.bf16.msra.mxu0 %v2517
    %2606 = vmatprep.subr.bf16.mxu0 0
    %2607 = vmatpush1.bf16.msra.mxu0 %v2518
    %2608 = vmatprep.subr.bf16.mxu0 0
    %2609 = vmatpush1.bf16.msra.mxu0 %v2531
    %2610 = vmatprep.subr.bf16.mxu0 0
    %2611 = vmatpush1.bf16.msra.mxu0 %v2532
    %2612 = vmatprep.subr.bf16.mxu0 0
    %2613 = vmatpush1.bf16.msra.mxu0 %v2533
    %2614 = vmatprep.subr.bf16.mxu0 0
    %2615 = vmatpush1.bf16.msra.mxu0 %v2534
    %2616 = vmatprep.mubr.bf16.mxu0 %v2569
    %2617 = vmatmul.mubr.bf16.gmra.mrb[0].mxu0 %v2568
    %v2618 = vpop.f32.mrb[0].mxu0
    %v2619 = vadd.f32 0.0, %v2618
    %v2620 = vpop.f32.mrb[0].mxu0
    %v2621 = vpop.f32.mrb[0].mxu0
    %v2622 = vadd.f32 0.0, %v2621
    %v2623 = vpop.f32.mrb[0].mxu0
    %2624 = vmatprep.mubr.bf16.mxu0 %v2571
    %2625 = vmatmul.mubr.bf16.gmra.mrb[0].mxu0 %v2570
    %v2626 = vpop.f32.mrb[0].mxu0
    %v2627 = vadd.f32 0.0, %v2626
    %v2628 = vpop.f32.mrb[0].mxu0
    %v2629 = vpop.f32.mrb[0].mxu0
    %v2630 = vadd.f32 0.0, %v2629
    %v2631 = vpop.f32.mrb[0].mxu0
    %2632 = vmatprep.mubr.bf16.mxu0 %v2573
    %2633 = vmatmul.mubr.bf16.gmra.mrb[0].mxu0 %v2572
    %v2634 = vpop.f32.mrb[0].mxu0
    %v2635 = vadd.f32 0.0, %v2634
    %v2636 = vpop.f32.mrb[0].mxu0
    %v2637 = vpop.f32.mrb[0].mxu0
    %v2638 = vadd.f32 0.0, %v2637
    %v2639 = vpop.f32.mrb[0].mxu0
    %2640 = vmatprep.mubr.bf16.mxu0 %v2575
    %2641 = vmatmul.mubr.bf16.gmra.mrb[0].mxu0 %v2574
    %v2642 = vpop.f32.mrb[0].mxu0
    %v2643 = vadd.f32 0.0, %v2642
    %v2644 = vpop.f32.mrb[0].mxu0
    %v2645 = vpop.f32.mrb[0].mxu0
    %v2646 = vadd.f32 0.0, %v2645
    %v2647 = vpop.f32.mrb[0].mxu0
    %2648 = vdwg.mxu0
    %v2649 = vadd.f32 %v2463, %v2619
    %v2650 = vadd.f32 %v2464, %v2622
    %v2651 = vadd.f32 %v2465, %v2627
    %v2652 = vadd.f32 %v2466, %v2630
    %v2653 = vadd.f32 %v2467, %v2635
    %v2654 = vadd.f32 %v2468, %v2638
    %v2655 = vadd.f32 %v2469, %v2643
    %v2656 = vadd.f32 %v2470, %v2646
    %v2657 = vlaneseq
    %v2658 = vshrl.u32 %v2657, 7
    %v2659 = vsub.s32 4, %v2658
    %v2660 = vrot.slane %v52, %v2659
    %v2661 = vmul.f32 %v46, %v2660
    %v2662 = vmul.f32 %v47, %v2660
    %v2663 = vmul.f32 %v48, %v2660
    %v2664 = vmul.f32 %v49, %v2660
    %v2665 = vmul.f32 %v50, %v2660
    %v2666 = vmul.f32 %v51, %v2660
    %v2667 = vmul.f32 %v52, %v2660
    %v2668 = vmul.f32 %v53, %v2660
    %v2669 = vpack.c.bf16 %v2662, %v2661
    %v2670 = vpack.c.bf16 %v2664, %v2663
    %v2671 = vpack.c.bf16 %v2666, %v2665
    %v2672 = vpack.c.bf16 %v2668, %v2667
    %v2673 = vlaneseq
    %v2674 = vshrl.u32 %v2673, 7
    %v2675 = vsub.s32 5, %v2674
    %v2676 = vrot.slane %v52, %v2675
    %v2677 = vmul.f32 %v46, %v2676
    %v2678 = vmul.f32 %v47, %v2676
    %v2679 = vmul.f32 %v48, %v2676
    %v2680 = vmul.f32 %v49, %v2676
    %v2681 = vmul.f32 %v50, %v2676
    %v2682 = vmul.f32 %v51, %v2676
    %v2683 = vmul.f32 %v52, %v2676
    %v2684 = vmul.f32 %v53, %v2676
    %v2685 = vpack.c.bf16 %v2678, %v2677
    %v2686 = vpack.c.bf16 %v2680, %v2679
    %v2687 = vpack.c.bf16 %v2682, %v2681
    %v2688 = vpack.c.bf16 %v2684, %v2683
    %v2689 = vlaneseq
    %v2690 = vshrl.u32 %v2689, 7
    %v2691 = vsub.s32 6, %v2690
    %v2692 = vrot.slane %v52, %v2691
    %v2693 = vmul.f32 %v46, %v2692
    %v2694 = vmul.f32 %v47, %v2692
    %v2695 = vmul.f32 %v48, %v2692
    %v2696 = vmul.f32 %v49, %v2692
    %v2697 = vmul.f32 %v50, %v2692
    %v2698 = vmul.f32 %v51, %v2692
    %v2699 = vmul.f32 %v52, %v2692
    %v2700 = vmul.f32 %v53, %v2692
    %v2701 = vpack.c.bf16 %v2694, %v2693
    %v2702 = vpack.c.bf16 %v2696, %v2695
    %v2703 = vpack.c.bf16 %v2698, %v2697
    %v2704 = vpack.c.bf16 %v2700, %v2699
    %v2705 = vlaneseq
    %v2706 = vshrl.u32 %v2705, 7
    %v2707 = vsub.s32 7, %v2706
    %v2708 = vrot.slane %v52, %v2707
    %v2709 = vmul.f32 %v46, %v2708
    %v2710 = vmul.f32 %v47, %v2708
    %v2711 = vmul.f32 %v48, %v2708
    %v2712 = vmul.f32 %v49, %v2708
    %v2713 = vmul.f32 %v50, %v2708
    %v2714 = vmul.f32 %v51, %v2708
    %v2715 = vmul.f32 %v52, %v2708
    %v2716 = vmul.f32 %v53, %v2708
    %v2717 = vpack.c.bf16 %v2710, %v2709
    %v2718 = vpack.c.bf16 %v2712, %v2711
    %v2719 = vpack.c.bf16 %v2714, %v2713
    %v2720 = vpack.c.bf16 %v2716, %v2715
    %s2721 = scalar_lea.vmem [#allocation3], 832
    %v2722 = vld [vmem:[%s2721] sm:$0xff]
    %v2723 = vld [vmem:[%s2721 + $0x8] sm:$0xff]
    %v2724 = vld [vmem:[%s2721 + $0x10] sm:$0xff]
    %v2725 = vld [vmem:[%s2721 + $0x18] sm:$0xff]
    %v2726 = vld [vmem:[%s2721 + $0x20] sm:$0xff]
    %v2727 = vld [vmem:[%s2721 + $0x28] sm:$0xff]
    %v2728 = vld [vmem:[%s2721 + $0x30] sm:$0xff]
    %v2729 = vld [vmem:[%s2721 + $0x38] sm:$0xff]
    %v2738 = vunpack.c.l.b16 %v2722
    %v2739 = vunpack.c.h.b16 %v2722
    %v2740 = vunpack.c.l.b16 %v2723
    %v2741 = vunpack.c.h.b16 %v2723
    %v2742 = vunpack.c.l.b16 %v2724
    %v2743 = vunpack.c.h.b16 %v2724
    %v2744 = vunpack.c.l.b16 %v2725
    %v2745 = vunpack.c.h.b16 %v2725
    %v2746 = vunpack.c.l.b16 %v2726
    %v2747 = vunpack.c.h.b16 %v2726
    %v2748 = vunpack.c.l.b16 %v2727
    %v2749 = vunpack.c.h.b16 %v2727
    %v2750 = vunpack.c.l.b16 %v2728
    %v2751 = vunpack.c.h.b16 %v2728
    %v2752 = vunpack.c.l.b16 %v2729
    %v2753 = vunpack.c.h.b16 %v2729
    %v2754 = vpack.c.b16 %v2740, %v2738
    %v2755 = vpack.c.b16 %v2741, %v2739
    %v2756 = vpack.c.b16 %v2744, %v2742
    %v2757 = vpack.c.b16 %v2745, %v2743
    %v2758 = vpack.c.b16 %v2748, %v2746
    %v2759 = vpack.c.b16 %v2749, %v2747
    %v2760 = vpack.c.b16 %v2752, %v2750
    %v2761 = vpack.c.b16 %v2753, %v2751
    %2770 = vmatprep.subr.bf16.mxu0 0
    %2771 = vmatpush1.bf16.msra.mxu0 %v2669
    %2772 = vmatprep.subr.bf16.mxu0 0
    %2773 = vmatpush1.bf16.msra.mxu0 %v2670
    %2774 = vmatprep.subr.bf16.mxu0 0
    %2775 = vmatpush1.bf16.msra.mxu0 %v2671
    %2776 = vmatprep.subr.bf16.mxu0 0
    %2777 = vmatpush1.bf16.msra.mxu0 %v2672
    %2778 = vmatprep.subr.bf16.mxu0 0
    %2779 = vmatpush1.bf16.msra.mxu0 %v2685
    %2780 = vmatprep.subr.bf16.mxu0 0
    %2781 = vmatpush1.bf16.msra.mxu0 %v2686
    %2782 = vmatprep.subr.bf16.mxu0 0
    %2783 = vmatpush1.bf16.msra.mxu0 %v2687
    %2784 = vmatprep.subr.bf16.mxu0 0
    %2785 = vmatpush1.bf16.msra.mxu0 %v2688
    %2786 = vmatprep.subr.bf16.mxu0 0
    %2787 = vmatpush1.bf16.msra.mxu0 %v2701
    %2788 = vmatprep.subr.bf16.mxu0 0
    %2789 = vmatpush1.bf16.msra.mxu0 %v2702
    %2790 = vmatprep.subr.bf16.mxu0 0
    %2791 = vmatpush1.bf16.msra.mxu0 %v2703
    %2792 = vmatprep.subr.bf16.mxu0 0
    %2793 = vmatpush1.bf16.msra.mxu0 %v2704
    %2794 = vmatprep.subr.bf16.mxu0 0
    %2795 = vmatpush1.bf16.msra.mxu0 %v2717
    %2796 = vmatprep.subr.bf16.mxu0 0
    %2797 = vmatpush1.bf16.msra.mxu0 %v2718
    %2798 = vmatprep.subr.bf16.mxu0 0
    %2799 = vmatpush1.bf16.msra.mxu0 %v2719
    %2800 = vmatprep.subr.bf16.mxu0 0
    %2801 = vmatpush1.bf16.msra.mxu0 %v2720
    %2802 = vmatprep.mubr.bf16.mxu0 %v2755
    %2803 = vmatmul.mubr.bf16.gmra.mrb[0].mxu0 %v2754
    %v2804 = vpop.f32.mrb[0].mxu0
    %v2805 = vadd.f32 0.0, %v2804
    %v2806 = vpop.f32.mrb[0].mxu0
    %v2807 = vpop.f32.mrb[0].mxu0
    %v2808 = vadd.f32 0.0, %v2807
    %v2809 = vpop.f32.mrb[0].mxu0
    %2810 = vmatprep.mubr.bf16.mxu0 %v2757
    %2811 = vmatmul.mubr.bf16.gmra.mrb[0].mxu0 %v2756
    %v2812 = vpop.f32.mrb[0].mxu0
    %v2813 = vadd.f32 0.0, %v2812
    %v2814 = vpop.f32.mrb[0].mxu0
    %v2815 = vpop.f32.mrb[0].mxu0
    %v2816 = vadd.f32 0.0, %v2815
    %v2817 = vpop.f32.mrb[0].mxu0
    %2818 = vmatprep.mubr.bf16.mxu0 %v2759
    %2819 = vmatmul.mubr.bf16.gmra.mrb[0].mxu0 %v2758
    %v2820 = vpop.f32.mrb[0].mxu0
    %v2821 = vadd.f32 0.0, %v2820
    %v2822 = vpop.f32.mrb[0].mxu0
    %v2823 = vpop.f32.mrb[0].mxu0
    %v2824 = vadd.f32 0.0, %v2823
    %v2825 = vpop.f32.mrb[0].mxu0
    %2826 = vmatprep.mubr.bf16.mxu0 %v2761
    %2827 = vmatmul.mubr.bf16.gmra.mrb[0].mxu0 %v2760
    %v2828 = vpop.f32.mrb[0].mxu0
    %v2829 = vadd.f32 0.0, %v2828
    %v2830 = vpop.f32.mrb[0].mxu0
    %v2831 = vpop.f32.mrb[0].mxu0
    %v2832 = vadd.f32 0.0, %v2831
    %v2833 = vpop.f32.mrb[0].mxu0
    %2834 = vdwg.mxu0
    %v2835 = vadd.f32 %v2649, %v2805
    %v2836 = vadd.f32 %v2650, %v2808
    %v2837 = vadd.f32 %v2651, %v2813
    %v2838 = vadd.f32 %v2652, %v2816
    %v2839 = vadd.f32 %v2653, %v2821
    %v2840 = vadd.f32 %v2654, %v2824
    %v2841 = vadd.f32 %v2655, %v2829
    %v2842 = vadd.f32 %v2656, %v2832
    %v2843 = vld [vmem:[%s4] sm:$0xff]
    %v2844 = vld [vmem:[%s4 + $0x8] sm:$0xff]
    %v2845 = vld [vmem:[%s4 + $0x10] sm:$0xff]
    %v2846 = vld [vmem:[%s4 + $0x18] sm:$0xff]
    %v2847 = vld [vmem:[%s4 + $0x20] sm:$0xff]
    %v2848 = vld [vmem:[%s4 + $0x28] sm:$0xff]
    %v2849 = vld [vmem:[%s4 + $0x30] sm:$0xff]
    %v2850 = vld [vmem:[%s4 + $0x38] sm:$0xff]
    %v2851 = vld [vmem:[%s5] sm:$0xff]
    %v2852 = vld [vmem:[%s5 + $0x8] sm:$0xff]
    %v2853 = vld [vmem:[%s5 + $0x10] sm:$0xff]
    %v2854 = vld [vmem:[%s5 + $0x18] sm:$0xff]
    %v2855 = vld [vmem:[%s5 + $0x20] sm:$0xff]
    %v2856 = vld [vmem:[%s5 + $0x28] sm:$0xff]
    %v2857 = vld [vmem:[%s5 + $0x30] sm:$0xff]
    %v2858 = vld [vmem:[%s5 + $0x38] sm:$0xff]
    %2860 = vset.pattern.permute.xlu0 0
    %2861 = vperm.xlu0 %2860, %v2851
    %v2862 = vpop.permute.xlu0 %2861
    %2865 = vset.pattern.permute.xlu0 0
    %2866 = vperm.xlu0 %2865, %v2852
    %v2867 = vpop.permute.xlu0 %2866
    %2870 = vset.pattern.permute.xlu0 0
    %2871 = vperm.xlu0 %2870, %v2853
    %v2872 = vpop.permute.xlu0 %2871
    %2875 = vset.pattern.permute.xlu0 0
    %2876 = vperm.xlu0 %2875, %v2854
    %v2877 = vpop.permute.xlu0 %2876
    %2880 = vset.pattern.permute.xlu0 0
    %2881 = vperm.xlu0 %2880, %v2855
    %v2882 = vpop.permute.xlu0 %2881
    %2885 = vset.pattern.permute.xlu0 0
    %2886 = vperm.xlu0 %2885, %v2856
    %v2887 = vpop.permute.xlu0 %2886
    %2890 = vset.pattern.permute.xlu0 0
    %2891 = vperm.xlu0 %2890, %v2857
    %v2892 = vpop.permute.xlu0 %2891
    %2895 = vset.pattern.permute.xlu0 0
    %2896 = vperm.xlu0 %2895, %v2858
    %v2897 = vpop.permute.xlu0 %2896
    %v2900 = vsel %vm110, %v2843, 0
    %v2903 = vsel %vm110, %v2844, 0
    %v2906 = vsel %vm110, %v2845, 0
    %v2909 = vsel %vm110, %v2846, 0
    %v2912 = vsel %vm110, %v2847, 0
    %v2915 = vsel %vm110, %v2848, 0
    %v2918 = vsel %vm110, %v2849, 0
    %v2921 = vsel %vm110, %v2850, 0
    %2923 = vmatprep.subr.mxu0 0.0
    %2924 = vmatpush1.msra.mxu0 %v2835
    %2925 = vmatprep.subr.mxu0 0.0
    %2926 = vmatpush1.msra.mxu0 %v2836
    %2927 = vmatprep.subr.mxu0 0.0
    %2928 = vmatpush1.msra.mxu0 %v2837
    %2929 = vmatprep.subr.mxu0 0.0
    %2930 = vmatpush1.msra.mxu0 %v2838
    %2931 = vmatprep.subr.mxu0 0.0
    %2932 = vmatpush1.msra.mxu0 %v2839
    %2933 = vmatprep.subr.mxu0 0.0
    %2934 = vmatpush1.msra.mxu0 %v2840
    %2935 = vmatprep.subr.mxu0 0.0
    %2936 = vmatpush1.msra.mxu0 %v2841
    %2937 = vmatprep.subr.mxu0 0.0
    %2938 = vmatpush1.msra.mxu0 %v2842
    %2939 = vmatprep.subr.mxu0 0.0
    %2940 = vmatpush1.msra.mxu0 0.0
    %2941 = vmatprep.subr.mxu0 0.0
    %2942 = vmatpush1.msra.mxu0 0.0
    %2943 = vmatprep.subr.mxu0 0.0
    %2944 = vmatpush1.msra.mxu0 0.0
    %2945 = vmatprep.subr.mxu0 0.0
    %2946 = vmatpush1.msra.mxu0 0.0
    %2947 = vmatprep.subr.mxu0 0.0
    %2948 = vmatpush1.msra.mxu0 0.0
    %2949 = vmatprep.subr.mxu0 0.0
    %2950 = vmatpush1.msra.mxu0 0.0
    %2951 = vmatprep.subr.mxu0 0.0
    %2952 = vmatpush1.msra.mxu0 0.0
    %2953 = vmatprep.subr.mxu0 0.0
    %2954 = vmatpush1.msra.mxu0 0.0
    %2955 = vmatprep.subr.mxu0 0.0
    %2956 = vmatpush1.msra.mxu0 0.0
    %2957 = vmatprep.subr.mxu0 0.0
    %2958 = vmatpush1.msra.mxu0 0.0
    %2959 = vmatprep.subr.mxu0 0.0
    %2960 = vmatpush1.msra.mxu0 0.0
    %2961 = vmatprep.subr.mxu0 0.0
    %2962 = vmatpush1.msra.mxu0 0.0
    %2963 = vmatprep.subr.mxu0 0.0
    %2964 = vmatpush1.msra.mxu0 0.0
    %2965 = vmatprep.subr.mxu0 0.0
    %2966 = vmatpush1.msra.mxu0 0.0
    %2967 = vmatprep.subr.mxu0 0.0
    %2968 = vmatpush1.msra.mxu0 0.0
    %2969 = vmatprep.subr.mxu0 0.0
    %2970 = vmatpush1.msra.mxu0 0.0
    %2971 = vmatprep.subr.mxu0 0.0
    %2972 = vmatpush1.msra.mxu0 0.0
    %2973 = vmatprep.subr.mxu0 0.0
    %2974 = vmatpush1.msra.mxu0 0.0
    %2975 = vmatprep.subr.mxu0 0.0
    %2976 = vmatpush1.msra.mxu0 0.0
    %2977 = vmatprep.subr.mxu0 0.0
    %2978 = vmatpush1.msra.mxu0 0.0
    %2979 = vmatprep.subr.mxu0 0.0
    %2980 = vmatpush1.msra.mxu0 0.0
    %2981 = vmatprep.subr.mxu0 0.0
    %2982 = vmatpush1.msra.mxu0 0.0
    %2983 = vmatprep.subr.mxu0 0.0
    %2984 = vmatpush1.msra.mxu0 0.0
    %2985 = vmatprep.subr.mxu0 0.0
    %2986 = vmatpush1.msra.mxu0 0.0
    %2987 = vmatprep.mubr.f32.mxu0 0.0
    %2988 = vmatmul.mubr.f32.gmra.mrb[0].mxu0 %v2900
    %v2989 = vpop.f32.mrb[0].mxu0
    %v2990 = vadd.f32 %v2862, %v2989
    %v2991 = vpop.f32.mrb[0].mxu0
    %2992 = vmatprep.mubr.f32.mxu0 0.0
    %2993 = vmatmul.mubr.f32.gmra.mrb[0].mxu0 %v2903
    %v2994 = vpop.f32.mrb[0].mxu0
    %v2995 = vadd.f32 %v2867, %v2994
    %v2996 = vpop.f32.mrb[0].mxu0
    %2997 = vmatprep.mubr.f32.mxu0 0.0
    %2998 = vmatmul.mubr.f32.gmra.mrb[0].mxu0 %v2906
    %v2999 = vpop.f32.mrb[0].mxu0
    %v3000 = vadd.f32 %v2872, %v2999
    %v3001 = vpop.f32.mrb[0].mxu0
    %3002 = vmatprep.mubr.f32.mxu0 0.0
    %3003 = vmatmul.mubr.f32.gmra.mrb[0].mxu0 %v2909
    %v3004 = vpop.f32.mrb[0].mxu0
    %v3005 = vadd.f32 %v2877, %v3004
    %v3006 = vpop.f32.mrb[0].mxu0
    %3007 = vmatprep.mubr.f32.mxu0 0.0
    %3008 = vmatmul.mubr.f32.gmra.mrb[0].mxu0 %v2912
    %v3009 = vpop.f32.mrb[0].mxu0
    %v3010 = vadd.f32 %v2882, %v3009
    %v3011 = vpop.f32.mrb[0].mxu0
    %3012 = vmatprep.mubr.f32.mxu0 0.0
    %3013 = vmatmul.mubr.f32.gmra.mrb[0].mxu0 %v2915
    %v3014 = vpop.f32.mrb[0].mxu0
    %v3015 = vadd.f32 %v2887, %v3014
    %v3016 = vpop.f32.mrb[0].mxu0
    %3017 = vmatprep.mubr.f32.mxu0 0.0
    %3018 = vmatmul.mubr.f32.gmra.mrb[0].mxu0 %v2918
    %v3019 = vpop.f32.mrb[0].mxu0
    %v3020 = vadd.f32 %v2892, %v3019
    %v3021 = vpop.f32.mrb[0].mxu0
    %3022 = vmatprep.mubr.f32.mxu0 0.0
    %3023 = vmatmul.mubr.f32.gmra.mrb[0].mxu0 %v2921
    %v3024 = vpop.f32.mrb[0].mxu0
    %v3025 = vadd.f32 %v2897, %v3024
    %v3026 = vpop.f32.mrb[0].mxu0
    %3027 = vdwg.mxu0
    %vm3028 = vcmp.gt.f32.partialorder %v2990, 0.0
    %vm3029 = vcmp.gt.f32.partialorder %v2995, 0.0
    %vm3030 = vcmp.gt.f32.partialorder %v3000, 0.0
    %vm3031 = vcmp.gt.f32.partialorder %v3005, 0.0
    %vm3032 = vcmp.gt.f32.partialorder %v3010, 0.0
    %vm3033 = vcmp.gt.f32.partialorder %v3015, 0.0
    %vm3034 = vcmp.gt.f32.partialorder %v3020, 0.0
    %vm3035 = vcmp.gt.f32.partialorder %v3025, 0.0
    %v3036 = vmul.f32 %v2990, 0.01
    %v3037 = vmul.f32 %v2995, 0.01
    %v3038 = vmul.f32 %v3000, 0.01
    %v3039 = vmul.f32 %v3005, 0.01
    %v3040 = vmul.f32 %v3010, 0.01
    %v3041 = vmul.f32 %v3015, 0.01
    %v3042 = vmul.f32 %v3020, 0.01
    %v3043 = vmul.f32 %v3025, 0.01
    %v3044 = vsel %vm3028, %v2990, %v3036
    %v3045 = vsel %vm3029, %v2995, %v3037
    %v3046 = vsel %vm3030, %v3000, %v3038
    %v3047 = vsel %vm3031, %v3005, %v3039
    %v3048 = vsel %vm3032, %v3010, %v3040
    %v3049 = vsel %vm3033, %v3015, %v3041
    %v3050 = vsel %vm3034, %v3020, %v3042
    %v3051 = vsel %vm3035, %v3025, %v3043
    %v3052 = vld [vmem:[%s6] sm:$0x1]
    %v3053 = vld [vmem:[#allocation2] sm:$0x1]
    %3055 = vset.pattern.permute.xlu0 0
    %3056 = vperm.xlu0 %3055, %v3053
    %v3057 = vpop.permute.xlu0 %3056
    %v3059 = vlaneseq
    %v3060 = vshrl.u32 %v3059, 7
    %v3061 = vsub.s32 0, %v3060
    %v3062 = vrot.slane %v3057, %v3061
    %v3064 = vsel %vm110, %v3052, 0
    %3066 = vmatprep.subr.mxu0 0.0
    %3067 = vmatpush1.msra.mxu0 %v3044
    %3068 = vmatprep.subr.mxu0 0.0
    %3069 = vmatpush1.msra.mxu0 %v3045
    %3070 = vmatprep.subr.mxu0 0.0
    %3071 = vmatpush1.msra.mxu0 %v3046
    %3072 = vmatprep.subr.mxu0 0.0
    %3073 = vmatpush1.msra.mxu0 %v3047
    %3074 = vmatprep.subr.mxu0 0.0
    %3075 = vmatpush1.msra.mxu0 %v3048
    %3076 = vmatprep.subr.mxu0 0.0
    %3077 = vmatpush1.msra.mxu0 %v3049
    %3078 = vmatprep.subr.mxu0 0.0
    %3079 = vmatpush1.msra.mxu0 %v3050
    %3080 = vmatprep.subr.mxu0 0.0
    %3081 = vmatpush1.msra.mxu0 %v3051
    %3082 = vmatprep.subr.mxu0 0.0
    %3083 = vmatpush1.msra.mxu0 0.0
    %3084 = vmatprep.subr.mxu0 0.0
    %3085 = vmatpush1.msra.mxu0 0.0
    %3086 = vmatprep.subr.mxu0 0.0
    %3087 = vmatpush1.msra.mxu0 0.0
    %3088 = vmatprep.subr.mxu0 0.0
    %3089 = vmatpush1.msra.mxu0 0.0
    %3090 = vmatprep.subr.mxu0 0.0
    %3091 = vmatpush1.msra.mxu0 0.0
    %3092 = vmatprep.subr.mxu0 0.0
    %3093 = vmatpush1.msra.mxu0 0.0
    %3094 = vmatprep.subr.mxu0 0.0
    %3095 = vmatpush1.msra.mxu0 0.0
    %3096 = vmatprep.subr.mxu0 0.0
    %3097 = vmatpush1.msra.mxu0 0.0
    %3098 = vmatprep.subr.mxu0 0.0
    %3099 = vmatpush1.msra.mxu0 0.0
    %3100 = vmatprep.subr.mxu0 0.0
    %3101 = vmatpush1.msra.mxu0 0.0
    %3102 = vmatprep.subr.mxu0 0.0
    %3103 = vmatpush1.msra.mxu0 0.0
    %3104 = vmatprep.subr.mxu0 0.0
    %3105 = vmatpush1.msra.mxu0 0.0
    %3106 = vmatprep.subr.mxu0 0.0
    %3107 = vmatpush1.msra.mxu0 0.0
    %3108 = vmatprep.subr.mxu0 0.0
    %3109 = vmatpush1.msra.mxu0 0.0
    %3110 = vmatprep.subr.mxu0 0.0
    %3111 = vmatpush1.msra.mxu0 0.0
    %3112 = vmatprep.subr.mxu0 0.0
    %3113 = vmatpush1.msra.mxu0 0.0
    %3114 = vmatprep.subr.mxu0 0.0
    %3115 = vmatpush1.msra.mxu0 0.0
    %3116 = vmatprep.subr.mxu0 0.0
    %3117 = vmatpush1.msra.mxu0 0.0
    %3118 = vmatprep.subr.mxu0 0.0
    %3119 = vmatpush1.msra.mxu0 0.0
    %3120 = vmatprep.subr.mxu0 0.0
    %3121 = vmatpush1.msra.mxu0 0.0
    %3122 = vmatprep.subr.mxu0 0.0
    %3123 = vmatpush1.msra.mxu0 0.0
    %3124 = vmatprep.subr.mxu0 0.0
    %3125 = vmatpush1.msra.mxu0 0.0
    %3126 = vmatprep.subr.mxu0 0.0
    %3127 = vmatpush1.msra.mxu0 0.0
    %3128 = vmatprep.subr.mxu0 0.0
    %3129 = vmatpush1.msra.mxu0 0.0
    %3130 = vmatprep.mubr.f32.mxu0 0.0
    %3131 = vmatmul.mubr.f32.gmra.mrb[0].mxu0 %v3064
    %v3132 = vpop.f32.mrb[0].mxu0
    %v3133 = vadd.f32 %v3062, %v3132
    %v3134 = vpop.f32.mrb[0].mxu0
    %3135 = vdwg.mxu0
    %3136 = vst [vmem:[%s8] sm:$0x1] %v3133
    // Predicated region
    $region38: #{critic_forward.1} parent=1 // pred_check
      _
    $region39: #{critic_forward.1} parent=1 // pred_check_branch
      %3138 = sbr.rel (0) target = $region41
    $region40: #{critic_forward.1} parent=1 // pred_region
      _
    $region41: #{critic_forward.1} parent=1 // pred_fallthru
      _
    // Predicated region
    $region42: #{critic_forward.1} parent=1 // pred_check
      _
    $region43: #{critic_forward.1} parent=1 // pred_check_branch
      %3140 = sbr.rel (0) target = $region45
    $region44: #{critic_forward.1} parent=1 // pred_region
      _
    $region45: #{critic_forward.1} parent=1 // pred_fallthru
      _
    %3141 = vsyncpa [#allocation4], 1

</llo_original>
